<compile_context>
chip_gen: v6e
topology: v6e:2x2x1
jax: 0.10.0
libtpu: 0.0.40
codegen_flags: <defaults>
</compile_context>

<pallas_src>
from functools import partial

import jax
import jax.numpy as jnp
from jax.experimental import pallas as pl
from jax.experimental.pallas import tpu as pltpu

# Order of the eight 3x3 convs inside the packed (8, C, 9C) weight array and
# their dilations.
_CONV3_ORDER = ("r1_b1c1", "r1_b1c2", "r1_b2c1", "r1_b2c2",
                "r2_c1", "r2_c2", "r3_c1", "r3_c2")
_CONV3_DIL = (1, 2, 3, 4, 1, 1, 1, 1)

_WEIGHT_KEYS = ("w3", "b3", "wm1", "wm2", "bm", "we", "be",
                "wc1", "bc1", "wc2", "bc2")


# --------------------------------------------------------------------------
# Fused Pallas kernel (one image per grid step; everything stays in vregs)
# --------------------------------------------------------------------------

def _block_kernel(H, W, x_ref, cidx_ref, ridx_ref,
                  w3_ref, b3_ref, wm1_ref, wm2_ref, bm_ref, we_ref, be_ref,
                  wc1_ref, bc1_ref, wc2_ref, bc2_ref, o_ref):
    C = x_ref.shape[1]
    HW = H * W

    x = x_ref[0]                       # (C, HW) f32, lane-dense
    cidx = cidx_ref[...]               # (1, HW) i32: pixel column j
    ridx = ridx_ref[...]               # (1, HW) i32: pixel row    i

    relu = lambda v: jnp.maximum(v, 0.0)

    def shift_tap(inp, dh, dw):
        """out[:, i*W+j] = inp[:, (i+dh)*W + (j+dw)], zero outside the image."""
        s = dh * W + dw
        if s == 0:
            return inp
        t = pltpu.roll(inp, shift=(-s) % HW, axis=1)     # XLU lane rotate
        conds = []
        if dw > 0:
            conds.append(cidx < (W - dw))
        elif dw < 0:
            conds.append(cidx >= (-dw))
        if dh > 0:
            conds.append(ridx < (H - dh))
        elif dh < 0:
            conds.append(ridx >= (-dh))
        m = conds[0]
        for cnd in conds[1:]:
            m = jnp.logical_and(m, cnd)
        return jnp.where(m, t, 0.0)

    def conv3x3(inp, idx):
        """'same' dilated 3x3 conv as one (C, 9C) @ (9C, HW) MXU matmul."""
        d = _CONV3_DIL[idx]
        taps = [shift_tap(inp, kh * d, kw * d)
                for kh in (-1, 0, 1) for kw in (-1, 0, 1)]
        patch = jnp.concatenate(taps, axis=0)            # (9C, HW), in-register
        return (jnp.dot(w3_ref[idx], patch,
                        preferred_element_type=jnp.float32)
                + b3_ref[idx])                           # (C, HW)

    # ---- r1 = Merge_Run_dual(x) --------------------------------------------
    t1 = relu(conv3x3(x, 0))                             # branch 1: d=1 then d=2
    t1 = relu(conv3x3(t1, 1))
    t2 = relu(conv3x3(x, 2))                             # branch 2: d=3 then d=4
    t2 = relu(conv3x3(t2, 3))
    # 1x1 conv over concat([t1, t2]) == two half-weight matmuls (no concat).
    cat = (jnp.dot(wm1_ref[...], t1, preferred_element_type=jnp.float32)
           + jnp.dot(wm2_ref[...], t2, preferred_element_type=jnp.float32)
           + bm_ref[...])
    r1 = relu(cat) + x

    # ---- r2 = ResidualBlock(r1) ----------------------------------------------
    t = relu(conv3x3(r1, 4))
    t = conv3x3(t, 5)
    r2 = relu(t + r1)

    # ---- r3 = EResidualBlock(r2) -----------------------------------------------
    t = relu(conv3x3(r2, 6))
    t = relu(conv3x3(t, 7))
    t = jnp.dot(we_ref[...], t, preferred_element_type=jnp.float32) + be_ref[...]
    r3 = relu(t + r2)

    # ---- channel attention (SubbandPyramid stand-in), fused --------------------
    pooled = jnp.mean(r3, axis=1, keepdims=True)                      # (C, 1)
    y = relu(jnp.dot(wc1_ref[...], pooled,
                     preferred_element_type=jnp.float32) + bc1_ref[...])
    y = jnp.dot(wc2_ref[...], y,
                preferred_element_type=jnp.float32) + bc2_ref[...]
    y = jax.nn.sigmoid(y)                                             # (C, 1)
    o_ref[0] = (r3 * y).astype(o_ref.dtype)                           # lane-dense store


# --------------------------------------------------------------------------
# Wrapper
# --------------------------------------------------------------------------

def _full_spec(arr):
    nd = arr.ndim
    return pl.BlockSpec(arr.shape, lambda b, _nd=nd: (0,) * _nd)


def block_forward(prepped, x_nchw):
    """x_nchw: (B, C, H, W) like PyTorch.  prepped: matmul-ready parameters."""
    B, C, H, W = x_nchw.shape
    HW = H * W
    x = x_nchw.reshape(B, C, HW).astype(jnp.float32)     # free reshape, no transpose

    # Row / column index of every flattened pixel (for conv boundary masks).
    pix = jnp.arange(HW, dtype=jnp.int32)
    cidx = (pix % W).reshape(1, HW)
    ridx = (pix // W).reshape(1, HW)

    weights = tuple(prepped[k] for k in _WEIGHT_KEYS)

    img_spec = pl.BlockSpec((1, C, HW), lambda b: (b, 0, 0))
    in_specs = [img_spec, _full_spec(cidx), _full_spec(ridx)]
    in_specs += [_full_spec(w) for w in weights]

    out = pl.pallas_call(
        partial(_block_kernel, H, W),
        out_shape=jax.ShapeDtypeStruct((B, C, HW), jnp.float32),
        grid_spec=pltpu.PrefetchScalarGridSpec(
            num_scalar_prefetch=0,
            grid=(B,),
            in_specs=in_specs,
            out_specs=img_spec,
        ),
        compiler_params=pltpu.CompilerParams(
            dimension_semantics=("parallel",)),
    )(x, cidx, ridx, *weights)

    return out.reshape(B, C, H, W)


# --------------------------------------------------------------------------
# Parameters (torch layout) + one-time packing into matmul-ready layout
# --------------------------------------------------------------------------

def _init_conv(key, cout, cin, k):
    kw_, kb_ = jax.random.split(key)
    fan_in = cin * k * k
    w = jax.random.normal(kw_, (cout, cin, k, k), jnp.float32) / jnp.sqrt(fan_in)
    b = 0.01 * jax.random.normal(kb_, (cout,), jnp.float32)
    return w, b


def init_block_params(key, channels):
    c = channels
    cr = max(1, c // 4)                       # attention reduction
    keys = jax.random.split(key, 12)
    p = {}
    # Merge_Run_dual
    p["r1_b1c1"] = _init_conv(keys[0], c, c, 3)
    p["r1_b1c2"] = _init_conv(keys[1], c, c, 3)
    p["r1_b2c1"] = _init_conv(keys[2], c, c, 3)
    p["r1_b2c2"] = _init_conv(keys[3], c, c, 3)
    p["r1_b3"] = _init_conv(keys[4], c, 2 * c, 1)
    # ResidualBlock
    p["r2_c1"] = _init_conv(keys[5], c, c, 3)
    p["r2_c2"] = _init_conv(keys[6], c, c, 3)
    # EResidualBlock (group=1)
    p["r3_c1"] = _init_conv(keys[7], c, c, 3)
    p["r3_c2"] = _init_conv(keys[8], c, c, 3)
    p["r3_c3"] = _init_conv(keys[9], c, c, 1)
    # SubbandPyramid (channel attention stand-in)
    p["ca_w1"] = jax.random.normal(keys[10], (c, cr), jnp.float32) / jnp.sqrt(c)
    p["ca_b1"] = jnp.zeros((cr,), jnp.float32)
    p["ca_w2"] = jax.random.normal(keys[11], (cr, c), jnp.float32) / jnp.sqrt(cr)
    p["ca_b2"] = jnp.zeros((c,), jnp.float32)
    return p


def prepare_block_params(p):
    """Pack torch-layout weights once into the channels-first matmul layout."""
    def mat3(w):    # (Cout, Cin, 3, 3) -> (Cout, 9*Cin), tap-major columns
        return jnp.transpose(w, (0, 2, 3, 1)).reshape(w.shape[0], -1)

    def col(b):     # (C,) -> (C, 1) column bias (broadcasts over HW lanes)
        return b.reshape(-1, 1)

    c = p["r2_c1"][0].shape[0]
    wm = p["r1_b3"][0].reshape(c, 2 * c)
    return {
        "w3": jnp.stack([mat3(p[k][0]) for k in _CONV3_ORDER]),      # (8, C, 9C)
        "b3": jnp.stack([col(p[k][1]) for k in _CONV3_ORDER]),       # (8, C, 1)
        "wm1": wm[:, :c], "wm2": wm[:, c:], "bm": col(p["r1_b3"][1]),
        "we": p["r3_c3"][0].reshape(c, c), "be": col(p["r3_c3"][1]),
        "wc1": p["ca_w1"].T, "bc1": col(p["ca_b1"]),
        "wc2": p["ca_w2"].T, "bc2": col(p["ca_b2"]),
    }


# --------------------------------------------------------------------------
# Pure-JAX reference (for validation only)
# --------------------------------------------------------------------------

def block_reference(params, x_nchw):
    p = params
    hi = jax.lax.Precision.HIGHEST

    def conv(v, wb, dilation=1):
        w, b = wb
        k = w.shape[-1]
        pad = dilation * (k - 1) // 2
        out = jax.lax.conv_general_dilated(
            v, jnp.transpose(w, (2, 3, 1, 0)), window_strides=(1, 1),
            padding=[(pad, pad), (pad, pad)], rhs_dilation=(dilation, dilation),
            dimension_numbers=("NHWC", "HWIO", "NHWC"), precision=hi)
        return out + b

    relu = lambda v: jnp.maximum(v, 0.0)
    x = jnp.transpose(x_nchw, (0, 2, 3, 1))

    t1 = relu(conv(x, p["r1_b1c1"], 1))
    t1 = relu(conv(t1, p["r1_b1c2"], 2))
    t2 = relu(conv(x, p["r1_b2c1"], 3))
    t2 = relu(conv(t2, p["r1_b2c2"], 4))
    cat = jnp.concatenate([t1, t2], axis=-1)
    r1 = relu(conv(cat, p["r1_b3"], 1)) + x

    t = relu(conv(r1, p["r2_c1"], 1))
    r2 = relu(conv(t, p["r2_c2"], 1) + r1)

    t = relu(conv(r2, p["r3_c1"], 1))
    t = relu(conv(t, p["r3_c2"], 1))
    r3 = relu(conv(t, p["r3_c3"], 1) + r2)

    pooled = jnp.mean(r3, axis=(1, 2))
    y = relu(jnp.dot(pooled, p["ca_w1"], precision=hi) + p["ca_b1"])
    y = jax.nn.sigmoid(jnp.dot(y, p["ca_w2"], precision=hi) + p["ca_b2"])
    out = r3 * y[:, None, None, :]
    return jnp.transpose(out, (0, 3, 1, 2))


# --------------------------------------------------------------------------

if __name__ == "__main__":
    key = jax.random.PRNGKey(0)
    k_param, k_x = jax.random.split(key)

    B, C, H, W = 2, 8, 16, 16
    params = init_block_params(k_param, C)
    prepped = prepare_block_params(params)
    x = jax.random.normal(k_x, (B, C, H, W), jnp.float32)    # NCHW like PyTorch

    fwd = jax.jit(block_forward)
    out = fwd(prepped, x)
    jax.block_until_ready(out)

    assert out.shape == (B, C, H, W), out.shape
    assert bool(jnp.all(jnp.isfinite(out)))

    # Validate against the pure-JAX reference of the same math.
    ref = block_reference(params, x)
    max_err = float(jnp.max(jnp.abs(out - ref)))
    assert max_err < 5e-2, f"kernel/reference mismatch: max |err| = {max_err}"

    print("KERNEL_OK")
</pallas_src>

<mosaic_0001>
module attributes {stable_mosaic.version = 11 : i64} {
  func.func @_block_kernel(%arg0: i32, %arg1: memref<1x8x256xf32, #tpu.memory_space<vmem>>, %arg2: memref<1x256xi32, #tpu.memory_space<vmem>>, %arg3: memref<1x256xi32, #tpu.memory_space<vmem>>, %arg4: memref<8x8x72xf32, #tpu.memory_space<vmem>>, %arg5: memref<8x8x1xf32, #tpu.memory_space<vmem>>, %arg6: memref<8x8xf32, #tpu.memory_space<vmem>>, %arg7: memref<8x8xf32, #tpu.memory_space<vmem>>, %arg8: memref<8x1xf32, #tpu.memory_space<vmem>>, %arg9: memref<8x8xf32, #tpu.memory_space<vmem>>, %arg10: memref<8x1xf32, #tpu.memory_space<vmem>>, %arg11: memref<2x8xf32, #tpu.memory_space<vmem>>, %arg12: memref<2x1xf32, #tpu.memory_space<vmem>>, %arg13: memref<8x2xf32, #tpu.memory_space<vmem>>, %arg14: memref<8x1xf32, #tpu.memory_space<vmem>>, %arg15: memref<1x8x256xf32, #tpu.memory_space<vmem>>) attributes {dimension_semantics = [#tpu.dimension_semantics<parallel>], iteration_bounds = array<i64: 2>, scalar_prefetch = 0 : i64, scratch_operands = 0 : i64, tpu.core_type = #tpu.core_type<tc>, window_params = [{transform_indices = @transform_0, window_bounds = array<i64: 1, 8, 256>}, {pipeline_mode = #tpu.pipeline_mode<synchronous>, transform_indices = @transform_1, window_bounds = array<i64: 1, 256>}, {pipeline_mode = #tpu.pipeline_mode<synchronous>, transform_indices = @transform_2, window_bounds = array<i64: 1, 256>}, {pipeline_mode = #tpu.pipeline_mode<synchronous>, transform_indices = @transform_3, window_bounds = array<i64: 8, 8, 72>}, {pipeline_mode = #tpu.pipeline_mode<synchronous>, transform_indices = @transform_4, window_bounds = array<i64: 8, 8, 1>}, {pipeline_mode = #tpu.pipeline_mode<synchronous>, transform_indices = @transform_5, window_bounds = array<i64: 8, 8>}, {pipeline_mode = #tpu.pipeline_mode<synchronous>, transform_indices = @transform_6, window_bounds = array<i64: 8, 8>}, {pipeline_mode = #tpu.pipeline_mode<synchronous>, transform_indices = @transform_7, window_bounds = array<i64: 8, 1>}, {pipeline_mode = #tpu.pipeline_mode<synchronous>, transform_indices = @transform_8, window_bounds = array<i64: 8, 8>}, {pipeline_mode = #tpu.pipeline_mode<synchronous>, transform_indices = @transform_9, window_bounds = array<i64: 8, 1>}, {pipeline_mode = #tpu.pipeline_mode<synchronous>, transform_indices = @transform_10, window_bounds = array<i64: 2, 8>}, {pipeline_mode = #tpu.pipeline_mode<synchronous>, transform_indices = @transform_11, window_bounds = array<i64: 2, 1>}, {pipeline_mode = #tpu.pipeline_mode<synchronous>, transform_indices = @transform_12, window_bounds = array<i64: 8, 2>}, {pipeline_mode = #tpu.pipeline_mode<synchronous>, transform_indices = @transform_13, window_bounds = array<i64: 8, 1>}, {transform_indices = @transform_14, window_bounds = array<i64: 1, 8, 256>}]} {
    %c0 = arith.constant 0 : index
    %c0_0 = arith.constant 0 : index
    %c0_1 = arith.constant 0 : index
    %0 = vector.load %arg1[%c0, %c0_0, %c0_1] : memref<1x8x256xf32, #tpu.memory_space<vmem>>, vector<1x8x256xf32>
    %1 = vector.shape_cast %0 : vector<1x8x256xf32> to vector<8x256xf32>
    %c0_2 = arith.constant 0 : index
    %c0_3 = arith.constant 0 : index
    %2 = vector.load %arg2[%c0_2, %c0_3] : memref<1x256xi32, #tpu.memory_space<vmem>>, vector<1x256xi32>
    %c0_4 = arith.constant 0 : index
    %c0_5 = arith.constant 0 : index
    %3 = vector.load %arg3[%c0_4, %c0_5] : memref<1x256xi32, #tpu.memory_space<vmem>>, vector<1x256xi32>
    %c17_i32 = arith.constant 17 : i32
    %4 = tpu.dynamic_rotate %1 by %c17_i32 dim 1 : vector<8x256xf32>, i32 -> vector<8x256xf32>
    %c1_i32 = arith.constant 1 : i32
    %5 = vector.broadcast %c1_i32 : i32 to vector<1x256xi32>
    %6 = arith.cmpi sge, %2, %5 : vector<1x256xi32>
    %c1_i32_6 = arith.constant 1 : i32
    %7 = vector.broadcast %c1_i32_6 : i32 to vector<1x256xi32>
    %8 = arith.cmpi sge, %3, %7 : vector<1x256xi32>
    %9 = arith.andi %6, %8 : vector<1x256xi1>
    %cst = arith.constant 0.000000e+00 : f32
    %10 = vector.shape_cast %9 : vector<1x256xi1> to vector<1x256xi1>
    %11 = vector.broadcast %10 : vector<1x256xi1> to vector<8x256xi1>
    %12 = vector.broadcast %cst : f32 to vector<8x256xf32>
    %13 = arith.select %11, %4, %12 : vector<8x256xi1>, vector<8x256xf32>
    %c16_i32 = arith.constant 16 : i32
    %14 = tpu.dynamic_rotate %1 by %c16_i32 dim 1 : vector<8x256xf32>, i32 -> vector<8x256xf32>
    %c1_i32_7 = arith.constant 1 : i32
    %15 = vector.broadcast %c1_i32_7 : i32 to vector<1x256xi32>
    %16 = arith.cmpi sge, %3, %15 : vector<1x256xi32>
    %cst_8 = arith.constant 0.000000e+00 : f32
    %17 = vector.shape_cast %16 : vector<1x256xi1> to vector<1x256xi1>
    %18 = vector.broadcast %17 : vector<1x256xi1> to vector<8x256xi1>
    %19 = vector.broadcast %cst_8 : f32 to vector<8x256xf32>
    %20 = arith.select %18, %14, %19 : vector<8x256xi1>, vector<8x256xf32>
    %c15_i32 = arith.constant 15 : i32
    %21 = tpu.dynamic_rotate %1 by %c15_i32 dim 1 : vector<8x256xf32>, i32 -> vector<8x256xf32>
    %c15_i32_9 = arith.constant 15 : i32
    %22 = vector.broadcast %c15_i32_9 : i32 to vector<1x256xi32>
    %23 = arith.cmpi slt, %2, %22 : vector<1x256xi32>
    %c1_i32_10 = arith.constant 1 : i32
    %24 = vector.broadcast %c1_i32_10 : i32 to vector<1x256xi32>
    %25 = arith.cmpi sge, %3, %24 : vector<1x256xi32>
    %26 = arith.andi %23, %25 : vector<1x256xi1>
    %cst_11 = arith.constant 0.000000e+00 : f32
    %27 = vector.shape_cast %26 : vector<1x256xi1> to vector<1x256xi1>
    %28 = vector.broadcast %27 : vector<1x256xi1> to vector<8x256xi1>
    %29 = vector.broadcast %cst_11 : f32 to vector<8x256xf32>
    %30 = arith.select %28, %21, %29 : vector<8x256xi1>, vector<8x256xf32>
    %c1_i32_12 = arith.constant 1 : i32
    %31 = tpu.dynamic_rotate %1 by %c1_i32_12 dim 1 : vector<8x256xf32>, i32 -> vector<8x256xf32>
    %c1_i32_13 = arith.constant 1 : i32
    %32 = vector.broadcast %c1_i32_13 : i32 to vector<1x256xi32>
    %33 = arith.cmpi sge, %2, %32 : vector<1x256xi32>
    %cst_14 = arith.constant 0.000000e+00 : f32
    %34 = vector.shape_cast %33 : vector<1x256xi1> to vector<1x256xi1>
    %35 = vector.broadcast %34 : vector<1x256xi1> to vector<8x256xi1>
    %36 = vector.broadcast %cst_14 : f32 to vector<8x256xf32>
    %37 = arith.select %35, %31, %36 : vector<8x256xi1>, vector<8x256xf32>
    %c255_i32 = arith.constant 255 : i32
    %38 = tpu.dynamic_rotate %1 by %c255_i32 dim 1 : vector<8x256xf32>, i32 -> vector<8x256xf32>
    %c15_i32_15 = arith.constant 15 : i32
    %39 = vector.broadcast %c15_i32_15 : i32 to vector<1x256xi32>
    %40 = arith.cmpi slt, %2, %39 : vector<1x256xi32>
    %cst_16 = arith.constant 0.000000e+00 : f32
    %41 = vector.shape_cast %40 : vector<1x256xi1> to vector<1x256xi1>
    %42 = vector.broadcast %41 : vector<1x256xi1> to vector<8x256xi1>
    %43 = vector.broadcast %cst_16 : f32 to vector<8x256xf32>
    %44 = arith.select %42, %38, %43 : vector<8x256xi1>, vector<8x256xf32>
    %c241_i32 = arith.constant 241 : i32
    %45 = tpu.dynamic_rotate %1 by %c241_i32 dim 1 : vector<8x256xf32>, i32 -> vector<8x256xf32>
    %c1_i32_17 = arith.constant 1 : i32
    %46 = vector.broadcast %c1_i32_17 : i32 to vector<1x256xi32>
    %47 = arith.cmpi sge, %2, %46 : vector<1x256xi32>
    %c15_i32_18 = arith.constant 15 : i32
    %48 = vector.broadcast %c15_i32_18 : i32 to vector<1x256xi32>
    %49 = arith.cmpi slt, %3, %48 : vector<1x256xi32>
    %50 = arith.andi %47, %49 : vector<1x256xi1>
    %cst_19 = arith.constant 0.000000e+00 : f32
    %51 = vector.shape_cast %50 : vector<1x256xi1> to vector<1x256xi1>
    %52 = vector.broadcast %51 : vector<1x256xi1> to vector<8x256xi1>
    %53 = vector.broadcast %cst_19 : f32 to vector<8x256xf32>
    %54 = arith.select %52, %45, %53 : vector<8x256xi1>, vector<8x256xf32>
    %c240_i32 = arith.constant 240 : i32
    %55 = tpu.dynamic_rotate %1 by %c240_i32 dim 1 : vector<8x256xf32>, i32 -> vector<8x256xf32>
    %c15_i32_20 = arith.constant 15 : i32
    %56 = vector.broadcast %c15_i32_20 : i32 to vector<1x256xi32>
    %57 = arith.cmpi slt, %3, %56 : vector<1x256xi32>
    %cst_21 = arith.constant 0.000000e+00 : f32
    %58 = vector.shape_cast %57 : vector<1x256xi1> to vector<1x256xi1>
    %59 = vector.broadcast %58 : vector<1x256xi1> to vector<8x256xi1>
    %60 = vector.broadcast %cst_21 : f32 to vector<8x256xf32>
    %61 = arith.select %59, %55, %60 : vector<8x256xi1>, vector<8x256xf32>
    %c239_i32 = arith.constant 239 : i32
    %62 = tpu.dynamic_rotate %1 by %c239_i32 dim 1 : vector<8x256xf32>, i32 -> vector<8x256xf32>
    %c15_i32_22 = arith.constant 15 : i32
    %63 = vector.broadcast %c15_i32_22 : i32 to vector<1x256xi32>
    %64 = arith.cmpi slt, %2, %63 : vector<1x256xi32>
    %c15_i32_23 = arith.constant 15 : i32
    %65 = vector.broadcast %c15_i32_23 : i32 to vector<1x256xi32>
    %66 = arith.cmpi slt, %3, %65 : vector<1x256xi32>
    %67 = arith.andi %64, %66 : vector<1x256xi1>
    %cst_24 = arith.constant 0.000000e+00 : f32
    %68 = vector.shape_cast %67 : vector<1x256xi1> to vector<1x256xi1>
    %69 = vector.broadcast %68 : vector<1x256xi1> to vector<8x256xi1>
    %70 = vector.broadcast %cst_24 : f32 to vector<8x256xf32>
    %71 = arith.select %69, %62, %70 : vector<8x256xi1>, vector<8x256xf32>
    %72 = tpu.concatenate %13, %20, %30, %37, %1, %44, %54, %61, %71 in 0 : vector<8x256xf32>, vector<8x256xf32>, vector<8x256xf32>, vector<8x256xf32>, vector<8x256xf32>, vector<8x256xf32>, vector<8x256xf32>, vector<8x256xf32>, vector<8x256xf32> -> vector<72x256xf32>
    %c0_25 = arith.constant 0 : index
    %c0_26 = arith.constant 0 : index
    %c0_27 = arith.constant 0 : index
    %73 = vector.load %arg4[%c0_25, %c0_26, %c0_27] : memref<8x8x72xf32, #tpu.memory_space<vmem>>, vector<1x8x72xf32>
    %74 = vector.shape_cast %73 : vector<1x8x72xf32> to vector<8x72xf32>
    %cst_28 = arith.constant dense<0.000000e+00> : vector<8x256xf32>
    %75 = tpu.matmul %74, %72, %cst_28 {dimension_numbers = #tpu.dot_dimension_numbers<[1], [0], [0], [1], [0, 0, 1, 1], [], []>} : vector<8x72xf32>, vector<72x256xf32>, vector<8x256xf32> -> vector<8x256xf32>
    %c0_29 = arith.constant 0 : index
    %c0_30 = arith.constant 0 : index
    %c0_31 = arith.constant 0 : index
    %76 = vector.load %arg5[%c0_29, %c0_30, %c0_31] : memref<8x8x1xf32, #tpu.memory_space<vmem>>, vector<1x8x1xf32>
    %77 = vector.shape_cast %76 : vector<1x8x1xf32> to vector<8x1xf32>
    %78 = vector.broadcast %77 : vector<8x1xf32> to vector<8x256xf32>
    %79 = arith.addf %75, %78 : vector<8x256xf32>
    %cst_32 = arith.constant 0.000000e+00 : f32
    %80 = vector.broadcast %cst_32 : f32 to vector<8x256xf32>
    %81 = arith.maximumf %79, %80 : vector<8x256xf32>
    %c34_i32 = arith.constant 34 : i32
    %82 = tpu.dynamic_rotate %81 by %c34_i32 dim 1 : vector<8x256xf32>, i32 -> vector<8x256xf32>
    %c2_i32 = arith.constant 2 : i32
    %83 = vector.broadcast %c2_i32 : i32 to vector<1x256xi32>
    %84 = arith.cmpi sge, %2, %83 : vector<1x256xi32>
    %c2_i32_33 = arith.constant 2 : i32
    %85 = vector.broadcast %c2_i32_33 : i32 to vector<1x256xi32>
    %86 = arith.cmpi sge, %3, %85 : vector<1x256xi32>
    %87 = arith.andi %84, %86 : vector<1x256xi1>
    %cst_34 = arith.constant 0.000000e+00 : f32
    %88 = vector.shape_cast %87 : vector<1x256xi1> to vector<1x256xi1>
    %89 = vector.broadcast %88 : vector<1x256xi1> to vector<8x256xi1>
    %90 = vector.broadcast %cst_34 : f32 to vector<8x256xf32>
    %91 = arith.select %89, %82, %90 : vector<8x256xi1>, vector<8x256xf32>
    %c32_i32 = arith.constant 32 : i32
    %92 = tpu.dynamic_rotate %81 by %c32_i32 dim 1 : vector<8x256xf32>, i32 -> vector<8x256xf32>
    %c2_i32_35 = arith.constant 2 : i32
    %93 = vector.broadcast %c2_i32_35 : i32 to vector<1x256xi32>
    %94 = arith.cmpi sge, %3, %93 : vector<1x256xi32>
    %cst_36 = arith.constant 0.000000e+00 : f32
    %95 = vector.shape_cast %94 : vector<1x256xi1> to vector<1x256xi1>
    %96 = vector.broadcast %95 : vector<1x256xi1> to vector<8x256xi1>
    %97 = vector.broadcast %cst_36 : f32 to vector<8x256xf32>
    %98 = arith.select %96, %92, %97 : vector<8x256xi1>, vector<8x256xf32>
    %c30_i32 = arith.constant 30 : i32
    %99 = tpu.dynamic_rotate %81 by %c30_i32 dim 1 : vector<8x256xf32>, i32 -> vector<8x256xf32>
    %c14_i32 = arith.constant 14 : i32
    %100 = vector.broadcast %c14_i32 : i32 to vector<1x256xi32>
    %101 = arith.cmpi slt, %2, %100 : vector<1x256xi32>
    %c2_i32_37 = arith.constant 2 : i32
    %102 = vector.broadcast %c2_i32_37 : i32 to vector<1x256xi32>
    %103 = arith.cmpi sge, %3, %102 : vector<1x256xi32>
    %104 = arith.andi %101, %103 : vector<1x256xi1>
    %cst_38 = arith.constant 0.000000e+00 : f32
    %105 = vector.shape_cast %104 : vector<1x256xi1> to vector<1x256xi1>
    %106 = vector.broadcast %105 : vector<1x256xi1> to vector<8x256xi1>
    %107 = vector.broadcast %cst_38 : f32 to vector<8x256xf32>
    %108 = arith.select %106, %99, %107 : vector<8x256xi1>, vector<8x256xf32>
    %c2_i32_39 = arith.constant 2 : i32
    %109 = tpu.dynamic_rotate %81 by %c2_i32_39 dim 1 : vector<8x256xf32>, i32 -> vector<8x256xf32>
    %c2_i32_40 = arith.constant 2 : i32
    %110 = vector.broadcast %c2_i32_40 : i32 to vector<1x256xi32>
    %111 = arith.cmpi sge, %2, %110 : vector<1x256xi32>
    %cst_41 = arith.constant 0.000000e+00 : f32
    %112 = vector.shape_cast %111 : vector<1x256xi1> to vector<1x256xi1>
    %113 = vector.broadcast %112 : vector<1x256xi1> to vector<8x256xi1>
    %114 = vector.broadcast %cst_41 : f32 to vector<8x256xf32>
    %115 = arith.select %113, %109, %114 : vector<8x256xi1>, vector<8x256xf32>
    %c254_i32 = arith.constant 254 : i32
    %116 = tpu.dynamic_rotate %81 by %c254_i32 dim 1 : vector<8x256xf32>, i32 -> vector<8x256xf32>
    %c14_i32_42 = arith.constant 14 : i32
    %117 = vector.broadcast %c14_i32_42 : i32 to vector<1x256xi32>
    %118 = arith.cmpi slt, %2, %117 : vector<1x256xi32>
    %cst_43 = arith.constant 0.000000e+00 : f32
    %119 = vector.shape_cast %118 : vector<1x256xi1> to vector<1x256xi1>
    %120 = vector.broadcast %119 : vector<1x256xi1> to vector<8x256xi1>
    %121 = vector.broadcast %cst_43 : f32 to vector<8x256xf32>
    %122 = arith.select %120, %116, %121 : vector<8x256xi1>, vector<8x256xf32>
    %c226_i32 = arith.constant 226 : i32
    %123 = tpu.dynamic_rotate %81 by %c226_i32 dim 1 : vector<8x256xf32>, i32 -> vector<8x256xf32>
    %c2_i32_44 = arith.constant 2 : i32
    %124 = vector.broadcast %c2_i32_44 : i32 to vector<1x256xi32>
    %125 = arith.cmpi sge, %2, %124 : vector<1x256xi32>
    %c14_i32_45 = arith.constant 14 : i32
    %126 = vector.broadcast %c14_i32_45 : i32 to vector<1x256xi32>
    %127 = arith.cmpi slt, %3, %126 : vector<1x256xi32>
    %128 = arith.andi %125, %127 : vector<1x256xi1>
    %cst_46 = arith.constant 0.000000e+00 : f32
    %129 = vector.shape_cast %128 : vector<1x256xi1> to vector<1x256xi1>
    %130 = vector.broadcast %129 : vector<1x256xi1> to vector<8x256xi1>
    %131 = vector.broadcast %cst_46 : f32 to vector<8x256xf32>
    %132 = arith.select %130, %123, %131 : vector<8x256xi1>, vector<8x256xf32>
    %c224_i32 = arith.constant 224 : i32
    %133 = tpu.dynamic_rotate %81 by %c224_i32 dim 1 : vector<8x256xf32>, i32 -> vector<8x256xf32>
    %c14_i32_47 = arith.constant 14 : i32
    %134 = vector.broadcast %c14_i32_47 : i32 to vector<1x256xi32>
    %135 = arith.cmpi slt, %3, %134 : vector<1x256xi32>
    %cst_48 = arith.constant 0.000000e+00 : f32
    %136 = vector.shape_cast %135 : vector<1x256xi1> to vector<1x256xi1>
    %137 = vector.broadcast %136 : vector<1x256xi1> to vector<8x256xi1>
    %138 = vector.broadcast %cst_48 : f32 to vector<8x256xf32>
    %139 = arith.select %137, %133, %138 : vector<8x256xi1>, vector<8x256xf32>
    %c222_i32 = arith.constant 222 : i32
    %140 = tpu.dynamic_rotate %81 by %c222_i32 dim 1 : vector<8x256xf32>, i32 -> vector<8x256xf32>
    %c14_i32_49 = arith.constant 14 : i32
    %141 = vector.broadcast %c14_i32_49 : i32 to vector<1x256xi32>
    %142 = arith.cmpi slt, %2, %141 : vector<1x256xi32>
    %c14_i32_50 = arith.constant 14 : i32
    %143 = vector.broadcast %c14_i32_50 : i32 to vector<1x256xi32>
    %144 = arith.cmpi slt, %3, %143 : vector<1x256xi32>
    %145 = arith.andi %142, %144 : vector<1x256xi1>
    %cst_51 = arith.constant 0.000000e+00 : f32
    %146 = vector.shape_cast %145 : vector<1x256xi1> to vector<1x256xi1>
    %147 = vector.broadcast %146 : vector<1x256xi1> to vector<8x256xi1>
    %148 = vector.broadcast %cst_51 : f32 to vector<8x256xf32>
    %149 = arith.select %147, %140, %148 : vector<8x256xi1>, vector<8x256xf32>
    %150 = tpu.concatenate %91, %98, %108, %115, %81, %122, %132, %139, %149 in 0 : vector<8x256xf32>, vector<8x256xf32>, vector<8x256xf32>, vector<8x256xf32>, vector<8x256xf32>, vector<8x256xf32>, vector<8x256xf32>, vector<8x256xf32>, vector<8x256xf32> -> vector<72x256xf32>
    %c1 = arith.constant 1 : index
    %c0_52 = arith.constant 0 : index
    %c0_53 = arith.constant 0 : index
    %151 = vector.load %arg4[%c1, %c0_52, %c0_53] : memref<8x8x72xf32, #tpu.memory_space<vmem>>, vector<1x8x72xf32>
    %152 = vector.shape_cast %151 : vector<1x8x72xf32> to vector<8x72xf32>
    %cst_54 = arith.constant dense<0.000000e+00> : vector<8x256xf32>
    %153 = tpu.matmul %152, %150, %cst_54 {dimension_numbers = #tpu.dot_dimension_numbers<[1], [0], [0], [1], [0, 0, 1, 1], [], []>} : vector<8x72xf32>, vector<72x256xf32>, vector<8x256xf32> -> vector<8x256xf32>
    %c1_55 = arith.constant 1 : index
    %c0_56 = arith.constant 0 : index
    %c0_57 = arith.constant 0 : index
    %154 = vector.load %arg5[%c1_55, %c0_56, %c0_57] : memref<8x8x1xf32, #tpu.memory_space<vmem>>, vector<1x8x1xf32>
    %155 = vector.shape_cast %154 : vector<1x8x1xf32> to vector<8x1xf32>
    %156 = vector.broadcast %155 : vector<8x1xf32> to vector<8x256xf32>
    %157 = arith.addf %153, %156 : vector<8x256xf32>
    %cst_58 = arith.constant 0.000000e+00 : f32
    %158 = vector.broadcast %cst_58 : f32 to vector<8x256xf32>
    %159 = arith.maximumf %157, %158 : vector<8x256xf32>
    %c51_i32 = arith.constant 51 : i32
    %160 = tpu.dynamic_rotate %1 by %c51_i32 dim 1 : vector<8x256xf32>, i32 -> vector<8x256xf32>
    %c3_i32 = arith.constant 3 : i32
    %161 = vector.broadcast %c3_i32 : i32 to vector<1x256xi32>
    %162 = arith.cmpi sge, %2, %161 : vector<1x256xi32>
    %c3_i32_59 = arith.constant 3 : i32
    %163 = vector.broadcast %c3_i32_59 : i32 to vector<1x256xi32>
    %164 = arith.cmpi sge, %3, %163 : vector<1x256xi32>
    %165 = arith.andi %162, %164 : vector<1x256xi1>
    %cst_60 = arith.constant 0.000000e+00 : f32
    %166 = vector.shape_cast %165 : vector<1x256xi1> to vector<1x256xi1>
    %167 = vector.broadcast %166 : vector<1x256xi1> to vector<8x256xi1>
    %168 = vector.broadcast %cst_60 : f32 to vector<8x256xf32>
    %169 = arith.select %167, %160, %168 : vector<8x256xi1>, vector<8x256xf32>
    %c48_i32 = arith.constant 48 : i32
    %170 = tpu.dynamic_rotate %1 by %c48_i32 dim 1 : vector<8x256xf32>, i32 -> vector<8x256xf32>
    %c3_i32_61 = arith.constant 3 : i32
    %171 = vector.broadcast %c3_i32_61 : i32 to vector<1x256xi32>
    %172 = arith.cmpi sge, %3, %171 : vector<1x256xi32>
    %cst_62 = arith.constant 0.000000e+00 : f32
    %173 = vector.shape_cast %172 : vector<1x256xi1> to vector<1x256xi1>
    %174 = vector.broadcast %173 : vector<1x256xi1> to vector<8x256xi1>
    %175 = vector.broadcast %cst_62 : f32 to vector<8x256xf32>
    %176 = arith.select %174, %170, %175 : vector<8x256xi1>, vector<8x256xf32>
    %c45_i32 = arith.constant 45 : i32
    %177 = tpu.dynamic_rotate %1 by %c45_i32 dim 1 : vector<8x256xf32>, i32 -> vector<8x256xf32>
    %c13_i32 = arith.constant 13 : i32
    %178 = vector.broadcast %c13_i32 : i32 to vector<1x256xi32>
    %179 = arith.cmpi slt, %2, %178 : vector<1x256xi32>
    %c3_i32_63 = arith.constant 3 : i32
    %180 = vector.broadcast %c3_i32_63 : i32 to vector<1x256xi32>
    %181 = arith.cmpi sge, %3, %180 : vector<1x256xi32>
    %182 = arith.andi %179, %181 : vector<1x256xi1>
    %cst_64 = arith.constant 0.000000e+00 : f32
    %183 = vector.shape_cast %182 : vector<1x256xi1> to vector<1x256xi1>
    %184 = vector.broadcast %183 : vector<1x256xi1> to vector<8x256xi1>
    %185 = vector.broadcast %cst_64 : f32 to vector<8x256xf32>
    %186 = arith.select %184, %177, %185 : vector<8x256xi1>, vector<8x256xf32>
    %c3_i32_65 = arith.constant 3 : i32
    %187 = tpu.dynamic_rotate %1 by %c3_i32_65 dim 1 : vector<8x256xf32>, i32 -> vector<8x256xf32>
    %c3_i32_66 = arith.constant 3 : i32
    %188 = vector.broadcast %c3_i32_66 : i32 to vector<1x256xi32>
    %189 = arith.cmpi sge, %2, %188 : vector<1x256xi32>
    %cst_67 = arith.constant 0.000000e+00 : f32
    %190 = vector.shape_cast %189 : vector<1x256xi1> to vector<1x256xi1>
    %191 = vector.broadcast %190 : vector<1x256xi1> to vector<8x256xi1>
    %192 = vector.broadcast %cst_67 : f32 to vector<8x256xf32>
    %193 = arith.select %191, %187, %192 : vector<8x256xi1>, vector<8x256xf32>
    %c253_i32 = arith.constant 253 : i32
    %194 = tpu.dynamic_rotate %1 by %c253_i32 dim 1 : vector<8x256xf32>, i32 -> vector<8x256xf32>
    %c13_i32_68 = arith.constant 13 : i32
    %195 = vector.broadcast %c13_i32_68 : i32 to vector<1x256xi32>
    %196 = arith.cmpi slt, %2, %195 : vector<1x256xi32>
    %cst_69 = arith.constant 0.000000e+00 : f32
    %197 = vector.shape_cast %196 : vector<1x256xi1> to vector<1x256xi1>
    %198 = vector.broadcast %197 : vector<1x256xi1> to vector<8x256xi1>
    %199 = vector.broadcast %cst_69 : f32 to vector<8x256xf32>
    %200 = arith.select %198, %194, %199 : vector<8x256xi1>, vector<8x256xf32>
    %c211_i32 = arith.constant 211 : i32
    %201 = tpu.dynamic_rotate %1 by %c211_i32 dim 1 : vector<8x256xf32>, i32 -> vector<8x256xf32>
    %c3_i32_70 = arith.constant 3 : i32
    %202 = vector.broadcast %c3_i32_70 : i32 to vector<1x256xi32>
    %203 = arith.cmpi sge, %2, %202 : vector<1x256xi32>
    %c13_i32_71 = arith.constant 13 : i32
    %204 = vector.broadcast %c13_i32_71 : i32 to vector<1x256xi32>
    %205 = arith.cmpi slt, %3, %204 : vector<1x256xi32>
    %206 = arith.andi %203, %205 : vector<1x256xi1>
    %cst_72 = arith.constant 0.000000e+00 : f32
    %207 = vector.shape_cast %206 : vector<1x256xi1> to vector<1x256xi1>
    %208 = vector.broadcast %207 : vector<1x256xi1> to vector<8x256xi1>
    %209 = vector.broadcast %cst_72 : f32 to vector<8x256xf32>
    %210 = arith.select %208, %201, %209 : vector<8x256xi1>, vector<8x256xf32>
    %c208_i32 = arith.constant 208 : i32
    %211 = tpu.dynamic_rotate %1 by %c208_i32 dim 1 : vector<8x256xf32>, i32 -> vector<8x256xf32>
    %c13_i32_73 = arith.constant 13 : i32
    %212 = vector.broadcast %c13_i32_73 : i32 to vector<1x256xi32>
    %213 = arith.cmpi slt, %3, %212 : vector<1x256xi32>
    %cst_74 = arith.constant 0.000000e+00 : f32
    %214 = vector.shape_cast %213 : vector<1x256xi1> to vector<1x256xi1>
    %215 = vector.broadcast %214 : vector<1x256xi1> to vector<8x256xi1>
    %216 = vector.broadcast %cst_74 : f32 to vector<8x256xf32>
    %217 = arith.select %215, %211, %216 : vector<8x256xi1>, vector<8x256xf32>
    %c205_i32 = arith.constant 205 : i32
    %218 = tpu.dynamic_rotate %1 by %c205_i32 dim 1 : vector<8x256xf32>, i32 -> vector<8x256xf32>
    %c13_i32_75 = arith.constant 13 : i32
    %219 = vector.broadcast %c13_i32_75 : i32 to vector<1x256xi32>
    %220 = arith.cmpi slt, %2, %219 : vector<1x256xi32>
    %c13_i32_76 = arith.constant 13 : i32
    %221 = vector.broadcast %c13_i32_76 : i32 to vector<1x256xi32>
    %222 = arith.cmpi slt, %3, %221 : vector<1x256xi32>
    %223 = arith.andi %220, %222 : vector<1x256xi1>
    %cst_77 = arith.constant 0.000000e+00 : f32
    %224 = vector.shape_cast %223 : vector<1x256xi1> to vector<1x256xi1>
    %225 = vector.broadcast %224 : vector<1x256xi1> to vector<8x256xi1>
    %226 = vector.broadcast %cst_77 : f32 to vector<8x256xf32>
    %227 = arith.select %225, %218, %226 : vector<8x256xi1>, vector<8x256xf32>
    %228 = tpu.concatenate %169, %176, %186, %193, %1, %200, %210, %217, %227 in 0 : vector<8x256xf32>, vector<8x256xf32>, vector<8x256xf32>, vector<8x256xf32>, vector<8x256xf32>, vector<8x256xf32>, vector<8x256xf32>, vector<8x256xf32>, vector<8x256xf32> -> vector<72x256xf32>
    %c2 = arith.constant 2 : index
    %c0_78 = arith.constant 0 : index
    %c0_79 = arith.constant 0 : index
    %229 = vector.load %arg4[%c2, %c0_78, %c0_79] : memref<8x8x72xf32, #tpu.memory_space<vmem>>, vector<1x8x72xf32>
    %230 = vector.shape_cast %229 : vector<1x8x72xf32> to vector<8x72xf32>
    %cst_80 = arith.constant dense<0.000000e+00> : vector<8x256xf32>
    %231 = tpu.matmul %230, %228, %cst_80 {dimension_numbers = #tpu.dot_dimension_numbers<[1], [0], [0], [1], [0, 0, 1, 1], [], []>} : vector<8x72xf32>, vector<72x256xf32>, vector<8x256xf32> -> vector<8x256xf32>
    %c2_81 = arith.constant 2 : index
    %c0_82 = arith.constant 0 : index
    %c0_83 = arith.constant 0 : index
    %232 = vector.load %arg5[%c2_81, %c0_82, %c0_83] : memref<8x8x1xf32, #tpu.memory_space<vmem>>, vector<1x8x1xf32>
    %233 = vector.shape_cast %232 : vector<1x8x1xf32> to vector<8x1xf32>
    %234 = vector.broadcast %233 : vector<8x1xf32> to vector<8x256xf32>
    %235 = arith.addf %231, %234 : vector<8x256xf32>
    %cst_84 = arith.constant 0.000000e+00 : f32
    %236 = vector.broadcast %cst_84 : f32 to vector<8x256xf32>
    %237 = arith.maximumf %235, %236 : vector<8x256xf32>
    %c68_i32 = arith.constant 68 : i32
    %238 = tpu.dynamic_rotate %237 by %c68_i32 dim 1 : vector<8x256xf32>, i32 -> vector<8x256xf32>
    %c4_i32 = arith.constant 4 : i32
    %239 = vector.broadcast %c4_i32 : i32 to vector<1x256xi32>
    %240 = arith.cmpi sge, %2, %239 : vector<1x256xi32>
    %c4_i32_85 = arith.constant 4 : i32
    %241 = vector.broadcast %c4_i32_85 : i32 to vector<1x256xi32>
    %242 = arith.cmpi sge, %3, %241 : vector<1x256xi32>
    %243 = arith.andi %240, %242 : vector<1x256xi1>
    %cst_86 = arith.constant 0.000000e+00 : f32
    %244 = vector.shape_cast %243 : vector<1x256xi1> to vector<1x256xi1>
    %245 = vector.broadcast %244 : vector<1x256xi1> to vector<8x256xi1>
    %246 = vector.broadcast %cst_86 : f32 to vector<8x256xf32>
    %247 = arith.select %245, %238, %246 : vector<8x256xi1>, vector<8x256xf32>
    %c64_i32 = arith.constant 64 : i32
    %248 = tpu.dynamic_rotate %237 by %c64_i32 dim 1 : vector<8x256xf32>, i32 -> vector<8x256xf32>
    %c4_i32_87 = arith.constant 4 : i32
    %249 = vector.broadcast %c4_i32_87 : i32 to vector<1x256xi32>
    %250 = arith.cmpi sge, %3, %249 : vector<1x256xi32>
    %cst_88 = arith.constant 0.000000e+00 : f32
    %251 = vector.shape_cast %250 : vector<1x256xi1> to vector<1x256xi1>
    %252 = vector.broadcast %251 : vector<1x256xi1> to vector<8x256xi1>
    %253 = vector.broadcast %cst_88 : f32 to vector<8x256xf32>
    %254 = arith.select %252, %248, %253 : vector<8x256xi1>, vector<8x256xf32>
    %c60_i32 = arith.constant 60 : i32
    %255 = tpu.dynamic_rotate %237 by %c60_i32 dim 1 : vector<8x256xf32>, i32 -> vector<8x256xf32>
    %c12_i32 = arith.constant 12 : i32
    %256 = vector.broadcast %c12_i32 : i32 to vector<1x256xi32>
    %257 = arith.cmpi slt, %2, %256 : vector<1x256xi32>
    %c4_i32_89 = arith.constant 4 : i32
    %258 = vector.broadcast %c4_i32_89 : i32 to vector<1x256xi32>
    %259 = arith.cmpi sge, %3, %258 : vector<1x256xi32>
    %260 = arith.andi %257, %259 : vector<1x256xi1>
    %cst_90 = arith.constant 0.000000e+00 : f32
    %261 = vector.shape_cast %260 : vector<1x256xi1> to vector<1x256xi1>
    %262 = vector.broadcast %261 : vector<1x256xi1> to vector<8x256xi1>
    %263 = vector.broadcast %cst_90 : f32 to vector<8x256xf32>
    %264 = arith.select %262, %255, %263 : vector<8x256xi1>, vector<8x256xf32>
    %c4_i32_91 = arith.constant 4 : i32
    %265 = tpu.dynamic_rotate %237 by %c4_i32_91 dim 1 : vector<8x256xf32>, i32 -> vector<8x256xf32>
    %c4_i32_92 = arith.constant 4 : i32
    %266 = vector.broadcast %c4_i32_92 : i32 to vector<1x256xi32>
    %267 = arith.cmpi sge, %2, %266 : vector<1x256xi32>
    %cst_93 = arith.constant 0.000000e+00 : f32
    %268 = vector.shape_cast %267 : vector<1x256xi1> to vector<1x256xi1>
    %269 = vector.broadcast %268 : vector<1x256xi1> to vector<8x256xi1>
    %270 = vector.broadcast %cst_93 : f32 to vector<8x256xf32>
    %271 = arith.select %269, %265, %270 : vector<8x256xi1>, vector<8x256xf32>
    %c252_i32 = arith.constant 252 : i32
    %272 = tpu.dynamic_rotate %237 by %c252_i32 dim 1 : vector<8x256xf32>, i32 -> vector<8x256xf32>
    %c12_i32_94 = arith.constant 12 : i32
    %273 = vector.broadcast %c12_i32_94 : i32 to vector<1x256xi32>
    %274 = arith.cmpi slt, %2, %273 : vector<1x256xi32>
    %cst_95 = arith.constant 0.000000e+00 : f32
    %275 = vector.shape_cast %274 : vector<1x256xi1> to vector<1x256xi1>
    %276 = vector.broadcast %275 : vector<1x256xi1> to vector<8x256xi1>
    %277 = vector.broadcast %cst_95 : f32 to vector<8x256xf32>
    %278 = arith.select %276, %272, %277 : vector<8x256xi1>, vector<8x256xf32>
    %c196_i32 = arith.constant 196 : i32
    %279 = tpu.dynamic_rotate %237 by %c196_i32 dim 1 : vector<8x256xf32>, i32 -> vector<8x256xf32>
    %c4_i32_96 = arith.constant 4 : i32
    %280 = vector.broadcast %c4_i32_96 : i32 to vector<1x256xi32>
    %281 = arith.cmpi sge, %2, %280 : vector<1x256xi32>
    %c12_i32_97 = arith.constant 12 : i32
    %282 = vector.broadcast %c12_i32_97 : i32 to vector<1x256xi32>
    %283 = arith.cmpi slt, %3, %282 : vector<1x256xi32>
    %284 = arith.andi %281, %283 : vector<1x256xi1>
    %cst_98 = arith.constant 0.000000e+00 : f32
    %285 = vector.shape_cast %284 : vector<1x256xi1> to vector<1x256xi1>
    %286 = vector.broadcast %285 : vector<1x256xi1> to vector<8x256xi1>
    %287 = vector.broadcast %cst_98 : f32 to vector<8x256xf32>
    %288 = arith.select %286, %279, %287 : vector<8x256xi1>, vector<8x256xf32>
    %c192_i32 = arith.constant 192 : i32
    %289 = tpu.dynamic_rotate %237 by %c192_i32 dim 1 : vector<8x256xf32>, i32 -> vector<8x256xf32>
    %c12_i32_99 = arith.constant 12 : i32
    %290 = vector.broadcast %c12_i32_99 : i32 to vector<1x256xi32>
    %291 = arith.cmpi slt, %3, %290 : vector<1x256xi32>
    %cst_100 = arith.constant 0.000000e+00 : f32
    %292 = vector.shape_cast %291 : vector<1x256xi1> to vector<1x256xi1>
    %293 = vector.broadcast %292 : vector<1x256xi1> to vector<8x256xi1>
    %294 = vector.broadcast %cst_100 : f32 to vector<8x256xf32>
    %295 = arith.select %293, %289, %294 : vector<8x256xi1>, vector<8x256xf32>
    %c188_i32 = arith.constant 188 : i32
    %296 = tpu.dynamic_rotate %237 by %c188_i32 dim 1 : vector<8x256xf32>, i32 -> vector<8x256xf32>
    %c12_i32_101 = arith.constant 12 : i32
    %297 = vector.broadcast %c12_i32_101 : i32 to vector<1x256xi32>
    %298 = arith.cmpi slt, %2, %297 : vector<1x256xi32>
    %c12_i32_102 = arith.constant 12 : i32
    %299 = vector.broadcast %c12_i32_102 : i32 to vector<1x256xi32>
    %300 = arith.cmpi slt, %3, %299 : vector<1x256xi32>
    %301 = arith.andi %298, %300 : vector<1x256xi1>
    %cst_103 = arith.constant 0.000000e+00 : f32
    %302 = vector.shape_cast %301 : vector<1x256xi1> to vector<1x256xi1>
    %303 = vector.broadcast %302 : vector<1x256xi1> to vector<8x256xi1>
    %304 = vector.broadcast %cst_103 : f32 to vector<8x256xf32>
    %305 = arith.select %303, %296, %304 : vector<8x256xi1>, vector<8x256xf32>
    %306 = tpu.concatenate %247, %254, %264, %271, %237, %278, %288, %295, %305 in 0 : vector<8x256xf32>, vector<8x256xf32>, vector<8x256xf32>, vector<8x256xf32>, vector<8x256xf32>, vector<8x256xf32>, vector<8x256xf32>, vector<8x256xf32>, vector<8x256xf32> -> vector<72x256xf32>
    %c3 = arith.constant 3 : index
    %c0_104 = arith.constant 0 : index
    %c0_105 = arith.constant 0 : index
    %307 = vector.load %arg4[%c3, %c0_104, %c0_105] : memref<8x8x72xf32, #tpu.memory_space<vmem>>, vector<1x8x72xf32>
    %308 = vector.shape_cast %307 : vector<1x8x72xf32> to vector<8x72xf32>
    %cst_106 = arith.constant dense<0.000000e+00> : vector<8x256xf32>
    %309 = tpu.matmul %308, %306, %cst_106 {dimension_numbers = #tpu.dot_dimension_numbers<[1], [0], [0], [1], [0, 0, 1, 1], [], []>} : vector<8x72xf32>, vector<72x256xf32>, vector<8x256xf32> -> vector<8x256xf32>
    %c3_107 = arith.constant 3 : index
    %c0_108 = arith.constant 0 : index
    %c0_109 = arith.constant 0 : index
    %310 = vector.load %arg5[%c3_107, %c0_108, %c0_109] : memref<8x8x1xf32, #tpu.memory_space<vmem>>, vector<1x8x1xf32>
    %311 = vector.shape_cast %310 : vector<1x8x1xf32> to vector<8x1xf32>
    %312 = vector.broadcast %311 : vector<8x1xf32> to vector<8x256xf32>
    %313 = arith.addf %309, %312 : vector<8x256xf32>
    %cst_110 = arith.constant 0.000000e+00 : f32
    %314 = vector.broadcast %cst_110 : f32 to vector<8x256xf32>
    %315 = arith.maximumf %313, %314 : vector<8x256xf32>
    %c0_111 = arith.constant 0 : index
    %c0_112 = arith.constant 0 : index
    %316 = vector.load %arg6[%c0_111, %c0_112] : memref<8x8xf32, #tpu.memory_space<vmem>>, vector<8x8xf32>
    %cst_113 = arith.constant dense<0.000000e+00> : vector<8x256xf32>
    %317 = tpu.matmul %316, %159, %cst_113 {dimension_numbers = #tpu.dot_dimension_numbers<[1], [0], [0], [1], [0, 0, 1, 1], [], []>} : vector<8x8xf32>, vector<8x256xf32>, vector<8x256xf32> -> vector<8x256xf32>
    %c0_114 = arith.constant 0 : index
    %c0_115 = arith.constant 0 : index
    %318 = vector.load %arg7[%c0_114, %c0_115] : memref<8x8xf32, #tpu.memory_space<vmem>>, vector<8x8xf32>
    %cst_116 = arith.constant dense<0.000000e+00> : vector<8x256xf32>
    %319 = tpu.matmul %318, %315, %cst_116 {dimension_numbers = #tpu.dot_dimension_numbers<[1], [0], [0], [1], [0, 0, 1, 1], [], []>} : vector<8x8xf32>, vector<8x256xf32>, vector<8x256xf32> -> vector<8x256xf32>
    %320 = arith.addf %317, %319 : vector<8x256xf32>
    %c0_117 = arith.constant 0 : index
    %c0_118 = arith.constant 0 : index
    %321 = vector.load %arg8[%c0_117, %c0_118] : memref<8x1xf32, #tpu.memory_space<vmem>>, vector<8x1xf32>
    %322 = vector.broadcast %321 : vector<8x1xf32> to vector<8x256xf32>
    %323 = arith.addf %320, %322 : vector<8x256xf32>
    %cst_119 = arith.constant 0.000000e+00 : f32
    %324 = vector.broadcast %cst_119 : f32 to vector<8x256xf32>
    %325 = arith.maximumf %323, %324 : vector<8x256xf32>
    %326 = arith.addf %325, %1 : vector<8x256xf32>
    %c17_i32_120 = arith.constant 17 : i32
    %327 = tpu.dynamic_rotate %326 by %c17_i32_120 dim 1 : vector<8x256xf32>, i32 -> vector<8x256xf32>
    %c1_i32_121 = arith.constant 1 : i32
    %328 = vector.broadcast %c1_i32_121 : i32 to vector<1x256xi32>
    %329 = arith.cmpi sge, %2, %328 : vector<1x256xi32>
    %c1_i32_122 = arith.constant 1 : i32
    %330 = vector.broadcast %c1_i32_122 : i32 to vector<1x256xi32>
    %331 = arith.cmpi sge, %3, %330 : vector<1x256xi32>
    %332 = arith.andi %329, %331 : vector<1x256xi1>
    %cst_123 = arith.constant 0.000000e+00 : f32
    %333 = vector.shape_cast %332 : vector<1x256xi1> to vector<1x256xi1>
    %334 = vector.broadcast %333 : vector<1x256xi1> to vector<8x256xi1>
    %335 = vector.broadcast %cst_123 : f32 to vector<8x256xf32>
    %336 = arith.select %334, %327, %335 : vector<8x256xi1>, vector<8x256xf32>
    %c16_i32_124 = arith.constant 16 : i32
    %337 = tpu.dynamic_rotate %326 by %c16_i32_124 dim 1 : vector<8x256xf32>, i32 -> vector<8x256xf32>
    %c1_i32_125 = arith.constant 1 : i32
    %338 = vector.broadcast %c1_i32_125 : i32 to vector<1x256xi32>
    %339 = arith.cmpi sge, %3, %338 : vector<1x256xi32>
    %cst_126 = arith.constant 0.000000e+00 : f32
    %340 = vector.shape_cast %339 : vector<1x256xi1> to vector<1x256xi1>
    %341 = vector.broadcast %340 : vector<1x256xi1> to vector<8x256xi1>
    %342 = vector.broadcast %cst_126 : f32 to vector<8x256xf32>
    %343 = arith.select %341, %337, %342 : vector<8x256xi1>, vector<8x256xf32>
    %c15_i32_127 = arith.constant 15 : i32
    %344 = tpu.dynamic_rotate %326 by %c15_i32_127 dim 1 : vector<8x256xf32>, i32 -> vector<8x256xf32>
    %c15_i32_128 = arith.constant 15 : i32
    %345 = vector.broadcast %c15_i32_128 : i32 to vector<1x256xi32>
    %346 = arith.cmpi slt, %2, %345 : vector<1x256xi32>
    %c1_i32_129 = arith.constant 1 : i32
    %347 = vector.broadcast %c1_i32_129 : i32 to vector<1x256xi32>
    %348 = arith.cmpi sge, %3, %347 : vector<1x256xi32>
    %349 = arith.andi %346, %348 : vector<1x256xi1>
    %cst_130 = arith.constant 0.000000e+00 : f32
    %350 = vector.shape_cast %349 : vector<1x256xi1> to vector<1x256xi1>
    %351 = vector.broadcast %350 : vector<1x256xi1> to vector<8x256xi1>
    %352 = vector.broadcast %cst_130 : f32 to vector<8x256xf32>
    %353 = arith.select %351, %344, %352 : vector<8x256xi1>, vector<8x256xf32>
    %c1_i32_131 = arith.constant 1 : i32
    %354 = tpu.dynamic_rotate %326 by %c1_i32_131 dim 1 : vector<8x256xf32>, i32 -> vector<8x256xf32>
    %c1_i32_132 = arith.constant 1 : i32
    %355 = vector.broadcast %c1_i32_132 : i32 to vector<1x256xi32>
    %356 = arith.cmpi sge, %2, %355 : vector<1x256xi32>
    %cst_133 = arith.constant 0.000000e+00 : f32
    %357 = vector.shape_cast %356 : vector<1x256xi1> to vector<1x256xi1>
    %358 = vector.broadcast %357 : vector<1x256xi1> to vector<8x256xi1>
    %359 = vector.broadcast %cst_133 : f32 to vector<8x256xf32>
    %360 = arith.select %358, %354, %359 : vector<8x256xi1>, vector<8x256xf32>
    %c255_i32_134 = arith.constant 255 : i32
    %361 = tpu.dynamic_rotate %326 by %c255_i32_134 dim 1 : vector<8x256xf32>, i32 -> vector<8x256xf32>
    %c15_i32_135 = arith.constant 15 : i32
    %362 = vector.broadcast %c15_i32_135 : i32 to vector<1x256xi32>
    %363 = arith.cmpi slt, %2, %362 : vector<1x256xi32>
    %cst_136 = arith.constant 0.000000e+00 : f32
    %364 = vector.shape_cast %363 : vector<1x256xi1> to vector<1x256xi1>
    %365 = vector.broadcast %364 : vector<1x256xi1> to vector<8x256xi1>
    %366 = vector.broadcast %cst_136 : f32 to vector<8x256xf32>
    %367 = arith.select %365, %361, %366 : vector<8x256xi1>, vector<8x256xf32>
    %c241_i32_137 = arith.constant 241 : i32
    %368 = tpu.dynamic_rotate %326 by %c241_i32_137 dim 1 : vector<8x256xf32>, i32 -> vector<8x256xf32>
    %c1_i32_138 = arith.constant 1 : i32
    %369 = vector.broadcast %c1_i32_138 : i32 to vector<1x256xi32>
    %370 = arith.cmpi sge, %2, %369 : vector<1x256xi32>
    %c15_i32_139 = arith.constant 15 : i32
    %371 = vector.broadcast %c15_i32_139 : i32 to vector<1x256xi32>
    %372 = arith.cmpi slt, %3, %371 : vector<1x256xi32>
    %373 = arith.andi %370, %372 : vector<1x256xi1>
    %cst_140 = arith.constant 0.000000e+00 : f32
    %374 = vector.shape_cast %373 : vector<1x256xi1> to vector<1x256xi1>
    %375 = vector.broadcast %374 : vector<1x256xi1> to vector<8x256xi1>
    %376 = vector.broadcast %cst_140 : f32 to vector<8x256xf32>
    %377 = arith.select %375, %368, %376 : vector<8x256xi1>, vector<8x256xf32>
    %c240_i32_141 = arith.constant 240 : i32
    %378 = tpu.dynamic_rotate %326 by %c240_i32_141 dim 1 : vector<8x256xf32>, i32 -> vector<8x256xf32>
    %c15_i32_142 = arith.constant 15 : i32
    %379 = vector.broadcast %c15_i32_142 : i32 to vector<1x256xi32>
    %380 = arith.cmpi slt, %3, %379 : vector<1x256xi32>
    %cst_143 = arith.constant 0.000000e+00 : f32
    %381 = vector.shape_cast %380 : vector<1x256xi1> to vector<1x256xi1>
    %382 = vector.broadcast %381 : vector<1x256xi1> to vector<8x256xi1>
    %383 = vector.broadcast %cst_143 : f32 to vector<8x256xf32>
    %384 = arith.select %382, %378, %383 : vector<8x256xi1>, vector<8x256xf32>
    %c239_i32_144 = arith.constant 239 : i32
    %385 = tpu.dynamic_rotate %326 by %c239_i32_144 dim 1 : vector<8x256xf32>, i32 -> vector<8x256xf32>
    %c15_i32_145 = arith.constant 15 : i32
    %386 = vector.broadcast %c15_i32_145 : i32 to vector<1x256xi32>
    %387 = arith.cmpi slt, %2, %386 : vector<1x256xi32>
    %c15_i32_146 = arith.constant 15 : i32
    %388 = vector.broadcast %c15_i32_146 : i32 to vector<1x256xi32>
    %389 = arith.cmpi slt, %3, %388 : vector<1x256xi32>
    %390 = arith.andi %387, %389 : vector<1x256xi1>
    %cst_147 = arith.constant 0.000000e+00 : f32
    %391 = vector.shape_cast %390 : vector<1x256xi1> to vector<1x256xi1>
    %392 = vector.broadcast %391 : vector<1x256xi1> to vector<8x256xi1>
    %393 = vector.broadcast %cst_147 : f32 to vector<8x256xf32>
    %394 = arith.select %392, %385, %393 : vector<8x256xi1>, vector<8x256xf32>
    %395 = tpu.concatenate %336, %343, %353, %360, %326, %367, %377, %384, %394 in 0 : vector<8x256xf32>, vector<8x256xf32>, vector<8x256xf32>, vector<8x256xf32>, vector<8x256xf32>, vector<8x256xf32>, vector<8x256xf32>, vector<8x256xf32>, vector<8x256xf32> -> vector<72x256xf32>
    %c4 = arith.constant 4 : index
    %c0_148 = arith.constant 0 : index
    %c0_149 = arith.constant 0 : index
    %396 = vector.load %arg4[%c4, %c0_148, %c0_149] : memref<8x8x72xf32, #tpu.memory_space<vmem>>, vector<1x8x72xf32>
    %397 = vector.shape_cast %396 : vector<1x8x72xf32> to vector<8x72xf32>
    %cst_150 = arith.constant dense<0.000000e+00> : vector<8x256xf32>
    %398 = tpu.matmul %397, %395, %cst_150 {dimension_numbers = #tpu.dot_dimension_numbers<[1], [0], [0], [1], [0, 0, 1, 1], [], []>} : vector<8x72xf32>, vector<72x256xf32>, vector<8x256xf32> -> vector<8x256xf32>
    %c4_151 = arith.constant 4 : index
    %c0_152 = arith.constant 0 : index
    %c0_153 = arith.constant 0 : index
    %399 = vector.load %arg5[%c4_151, %c0_152, %c0_153] : memref<8x8x1xf32, #tpu.memory_space<vmem>>, vector<1x8x1xf32>
    %400 = vector.shape_cast %399 : vector<1x8x1xf32> to vector<8x1xf32>
    %401 = vector.broadcast %400 : vector<8x1xf32> to vector<8x256xf32>
    %402 = arith.addf %398, %401 : vector<8x256xf32>
    %cst_154 = arith.constant 0.000000e+00 : f32
    %403 = vector.broadcast %cst_154 : f32 to vector<8x256xf32>
    %404 = arith.maximumf %402, %403 : vector<8x256xf32>
    %c17_i32_155 = arith.constant 17 : i32
    %405 = tpu.dynamic_rotate %404 by %c17_i32_155 dim 1 : vector<8x256xf32>, i32 -> vector<8x256xf32>
    %c1_i32_156 = arith.constant 1 : i32
    %406 = vector.broadcast %c1_i32_156 : i32 to vector<1x256xi32>
    %407 = arith.cmpi sge, %2, %406 : vector<1x256xi32>
    %c1_i32_157 = arith.constant 1 : i32
    %408 = vector.broadcast %c1_i32_157 : i32 to vector<1x256xi32>
    %409 = arith.cmpi sge, %3, %408 : vector<1x256xi32>
    %410 = arith.andi %407, %409 : vector<1x256xi1>
    %cst_158 = arith.constant 0.000000e+00 : f32
    %411 = vector.shape_cast %410 : vector<1x256xi1> to vector<1x256xi1>
    %412 = vector.broadcast %411 : vector<1x256xi1> to vector<8x256xi1>
    %413 = vector.broadcast %cst_158 : f32 to vector<8x256xf32>
    %414 = arith.select %412, %405, %413 : vector<8x256xi1>, vector<8x256xf32>
    %c16_i32_159 = arith.constant 16 : i32
    %415 = tpu.dynamic_rotate %404 by %c16_i32_159 dim 1 : vector<8x256xf32>, i32 -> vector<8x256xf32>
    %c1_i32_160 = arith.constant 1 : i32
    %416 = vector.broadcast %c1_i32_160 : i32 to vector<1x256xi32>
    %417 = arith.cmpi sge, %3, %416 : vector<1x256xi32>
    %cst_161 = arith.constant 0.000000e+00 : f32
    %418 = vector.shape_cast %417 : vector<1x256xi1> to vector<1x256xi1>
    %419 = vector.broadcast %418 : vector<1x256xi1> to vector<8x256xi1>
    %420 = vector.broadcast %cst_161 : f32 to vector<8x256xf32>
    %421 = arith.select %419, %415, %420 : vector<8x256xi1>, vector<8x256xf32>
    %c15_i32_162 = arith.constant 15 : i32
    %422 = tpu.dynamic_rotate %404 by %c15_i32_162 dim 1 : vector<8x256xf32>, i32 -> vector<8x256xf32>
    %c15_i32_163 = arith.constant 15 : i32
    %423 = vector.broadcast %c15_i32_163 : i32 to vector<1x256xi32>
    %424 = arith.cmpi slt, %2, %423 : vector<1x256xi32>
    %c1_i32_164 = arith.constant 1 : i32
    %425 = vector.broadcast %c1_i32_164 : i32 to vector<1x256xi32>
    %426 = arith.cmpi sge, %3, %425 : vector<1x256xi32>
    %427 = arith.andi %424, %426 : vector<1x256xi1>
    %cst_165 = arith.constant 0.000000e+00 : f32
    %428 = vector.shape_cast %427 : vector<1x256xi1> to vector<1x256xi1>
    %429 = vector.broadcast %428 : vector<1x256xi1> to vector<8x256xi1>
    %430 = vector.broadcast %cst_165 : f32 to vector<8x256xf32>
    %431 = arith.select %429, %422, %430 : vector<8x256xi1>, vector<8x256xf32>
    %c1_i32_166 = arith.constant 1 : i32
    %432 = tpu.dynamic_rotate %404 by %c1_i32_166 dim 1 : vector<8x256xf32>, i32 -> vector<8x256xf32>
    %c1_i32_167 = arith.constant 1 : i32
    %433 = vector.broadcast %c1_i32_167 : i32 to vector<1x256xi32>
    %434 = arith.cmpi sge, %2, %433 : vector<1x256xi32>
    %cst_168 = arith.constant 0.000000e+00 : f32
    %435 = vector.shape_cast %434 : vector<1x256xi1> to vector<1x256xi1>
    %436 = vector.broadcast %435 : vector<1x256xi1> to vector<8x256xi1>
    %437 = vector.broadcast %cst_168 : f32 to vector<8x256xf32>
    %438 = arith.select %436, %432, %437 : vector<8x256xi1>, vector<8x256xf32>
    %c255_i32_169 = arith.constant 255 : i32
    %439 = tpu.dynamic_rotate %404 by %c255_i32_169 dim 1 : vector<8x256xf32>, i32 -> vector<8x256xf32>
    %c15_i32_170 = arith.constant 15 : i32
    %440 = vector.broadcast %c15_i32_170 : i32 to vector<1x256xi32>
    %441 = arith.cmpi slt, %2, %440 : vector<1x256xi32>
    %cst_171 = arith.constant 0.000000e+00 : f32
    %442 = vector.shape_cast %441 : vector<1x256xi1> to vector<1x256xi1>
    %443 = vector.broadcast %442 : vector<1x256xi1> to vector<8x256xi1>
    %444 = vector.broadcast %cst_171 : f32 to vector<8x256xf32>
    %445 = arith.select %443, %439, %444 : vector<8x256xi1>, vector<8x256xf32>
    %c241_i32_172 = arith.constant 241 : i32
    %446 = tpu.dynamic_rotate %404 by %c241_i32_172 dim 1 : vector<8x256xf32>, i32 -> vector<8x256xf32>
    %c1_i32_173 = arith.constant 1 : i32
    %447 = vector.broadcast %c1_i32_173 : i32 to vector<1x256xi32>
    %448 = arith.cmpi sge, %2, %447 : vector<1x256xi32>
    %c15_i32_174 = arith.constant 15 : i32
    %449 = vector.broadcast %c15_i32_174 : i32 to vector<1x256xi32>
    %450 = arith.cmpi slt, %3, %449 : vector<1x256xi32>
    %451 = arith.andi %448, %450 : vector<1x256xi1>
    %cst_175 = arith.constant 0.000000e+00 : f32
    %452 = vector.shape_cast %451 : vector<1x256xi1> to vector<1x256xi1>
    %453 = vector.broadcast %452 : vector<1x256xi1> to vector<8x256xi1>
    %454 = vector.broadcast %cst_175 : f32 to vector<8x256xf32>
    %455 = arith.select %453, %446, %454 : vector<8x256xi1>, vector<8x256xf32>
    %c240_i32_176 = arith.constant 240 : i32
    %456 = tpu.dynamic_rotate %404 by %c240_i32_176 dim 1 : vector<8x256xf32>, i32 -> vector<8x256xf32>
    %c15_i32_177 = arith.constant 15 : i32
    %457 = vector.broadcast %c15_i32_177 : i32 to vector<1x256xi32>
    %458 = arith.cmpi slt, %3, %457 : vector<1x256xi32>
    %cst_178 = arith.constant 0.000000e+00 : f32
    %459 = vector.shape_cast %458 : vector<1x256xi1> to vector<1x256xi1>
    %460 = vector.broadcast %459 : vector<1x256xi1> to vector<8x256xi1>
    %461 = vector.broadcast %cst_178 : f32 to vector<8x256xf32>
    %462 = arith.select %460, %456, %461 : vector<8x256xi1>, vector<8x256xf32>
    %c239_i32_179 = arith.constant 239 : i32
    %463 = tpu.dynamic_rotate %404 by %c239_i32_179 dim 1 : vector<8x256xf32>, i32 -> vector<8x256xf32>
    %c15_i32_180 = arith.constant 15 : i32
    %464 = vector.broadcast %c15_i32_180 : i32 to vector<1x256xi32>
    %465 = arith.cmpi slt, %2, %464 : vector<1x256xi32>
    %c15_i32_181 = arith.constant 15 : i32
    %466 = vector.broadcast %c15_i32_181 : i32 to vector<1x256xi32>
    %467 = arith.cmpi slt, %3, %466 : vector<1x256xi32>
    %468 = arith.andi %465, %467 : vector<1x256xi1>
    %cst_182 = arith.constant 0.000000e+00 : f32
    %469 = vector.shape_cast %468 : vector<1x256xi1> to vector<1x256xi1>
    %470 = vector.broadcast %469 : vector<1x256xi1> to vector<8x256xi1>
    %471 = vector.broadcast %cst_182 : f32 to vector<8x256xf32>
    %472 = arith.select %470, %463, %471 : vector<8x256xi1>, vector<8x256xf32>
    %473 = tpu.concatenate %414, %421, %431, %438, %404, %445, %455, %462, %472 in 0 : vector<8x256xf32>, vector<8x256xf32>, vector<8x256xf32>, vector<8x256xf32>, vector<8x256xf32>, vector<8x256xf32>, vector<8x256xf32>, vector<8x256xf32>, vector<8x256xf32> -> vector<72x256xf32>
    %c5 = arith.constant 5 : index
    %c0_183 = arith.constant 0 : index
    %c0_184 = arith.constant 0 : index
    %474 = vector.load %arg4[%c5, %c0_183, %c0_184] : memref<8x8x72xf32, #tpu.memory_space<vmem>>, vector<1x8x72xf32>
    %475 = vector.shape_cast %474 : vector<1x8x72xf32> to vector<8x72xf32>
    %cst_185 = arith.constant dense<0.000000e+00> : vector<8x256xf32>
    %476 = tpu.matmul %475, %473, %cst_185 {dimension_numbers = #tpu.dot_dimension_numbers<[1], [0], [0], [1], [0, 0, 1, 1], [], []>} : vector<8x72xf32>, vector<72x256xf32>, vector<8x256xf32> -> vector<8x256xf32>
    %c5_186 = arith.constant 5 : index
    %c0_187 = arith.constant 0 : index
    %c0_188 = arith.constant 0 : index
    %477 = vector.load %arg5[%c5_186, %c0_187, %c0_188] : memref<8x8x1xf32, #tpu.memory_space<vmem>>, vector<1x8x1xf32>
    %478 = vector.shape_cast %477 : vector<1x8x1xf32> to vector<8x1xf32>
    %479 = vector.broadcast %478 : vector<8x1xf32> to vector<8x256xf32>
    %480 = arith.addf %476, %479 : vector<8x256xf32>
    %481 = arith.addf %480, %326 : vector<8x256xf32>
    %cst_189 = arith.constant 0.000000e+00 : f32
    %482 = vector.broadcast %cst_189 : f32 to vector<8x256xf32>
    %483 = arith.maximumf %481, %482 : vector<8x256xf32>
    %c17_i32_190 = arith.constant 17 : i32
    %484 = tpu.dynamic_rotate %483 by %c17_i32_190 dim 1 : vector<8x256xf32>, i32 -> vector<8x256xf32>
    %c1_i32_191 = arith.constant 1 : i32
    %485 = vector.broadcast %c1_i32_191 : i32 to vector<1x256xi32>
    %486 = arith.cmpi sge, %2, %485 : vector<1x256xi32>
    %c1_i32_192 = arith.constant 1 : i32
    %487 = vector.broadcast %c1_i32_192 : i32 to vector<1x256xi32>
    %488 = arith.cmpi sge, %3, %487 : vector<1x256xi32>
    %489 = arith.andi %486, %488 : vector<1x256xi1>
    %cst_193 = arith.constant 0.000000e+00 : f32
    %490 = vector.shape_cast %489 : vector<1x256xi1> to vector<1x256xi1>
    %491 = vector.broadcast %490 : vector<1x256xi1> to vector<8x256xi1>
    %492 = vector.broadcast %cst_193 : f32 to vector<8x256xf32>
    %493 = arith.select %491, %484, %492 : vector<8x256xi1>, vector<8x256xf32>
    %c16_i32_194 = arith.constant 16 : i32
    %494 = tpu.dynamic_rotate %483 by %c16_i32_194 dim 1 : vector<8x256xf32>, i32 -> vector<8x256xf32>
    %c1_i32_195 = arith.constant 1 : i32
    %495 = vector.broadcast %c1_i32_195 : i32 to vector<1x256xi32>
    %496 = arith.cmpi sge, %3, %495 : vector<1x256xi32>
    %cst_196 = arith.constant 0.000000e+00 : f32
    %497 = vector.shape_cast %496 : vector<1x256xi1> to vector<1x256xi1>
    %498 = vector.broadcast %497 : vector<1x256xi1> to vector<8x256xi1>
    %499 = vector.broadcast %cst_196 : f32 to vector<8x256xf32>
    %500 = arith.select %498, %494, %499 : vector<8x256xi1>, vector<8x256xf32>
    %c15_i32_197 = arith.constant 15 : i32
    %501 = tpu.dynamic_rotate %483 by %c15_i32_197 dim 1 : vector<8x256xf32>, i32 -> vector<8x256xf32>
    %c15_i32_198 = arith.constant 15 : i32
    %502 = vector.broadcast %c15_i32_198 : i32 to vector<1x256xi32>
    %503 = arith.cmpi slt, %2, %502 : vector<1x256xi32>
    %c1_i32_199 = arith.constant 1 : i32
    %504 = vector.broadcast %c1_i32_199 : i32 to vector<1x256xi32>
    %505 = arith.cmpi sge, %3, %504 : vector<1x256xi32>
    %506 = arith.andi %503, %505 : vector<1x256xi1>
    %cst_200 = arith.constant 0.000000e+00 : f32
    %507 = vector.shape_cast %506 : vector<1x256xi1> to vector<1x256xi1>
    %508 = vector.broadcast %507 : vector<1x256xi1> to vector<8x256xi1>
    %509 = vector.broadcast %cst_200 : f32 to vector<8x256xf32>
    %510 = arith.select %508, %501, %509 : vector<8x256xi1>, vector<8x256xf32>
    %c1_i32_201 = arith.constant 1 : i32
    %511 = tpu.dynamic_rotate %483 by %c1_i32_201 dim 1 : vector<8x256xf32>, i32 -> vector<8x256xf32>
    %c1_i32_202 = arith.constant 1 : i32
    %512 = vector.broadcast %c1_i32_202 : i32 to vector<1x256xi32>
    %513 = arith.cmpi sge, %2, %512 : vector<1x256xi32>
    %cst_203 = arith.constant 0.000000e+00 : f32
    %514 = vector.shape_cast %513 : vector<1x256xi1> to vector<1x256xi1>
    %515 = vector.broadcast %514 : vector<1x256xi1> to vector<8x256xi1>
    %516 = vector.broadcast %cst_203 : f32 to vector<8x256xf32>
    %517 = arith.select %515, %511, %516 : vector<8x256xi1>, vector<8x256xf32>
    %c255_i32_204 = arith.constant 255 : i32
    %518 = tpu.dynamic_rotate %483 by %c255_i32_204 dim 1 : vector<8x256xf32>, i32 -> vector<8x256xf32>
    %c15_i32_205 = arith.constant 15 : i32
    %519 = vector.broadcast %c15_i32_205 : i32 to vector<1x256xi32>
    %520 = arith.cmpi slt, %2, %519 : vector<1x256xi32>
    %cst_206 = arith.constant 0.000000e+00 : f32
    %521 = vector.shape_cast %520 : vector<1x256xi1> to vector<1x256xi1>
    %522 = vector.broadcast %521 : vector<1x256xi1> to vector<8x256xi1>
    %523 = vector.broadcast %cst_206 : f32 to vector<8x256xf32>
    %524 = arith.select %522, %518, %523 : vector<8x256xi1>, vector<8x256xf32>
    %c241_i32_207 = arith.constant 241 : i32
    %525 = tpu.dynamic_rotate %483 by %c241_i32_207 dim 1 : vector<8x256xf32>, i32 -> vector<8x256xf32>
    %c1_i32_208 = arith.constant 1 : i32
    %526 = vector.broadcast %c1_i32_208 : i32 to vector<1x256xi32>
    %527 = arith.cmpi sge, %2, %526 : vector<1x256xi32>
    %c15_i32_209 = arith.constant 15 : i32
    %528 = vector.broadcast %c15_i32_209 : i32 to vector<1x256xi32>
    %529 = arith.cmpi slt, %3, %528 : vector<1x256xi32>
    %530 = arith.andi %527, %529 : vector<1x256xi1>
    %cst_210 = arith.constant 0.000000e+00 : f32
    %531 = vector.shape_cast %530 : vector<1x256xi1> to vector<1x256xi1>
    %532 = vector.broadcast %531 : vector<1x256xi1> to vector<8x256xi1>
    %533 = vector.broadcast %cst_210 : f32 to vector<8x256xf32>
    %534 = arith.select %532, %525, %533 : vector<8x256xi1>, vector<8x256xf32>
    %c240_i32_211 = arith.constant 240 : i32
    %535 = tpu.dynamic_rotate %483 by %c240_i32_211 dim 1 : vector<8x256xf32>, i32 -> vector<8x256xf32>
    %c15_i32_212 = arith.constant 15 : i32
    %536 = vector.broadcast %c15_i32_212 : i32 to vector<1x256xi32>
    %537 = arith.cmpi slt, %3, %536 : vector<1x256xi32>
    %cst_213 = arith.constant 0.000000e+00 : f32
    %538 = vector.shape_cast %537 : vector<1x256xi1> to vector<1x256xi1>
    %539 = vector.broadcast %538 : vector<1x256xi1> to vector<8x256xi1>
    %540 = vector.broadcast %cst_213 : f32 to vector<8x256xf32>
    %541 = arith.select %539, %535, %540 : vector<8x256xi1>, vector<8x256xf32>
    %c239_i32_214 = arith.constant 239 : i32
    %542 = tpu.dynamic_rotate %483 by %c239_i32_214 dim 1 : vector<8x256xf32>, i32 -> vector<8x256xf32>
    %c15_i32_215 = arith.constant 15 : i32
    %543 = vector.broadcast %c15_i32_215 : i32 to vector<1x256xi32>
    %544 = arith.cmpi slt, %2, %543 : vector<1x256xi32>
    %c15_i32_216 = arith.constant 15 : i32
    %545 = vector.broadcast %c15_i32_216 : i32 to vector<1x256xi32>
    %546 = arith.cmpi slt, %3, %545 : vector<1x256xi32>
    %547 = arith.andi %544, %546 : vector<1x256xi1>
    %cst_217 = arith.constant 0.000000e+00 : f32
    %548 = vector.shape_cast %547 : vector<1x256xi1> to vector<1x256xi1>
    %549 = vector.broadcast %548 : vector<1x256xi1> to vector<8x256xi1>
    %550 = vector.broadcast %cst_217 : f32 to vector<8x256xf32>
    %551 = arith.select %549, %542, %550 : vector<8x256xi1>, vector<8x256xf32>
    %552 = tpu.concatenate %493, %500, %510, %517, %483, %524, %534, %541, %551 in 0 : vector<8x256xf32>, vector<8x256xf32>, vector<8x256xf32>, vector<8x256xf32>, vector<8x256xf32>, vector<8x256xf32>, vector<8x256xf32>, vector<8x256xf32>, vector<8x256xf32> -> vector<72x256xf32>
    %c6 = arith.constant 6 : index
    %c0_218 = arith.constant 0 : index
    %c0_219 = arith.constant 0 : index
    %553 = vector.load %arg4[%c6, %c0_218, %c0_219] : memref<8x8x72xf32, #tpu.memory_space<vmem>>, vector<1x8x72xf32>
    %554 = vector.shape_cast %553 : vector<1x8x72xf32> to vector<8x72xf32>
    %cst_220 = arith.constant dense<0.000000e+00> : vector<8x256xf32>
    %555 = tpu.matmul %554, %552, %cst_220 {dimension_numbers = #tpu.dot_dimension_numbers<[1], [0], [0], [1], [0, 0, 1, 1], [], []>} : vector<8x72xf32>, vector<72x256xf32>, vector<8x256xf32> -> vector<8x256xf32>
    %c6_221 = arith.constant 6 : index
    %c0_222 = arith.constant 0 : index
    %c0_223 = arith.constant 0 : index
    %556 = vector.load %arg5[%c6_221, %c0_222, %c0_223] : memref<8x8x1xf32, #tpu.memory_space<vmem>>, vector<1x8x1xf32>
    %557 = vector.shape_cast %556 : vector<1x8x1xf32> to vector<8x1xf32>
    %558 = vector.broadcast %557 : vector<8x1xf32> to vector<8x256xf32>
    %559 = arith.addf %555, %558 : vector<8x256xf32>
    %cst_224 = arith.constant 0.000000e+00 : f32
    %560 = vector.broadcast %cst_224 : f32 to vector<8x256xf32>
    %561 = arith.maximumf %559, %560 : vector<8x256xf32>
    %c17_i32_225 = arith.constant 17 : i32
    %562 = tpu.dynamic_rotate %561 by %c17_i32_225 dim 1 : vector<8x256xf32>, i32 -> vector<8x256xf32>
    %c1_i32_226 = arith.constant 1 : i32
    %563 = vector.broadcast %c1_i32_226 : i32 to vector<1x256xi32>
    %564 = arith.cmpi sge, %2, %563 : vector<1x256xi32>
    %c1_i32_227 = arith.constant 1 : i32
    %565 = vector.broadcast %c1_i32_227 : i32 to vector<1x256xi32>
    %566 = arith.cmpi sge, %3, %565 : vector<1x256xi32>
    %567 = arith.andi %564, %566 : vector<1x256xi1>
    %cst_228 = arith.constant 0.000000e+00 : f32
    %568 = vector.shape_cast %567 : vector<1x256xi1> to vector<1x256xi1>
    %569 = vector.broadcast %568 : vector<1x256xi1> to vector<8x256xi1>
    %570 = vector.broadcast %cst_228 : f32 to vector<8x256xf32>
    %571 = arith.select %569, %562, %570 : vector<8x256xi1>, vector<8x256xf32>
    %c16_i32_229 = arith.constant 16 : i32
    %572 = tpu.dynamic_rotate %561 by %c16_i32_229 dim 1 : vector<8x256xf32>, i32 -> vector<8x256xf32>
    %c1_i32_230 = arith.constant 1 : i32
    %573 = vector.broadcast %c1_i32_230 : i32 to vector<1x256xi32>
    %574 = arith.cmpi sge, %3, %573 : vector<1x256xi32>
    %cst_231 = arith.constant 0.000000e+00 : f32
    %575 = vector.shape_cast %574 : vector<1x256xi1> to vector<1x256xi1>
    %576 = vector.broadcast %575 : vector<1x256xi1> to vector<8x256xi1>
    %577 = vector.broadcast %cst_231 : f32 to vector<8x256xf32>
    %578 = arith.select %576, %572, %577 : vector<8x256xi1>, vector<8x256xf32>
    %c15_i32_232 = arith.constant 15 : i32
    %579 = tpu.dynamic_rotate %561 by %c15_i32_232 dim 1 : vector<8x256xf32>, i32 -> vector<8x256xf32>
    %c15_i32_233 = arith.constant 15 : i32
    %580 = vector.broadcast %c15_i32_233 : i32 to vector<1x256xi32>
    %581 = arith.cmpi slt, %2, %580 : vector<1x256xi32>
    %c1_i32_234 = arith.constant 1 : i32
    %582 = vector.broadcast %c1_i32_234 : i32 to vector<1x256xi32>
    %583 = arith.cmpi sge, %3, %582 : vector<1x256xi32>
    %584 = arith.andi %581, %583 : vector<1x256xi1>
    %cst_235 = arith.constant 0.000000e+00 : f32
    %585 = vector.shape_cast %584 : vector<1x256xi1> to vector<1x256xi1>
    %586 = vector.broadcast %585 : vector<1x256xi1> to vector<8x256xi1>
    %587 = vector.broadcast %cst_235 : f32 to vector<8x256xf32>
    %588 = arith.select %586, %579, %587 : vector<8x256xi1>, vector<8x256xf32>
    %c1_i32_236 = arith.constant 1 : i32
    %589 = tpu.dynamic_rotate %561 by %c1_i32_236 dim 1 : vector<8x256xf32>, i32 -> vector<8x256xf32>
    %c1_i32_237 = arith.constant 1 : i32
    %590 = vector.broadcast %c1_i32_237 : i32 to vector<1x256xi32>
    %591 = arith.cmpi sge, %2, %590 : vector<1x256xi32>
    %cst_238 = arith.constant 0.000000e+00 : f32
    %592 = vector.shape_cast %591 : vector<1x256xi1> to vector<1x256xi1>
    %593 = vector.broadcast %592 : vector<1x256xi1> to vector<8x256xi1>
    %594 = vector.broadcast %cst_238 : f32 to vector<8x256xf32>
    %595 = arith.select %593, %589, %594 : vector<8x256xi1>, vector<8x256xf32>
    %c255_i32_239 = arith.constant 255 : i32
    %596 = tpu.dynamic_rotate %561 by %c255_i32_239 dim 1 : vector<8x256xf32>, i32 -> vector<8x256xf32>
    %c15_i32_240 = arith.constant 15 : i32
    %597 = vector.broadcast %c15_i32_240 : i32 to vector<1x256xi32>
    %598 = arith.cmpi slt, %2, %597 : vector<1x256xi32>
    %cst_241 = arith.constant 0.000000e+00 : f32
    %599 = vector.shape_cast %598 : vector<1x256xi1> to vector<1x256xi1>
    %600 = vector.broadcast %599 : vector<1x256xi1> to vector<8x256xi1>
    %601 = vector.broadcast %cst_241 : f32 to vector<8x256xf32>
    %602 = arith.select %600, %596, %601 : vector<8x256xi1>, vector<8x256xf32>
    %c241_i32_242 = arith.constant 241 : i32
    %603 = tpu.dynamic_rotate %561 by %c241_i32_242 dim 1 : vector<8x256xf32>, i32 -> vector<8x256xf32>
    %c1_i32_243 = arith.constant 1 : i32
    %604 = vector.broadcast %c1_i32_243 : i32 to vector<1x256xi32>
    %605 = arith.cmpi sge, %2, %604 : vector<1x256xi32>
    %c15_i32_244 = arith.constant 15 : i32
    %606 = vector.broadcast %c15_i32_244 : i32 to vector<1x256xi32>
    %607 = arith.cmpi slt, %3, %606 : vector<1x256xi32>
    %608 = arith.andi %605, %607 : vector<1x256xi1>
    %cst_245 = arith.constant 0.000000e+00 : f32
    %609 = vector.shape_cast %608 : vector<1x256xi1> to vector<1x256xi1>
    %610 = vector.broadcast %609 : vector<1x256xi1> to vector<8x256xi1>
    %611 = vector.broadcast %cst_245 : f32 to vector<8x256xf32>
    %612 = arith.select %610, %603, %611 : vector<8x256xi1>, vector<8x256xf32>
    %c240_i32_246 = arith.constant 240 : i32
    %613 = tpu.dynamic_rotate %561 by %c240_i32_246 dim 1 : vector<8x256xf32>, i32 -> vector<8x256xf32>
    %c15_i32_247 = arith.constant 15 : i32
    %614 = vector.broadcast %c15_i32_247 : i32 to vector<1x256xi32>
    %615 = arith.cmpi slt, %3, %614 : vector<1x256xi32>
    %cst_248 = arith.constant 0.000000e+00 : f32
    %616 = vector.shape_cast %615 : vector<1x256xi1> to vector<1x256xi1>
    %617 = vector.broadcast %616 : vector<1x256xi1> to vector<8x256xi1>
    %618 = vector.broadcast %cst_248 : f32 to vector<8x256xf32>
    %619 = arith.select %617, %613, %618 : vector<8x256xi1>, vector<8x256xf32>
    %c239_i32_249 = arith.constant 239 : i32
    %620 = tpu.dynamic_rotate %561 by %c239_i32_249 dim 1 : vector<8x256xf32>, i32 -> vector<8x256xf32>
    %c15_i32_250 = arith.constant 15 : i32
    %621 = vector.broadcast %c15_i32_250 : i32 to vector<1x256xi32>
    %622 = arith.cmpi slt, %2, %621 : vector<1x256xi32>
    %c15_i32_251 = arith.constant 15 : i32
    %623 = vector.broadcast %c15_i32_251 : i32 to vector<1x256xi32>
    %624 = arith.cmpi slt, %3, %623 : vector<1x256xi32>
    %625 = arith.andi %622, %624 : vector<1x256xi1>
    %cst_252 = arith.constant 0.000000e+00 : f32
    %626 = vector.shape_cast %625 : vector<1x256xi1> to vector<1x256xi1>
    %627 = vector.broadcast %626 : vector<1x256xi1> to vector<8x256xi1>
    %628 = vector.broadcast %cst_252 : f32 to vector<8x256xf32>
    %629 = arith.select %627, %620, %628 : vector<8x256xi1>, vector<8x256xf32>
    %630 = tpu.concatenate %571, %578, %588, %595, %561, %602, %612, %619, %629 in 0 : vector<8x256xf32>, vector<8x256xf32>, vector<8x256xf32>, vector<8x256xf32>, vector<8x256xf32>, vector<8x256xf32>, vector<8x256xf32>, vector<8x256xf32>, vector<8x256xf32> -> vector<72x256xf32>
    %c7 = arith.constant 7 : index
    %c0_253 = arith.constant 0 : index
    %c0_254 = arith.constant 0 : index
    %631 = vector.load %arg4[%c7, %c0_253, %c0_254] : memref<8x8x72xf32, #tpu.memory_space<vmem>>, vector<1x8x72xf32>
    %632 = vector.shape_cast %631 : vector<1x8x72xf32> to vector<8x72xf32>
    %cst_255 = arith.constant dense<0.000000e+00> : vector<8x256xf32>
    %633 = tpu.matmul %632, %630, %cst_255 {dimension_numbers = #tpu.dot_dimension_numbers<[1], [0], [0], [1], [0, 0, 1, 1], [], []>} : vector<8x72xf32>, vector<72x256xf32>, vector<8x256xf32> -> vector<8x256xf32>
    %c7_256 = arith.constant 7 : index
    %c0_257 = arith.constant 0 : index
    %c0_258 = arith.constant 0 : index
    %634 = vector.load %arg5[%c7_256, %c0_257, %c0_258] : memref<8x8x1xf32, #tpu.memory_space<vmem>>, vector<1x8x1xf32>
    %635 = vector.shape_cast %634 : vector<1x8x1xf32> to vector<8x1xf32>
    %636 = vector.broadcast %635 : vector<8x1xf32> to vector<8x256xf32>
    %637 = arith.addf %633, %636 : vector<8x256xf32>
    %cst_259 = arith.constant 0.000000e+00 : f32
    %638 = vector.broadcast %cst_259 : f32 to vector<8x256xf32>
    %639 = arith.maximumf %637, %638 : vector<8x256xf32>
    %c0_260 = arith.constant 0 : index
    %c0_261 = arith.constant 0 : index
    %640 = vector.load %arg9[%c0_260, %c0_261] : memref<8x8xf32, #tpu.memory_space<vmem>>, vector<8x8xf32>
    %cst_262 = arith.constant dense<0.000000e+00> : vector<8x256xf32>
    %641 = tpu.matmul %640, %639, %cst_262 {dimension_numbers = #tpu.dot_dimension_numbers<[1], [0], [0], [1], [0, 0, 1, 1], [], []>} : vector<8x8xf32>, vector<8x256xf32>, vector<8x256xf32> -> vector<8x256xf32>
    %c0_263 = arith.constant 0 : index
    %c0_264 = arith.constant 0 : index
    %642 = vector.load %arg10[%c0_263, %c0_264] : memref<8x1xf32, #tpu.memory_space<vmem>>, vector<8x1xf32>
    %643 = vector.broadcast %642 : vector<8x1xf32> to vector<8x256xf32>
    %644 = arith.addf %641, %643 : vector<8x256xf32>
    %645 = arith.addf %644, %483 : vector<8x256xf32>
    %cst_265 = arith.constant 0.000000e+00 : f32
    %646 = vector.broadcast %cst_265 : f32 to vector<8x256xf32>
    %647 = arith.maximumf %645, %646 : vector<8x256xf32>
    %cst_266 = arith.constant dense<0.000000e+00> : vector<8xf32>
    %648 = vector.multi_reduction <add>, %647, %cst_266 [1] : vector<8x256xf32> to vector<8xf32>
    %649 = vector.shape_cast %648 : vector<8xf32> to vector<8x1xf32>
    %cst_267 = arith.constant 2.560000e+02 : f32
    %650 = vector.broadcast %cst_267 : f32 to vector<8x1xf32>
    %651 = arith.divf %649, %650 : vector<8x1xf32>
    %c0_268 = arith.constant 0 : index
    %c0_269 = arith.constant 0 : index
    %652 = vector.load %arg11[%c0_268, %c0_269] : memref<2x8xf32, #tpu.memory_space<vmem>>, vector<2x8xf32>
    %cst_270 = arith.constant dense<0.000000e+00> : vector<2x1xf32>
    %653 = tpu.matmul %652, %651, %cst_270 {dimension_numbers = #tpu.dot_dimension_numbers<[1], [0], [0], [1], [0, 0, 1, 1], [], []>} : vector<2x8xf32>, vector<8x1xf32>, vector<2x1xf32> -> vector<2x1xf32>
    %c0_271 = arith.constant 0 : index
    %c0_272 = arith.constant 0 : index
    %654 = vector.load %arg12[%c0_271, %c0_272] : memref<2x1xf32, #tpu.memory_space<vmem>>, vector<2x1xf32>
    %655 = arith.addf %653, %654 : vector<2x1xf32>
    %cst_273 = arith.constant 0.000000e+00 : f32
    %656 = vector.broadcast %cst_273 : f32 to vector<2x1xf32>
    %657 = arith.maximumf %655, %656 : vector<2x1xf32>
    %c0_274 = arith.constant 0 : index
    %c0_275 = arith.constant 0 : index
    %658 = vector.load %arg13[%c0_274, %c0_275] : memref<8x2xf32, #tpu.memory_space<vmem>>, vector<8x2xf32>
    %cst_276 = arith.constant dense<0.000000e+00> : vector<8x1xf32>
    %659 = tpu.matmul %658, %657, %cst_276 {dimension_numbers = #tpu.dot_dimension_numbers<[1], [0], [0], [1], [0, 0, 1, 1], [], []>} : vector<8x2xf32>, vector<2x1xf32>, vector<8x1xf32> -> vector<8x1xf32>
    %c0_277 = arith.constant 0 : index
    %c0_278 = arith.constant 0 : index
    %660 = vector.load %arg14[%c0_277, %c0_278] : memref<8x1xf32, #tpu.memory_space<vmem>>, vector<8x1xf32>
    %661 = arith.addf %659, %660 : vector<8x1xf32>
    %662 = arith.negf %661 : vector<8x1xf32>
    %663 = math.exp %662 : vector<8x1xf32>
    %cst_279 = arith.constant 1.000000e+00 : f32
    %664 = vector.broadcast %cst_279 : f32 to vector<8x1xf32>
    %665 = arith.addf %664, %663 : vector<8x1xf32>
    %666 = arith.divf %664, %665 : vector<8x1xf32>
    %667 = vector.broadcast %666 : vector<8x1xf32> to vector<8x256xf32>
    %668 = arith.mulf %647, %667 : vector<8x256xf32>
    %c0_280 = arith.constant 0 : index
    %c0_281 = arith.constant 0 : index
    %c0_282 = arith.constant 0 : index
    %669 = vector.load %arg15[%c0_280, %c0_281, %c0_282] : memref<1x8x256xf32, #tpu.memory_space<vmem>>, vector<1x8x256xf32>
    %670 = vector.shape_cast %669 : vector<1x8x256xf32> to vector<8x256xf32>
    %671 = vector.shape_cast %668 : vector<8x256xf32> to vector<1x8x256xf32>
    tpu.vector_store %arg15[%c0_280, %c0_281, %c0_282], %671 {strides = array<i32>} : memref<1x8x256xf32, #tpu.memory_space<vmem>>, vector<1x8x256xf32>,
    return
  }
  func.func @transform_0(%arg0: i32) -> (i32, i32, i32) {
    %c0_i32 = arith.constant 0 : i32
    %c0_i32_0 = arith.constant 0 : i32
    %c0_i32_1 = arith.constant 0 : i32
    return %arg0, %c0_i32, %c0_i32_0 : i32, i32, i32
  }
  func.func @transform_1(%arg0: i32) -> (i32, i32) {
    %c0_i32 = arith.constant 0 : i32
    %c0_i32_0 = arith.constant 0 : i32
    %c0_i32_1 = arith.constant 0 : i32
    return %c0_i32, %c0_i32_0 : i32, i32
  }
  func.func @transform_2(%arg0: i32) -> (i32, i32) {
    %c0_i32 = arith.constant 0 : i32
    %c0_i32_0 = arith.constant 0 : i32
    %c0_i32_1 = arith.constant 0 : i32
    return %c0_i32, %c0_i32_0 : i32, i32
  }
  func.func @transform_3(%arg0: i32) -> (i32, i32, i32) {
    %c0_i32 = arith.constant 0 : i32
    %c0_i32_0 = arith.constant 0 : i32
    %c0_i32_1 = arith.constant 0 : i32
    %c0_i32_2 = arith.constant 0 : i32
    return %c0_i32, %c0_i32_0, %c0_i32_1 : i32, i32, i32
  }
  func.func @transform_4(%arg0: i32) -> (i32, i32, i32) {
    %c0_i32 = arith.constant 0 : i32
    %c0_i32_0 = arith.constant 0 : i32
    %c0_i32_1 = arith.constant 0 : i32
    %c0_i32_2 = arith.constant 0 : i32
    return %c0_i32, %c0_i32_0, %c0_i32_1 : i32, i32, i32
  }
  func.func @transform_5(%arg0: i32) -> (i32, i32) {
    %c0_i32 = arith.constant 0 : i32
    %c0_i32_0 = arith.constant 0 : i32
    %c0_i32_1 = arith.constant 0 : i32
    return %c0_i32, %c0_i32_0 : i32, i32
  }
  func.func @transform_6(%arg0: i32) -> (i32, i32) {
    %c0_i32 = arith.constant 0 : i32
    %c0_i32_0 = arith.constant 0 : i32
    %c0_i32_1 = arith.constant 0 : i32
    return %c0_i32, %c0_i32_0 : i32, i32
  }
  func.func @transform_7(%arg0: i32) -> (i32, i32) {
    %c0_i32 = arith.constant 0 : i32
    %c0_i32_0 = arith.constant 0 : i32
    %c0_i32_1 = arith.constant 0 : i32
    return %c0_i32, %c0_i32_0 : i32, i32
  }
  func.func @transform_8(%arg0: i32) -> (i32, i32) {
    %c0_i32 = arith.constant 0 : i32
    %c0_i32_0 = arith.constant 0 : i32
    %c0_i32_1 = arith.constant 0 : i32
    return %c0_i32, %c0_i32_0 : i32, i32
  }
  func.func @transform_9(%arg0: i32) -> (i32, i32) {
    %c0_i32 = arith.constant 0 : i32
    %c0_i32_0 = arith.constant 0 : i32
    %c0_i32_1 = arith.constant 0 : i32
    return %c0_i32, %c0_i32_0 : i32, i32
  }
  func.func @transform_10(%arg0: i32) -> (i32, i32) {
    %c0_i32 = arith.constant 0 : i32
    %c0_i32_0 = arith.constant 0 : i32
    %c0_i32_1 = arith.constant 0 : i32
    return %c0_i32, %c0_i32_0 : i32, i32
  }
  func.func @transform_11(%arg0: i32) -> (i32, i32) {
    %c0_i32 = arith.constant 0 : i32
    %c0_i32_0 = arith.constant 0 : i32
    %c0_i32_1 = arith.constant 0 : i32
    return %c0_i32, %c0_i32_0 : i32, i32
  }
  func.func @transform_12(%arg0: i32) -> (i32, i32) {
    %c0_i32 = arith.constant 0 : i32
    %c0_i32_0 = arith.constant 0 : i32
    %c0_i32_1 = arith.constant 0 : i32
    return %c0_i32, %c0_i32_0 : i32, i32
  }
  func.func @transform_13(%arg0: i32) -> (i32, i32) {
    %c0_i32 = arith.constant 0 : i32
    %c0_i32_0 = arith.constant 0 : i32
    %c0_i32_1 = arith.constant 0 : i32
    return %c0_i32, %c0_i32_0 : i32, i32
  }
  func.func @transform_14(%arg0: i32) -> (i32, i32, i32) {
    %c0_i32 = arith.constant 0 : i32
    %c0_i32_0 = arith.constant 0 : i32
    %c0_i32_1 = arith.constant 0 : i32
    return %arg0, %c0_i32, %c0_i32_0 : i32, i32, i32
  }
}

</mosaic_0001>

<llo_original>
// kernel: block_forward.1
$region0: #{block_forward.1}
  #allocation0 [shape = 'u32[]', space=smem, size = 0x4, offset = 0x4, fixed_abs, tag = 'smem constant byte address 0x4 - core index']
  #allocation1 [shape = 'u32[144,128]{1,0:T(1,128)}', space=vmem, size = 0x12000, scoped, tag = 'internal scratch']
  %s0 = inlined_call_operand.vmem [shape: f32[2,8,256], index: 0, kind: input, shape index: {}]
  %s1 = inlined_call_operand.vmem [shape: s32[1,256], index: 1, kind: input, shape index: {}]
  %s2 = inlined_call_operand.vmem [shape: s32[1,256], index: 2, kind: input, shape index: {}]
  %s3 = inlined_call_operand.vmem [shape: f32[8,8,72], index: 3, kind: input, shape index: {}]
  %s4 = inlined_call_operand.vmem [shape: f32[8,8,1], index: 4, kind: input, shape index: {}]
  %s5 = inlined_call_operand.vmem [shape: f32[8,8], index: 5, kind: input, shape index: {}]
  %s6 = inlined_call_operand.vmem [shape: f32[8,8], index: 6, kind: input, shape index: {}]
  %s7 = inlined_call_operand.vmem [shape: f32[8,1], index: 7, kind: input, shape index: {}]
  %s8 = inlined_call_operand.vmem [shape: f32[8,8], index: 8, kind: input, shape index: {}]
  %s9 = inlined_call_operand.vmem [shape: f32[8,1], index: 9, kind: input, shape index: {}]
  %s10 = inlined_call_operand.vmem [shape: f32[2,8], index: 10, kind: input, shape index: {}]
  %s11 = inlined_call_operand.vmem [shape: f32[2,1], index: 11, kind: input, shape index: {}]
  %s12 = inlined_call_operand.vmem [shape: f32[8,2], index: 12, kind: input, shape index: {}]
  %s13 = inlined_call_operand.vmem [shape: f32[8,1], index: 13, kind: input, shape index: {}]
  %s14 = inlined_call_operand.vmem [shape: f32[2,8,256], index: 14, kind: output, shape index: {}]
  %s15 = sld [smem:[#allocation0]]
  $region89: #{block_forward.1} parent=0
    _
  %s17 = ssub.s32 1, %s15
  %s18 = scalar_select 0, %s17, %s15
  loop: start=0, step=1, limit=4
  $region2: #{block_forward.1} parent=0 // loop_pre_header
    _
  $region3: #{block_forward.1} parent=0 // loop_header
    %s20 = sphi 0, %s24
    %p21 = scmp.ge.s32.totalorder %s20, 4
    %s30 = sphi 0, %s32
    %s33 = sphi 0, %s30
    %s34 = sphi 0, %s33
    %s50 = sphi 0, %s34
    %s54 = sphi 0, %s54
    %s56 = sphi 0, %s54
    %s57 = sphi 0, %s56
    %s71 = sphi 0, %s57
    %s75 = sphi 0, %s75
    %s77 = sphi 0, %s75
    %s78 = sphi 0, %s77
    %s92 = sphi 0, %s78
    %s96 = sphi 0, %s96
    %s98 = sphi 0, %s96
    %s99 = sphi 0, %s98
    %s113 = sphi 0, %s99
    %s117 = sphi 0, %s117
    %s119 = sphi 0, %s117
    %s120 = sphi 0, %s119
    %s134 = sphi 0, %s120
    %s138 = sphi 0, %s138
    %s140 = sphi 0, %s138
    %s141 = sphi 0, %s140
    %s155 = sphi 0, %s141
    %s159 = sphi 0, %s159
    %s161 = sphi 0, %s159
    %s162 = sphi 0, %s161
    %s176 = sphi 0, %s162
    %s180 = sphi 0, %s180
    %s182 = sphi 0, %s180
    %s183 = sphi 0, %s182
    %s197 = sphi 0, %s183
    %s201 = sphi 0, %s201
    %s203 = sphi 0, %s201
    %s204 = sphi 0, %s203
    %s218 = sphi 0, %s204
    %s222 = sphi 0, %s222
    %s224 = sphi 0, %s222
    %s225 = sphi 0, %s224
    %s239 = sphi 0, %s225
    %s243 = sphi 0, %s243
    %s245 = sphi 0, %s243
    %s246 = sphi 0, %s245
    %s260 = sphi 0, %s246
    %s264 = sphi 0, %s264
    %s266 = sphi 0, %s264
    %s267 = sphi 0, %s266
    %s281 = sphi 0, %s267
    %s285 = sphi 0, %s285
    %s287 = sphi 0, %s285
    %s288 = sphi 0, %s287
    %s302 = sphi 0, %s288
    %s306 = sphi 0, %s306
    %s308 = sphi 0, %s306
    %s309 = sphi 0, %s308
    %s323 = sphi 0, %s309
    %s329 = sphi 0, %s331
    %s332 = sphi 0, %s329
    %s333 = sphi 0, %s332
    %s349 = sphi 0, %s333
  $region4: #{block_forward.1} parent=0 // loop_header_branch
    %23 = sbr.rel (%p21) target = $region8
  $region5: #{block_forward.1} parent=0 // loop_body
    %s25 = ssub.s32 %s20, 1
    %s26 = ssub.s32 %s20, 2
    %s27 = sadd.s32 %s20, 1
    %s28 = ssub.s32 %s20, %s27
    %p29 = scmp.eq.s32.totalorder %s28, 0
    %s31 = sadd.s32 %s30, 1
    %s32 = scalar_select %p29, %s30, %s31
    %p35 = pneg %p29
    %p36 = scmp.eq.s32.totalorder %s20, 1
    %p37 = por %p35, %p36
    %p38 = scmp.ne.s32.totalorder %s30, %s33
    %p39 = scmp.eq.s32.totalorder %s20, 0
    %p40 = por %p38, %p39
    %p41 = scmp.ne.s32.totalorder %s30, %s33
    %p42 = scmp.eq.s32.totalorder %s25, 1
    %p43 = por %p41, %p42
    %p44 = scmp.ne.s32.totalorder %s33, %s34
    %p45 = scmp.eq.s32.totalorder %s25, 0
    %p46 = por %p44, %p45
    %p47 = scmp.ne.s32.totalorder %s33, %s34
    %p48 = scmp.eq.s32.totalorder %s26, 1
    %p49 = por %p47, %p48
    %p51 = scmp.ne.s32.totalorder %s34, %s50
    %p52 = scmp.eq.s32.totalorder %s26, 0
    %p53 = por %p51, %p52
    %s55 = sadd.s32 %s54, 1
    %p58 = scmp.eq.s32.totalorder %s20, 1
    %p59 = scmp.ne.s32.totalorder %s54, %s56
    %p60 = scmp.eq.s32.totalorder %s20, 0
    %p61 = por %p59, %p60
    %p62 = scmp.ne.s32.totalorder %s54, %s56
    %p63 = scmp.eq.s32.totalorder %s25, 1
    %p64 = por %p62, %p63
    %p65 = scmp.ne.s32.totalorder %s56, %s57
    %p66 = scmp.eq.s32.totalorder %s25, 0
    %p67 = por %p65, %p66
    %p68 = scmp.ne.s32.totalorder %s56, %s57
    %p69 = scmp.eq.s32.totalorder %s26, 1
    %p70 = por %p68, %p69
    %p72 = scmp.ne.s32.totalorder %s57, %s71
    %p73 = scmp.eq.s32.totalorder %s26, 0
    %p74 = por %p72, %p73
    %s76 = sadd.s32 %s75, 1
    %p79 = scmp.eq.s32.totalorder %s20, 1
    %p80 = scmp.ne.s32.totalorder %s75, %s77
    %p81 = scmp.eq.s32.totalorder %s20, 0
    %p82 = por %p80, %p81
    %p83 = scmp.ne.s32.totalorder %s75, %s77
    %p84 = scmp.eq.s32.totalorder %s25, 1
    %p85 = por %p83, %p84
    %p86 = scmp.ne.s32.totalorder %s77, %s78
    %p87 = scmp.eq.s32.totalorder %s25, 0
    %p88 = por %p86, %p87
    %p89 = scmp.ne.s32.totalorder %s77, %s78
    %p90 = scmp.eq.s32.totalorder %s26, 1
    %p91 = por %p89, %p90
    %p93 = scmp.ne.s32.totalorder %s78, %s92
    %p94 = scmp.eq.s32.totalorder %s26, 0
    %p95 = por %p93, %p94
    %s97 = sadd.s32 %s96, 1
    %p100 = scmp.eq.s32.totalorder %s20, 1
    %p101 = scmp.ne.s32.totalorder %s96, %s98
    %p102 = scmp.eq.s32.totalorder %s20, 0
    %p103 = por %p101, %p102
    %p104 = scmp.ne.s32.totalorder %s96, %s98
    %p105 = scmp.eq.s32.totalorder %s25, 1
    %p106 = por %p104, %p105
    %p107 = scmp.ne.s32.totalorder %s98, %s99
    %p108 = scmp.eq.s32.totalorder %s25, 0
    %p109 = por %p107, %p108
    %p110 = scmp.ne.s32.totalorder %s98, %s99
    %p111 = scmp.eq.s32.totalorder %s26, 1
    %p112 = por %p110, %p111
    %p114 = scmp.ne.s32.totalorder %s99, %s113
    %p115 = scmp.eq.s32.totalorder %s26, 0
    %p116 = por %p114, %p115
    %s118 = sadd.s32 %s117, 1
    %p121 = scmp.eq.s32.totalorder %s20, 1
    %p122 = scmp.ne.s32.totalorder %s117, %s119
    %p123 = scmp.eq.s32.totalorder %s20, 0
    %p124 = por %p122, %p123
    %p125 = scmp.ne.s32.totalorder %s117, %s119
    %p126 = scmp.eq.s32.totalorder %s25, 1
    %p127 = por %p125, %p126
    %p128 = scmp.ne.s32.totalorder %s119, %s120
    %p129 = scmp.eq.s32.totalorder %s25, 0
    %p130 = por %p128, %p129
    %p131 = scmp.ne.s32.totalorder %s119, %s120
    %p132 = scmp.eq.s32.totalorder %s26, 1
    %p133 = por %p131, %p132
    %p135 = scmp.ne.s32.totalorder %s120, %s134
    %p136 = scmp.eq.s32.totalorder %s26, 0
    %p137 = por %p135, %p136
    %s139 = sadd.s32 %s138, 1
    %p142 = scmp.eq.s32.totalorder %s20, 1
    %p143 = scmp.ne.s32.totalorder %s138, %s140
    %p144 = scmp.eq.s32.totalorder %s20, 0
    %p145 = por %p143, %p144
    %p146 = scmp.ne.s32.totalorder %s138, %s140
    %p147 = scmp.eq.s32.totalorder %s25, 1
    %p148 = por %p146, %p147
    %p149 = scmp.ne.s32.totalorder %s140, %s141
    %p150 = scmp.eq.s32.totalorder %s25, 0
    %p151 = por %p149, %p150
    %p152 = scmp.ne.s32.totalorder %s140, %s141
    %p153 = scmp.eq.s32.totalorder %s26, 1
    %p154 = por %p152, %p153
    %p156 = scmp.ne.s32.totalorder %s141, %s155
    %p157 = scmp.eq.s32.totalorder %s26, 0
    %p158 = por %p156, %p157
    %s160 = sadd.s32 %s159, 1
    %p163 = scmp.eq.s32.totalorder %s20, 1
    %p164 = scmp.ne.s32.totalorder %s159, %s161
    %p165 = scmp.eq.s32.totalorder %s20, 0
    %p166 = por %p164, %p165
    %p167 = scmp.ne.s32.totalorder %s159, %s161
    %p168 = scmp.eq.s32.totalorder %s25, 1
    %p169 = por %p167, %p168
    %p170 = scmp.ne.s32.totalorder %s161, %s162
    %p171 = scmp.eq.s32.totalorder %s25, 0
    %p172 = por %p170, %p171
    %p173 = scmp.ne.s32.totalorder %s161, %s162
    %p174 = scmp.eq.s32.totalorder %s26, 1
    %p175 = por %p173, %p174
    %p177 = scmp.ne.s32.totalorder %s162, %s176
    %p178 = scmp.eq.s32.totalorder %s26, 0
    %p179 = por %p177, %p178
    %s181 = sadd.s32 %s180, 1
    %p184 = scmp.eq.s32.totalorder %s20, 1
    %p185 = scmp.ne.s32.totalorder %s180, %s182
    %p186 = scmp.eq.s32.totalorder %s20, 0
    %p187 = por %p185, %p186
    %p188 = scmp.ne.s32.totalorder %s180, %s182
    %p189 = scmp.eq.s32.totalorder %s25, 1
    %p190 = por %p188, %p189
    %p191 = scmp.ne.s32.totalorder %s182, %s183
    %p192 = scmp.eq.s32.totalorder %s25, 0
    %p193 = por %p191, %p192
    %p194 = scmp.ne.s32.totalorder %s182, %s183
    %p195 = scmp.eq.s32.totalorder %s26, 1
    %p196 = por %p194, %p195
    %p198 = scmp.ne.s32.totalorder %s183, %s197
    %p199 = scmp.eq.s32.totalorder %s26, 0
    %p200 = por %p198, %p199
    %s202 = sadd.s32 %s201, 1
    %p205 = scmp.eq.s32.totalorder %s20, 1
    %p206 = scmp.ne.s32.totalorder %s201, %s203
    %p207 = scmp.eq.s32.totalorder %s20, 0
    %p208 = por %p206, %p207
    %p209 = scmp.ne.s32.totalorder %s201, %s203
    %p210 = scmp.eq.s32.totalorder %s25, 1
    %p211 = por %p209, %p210
    %p212 = scmp.ne.s32.totalorder %s203, %s204
    %p213 = scmp.eq.s32.totalorder %s25, 0
    %p214 = por %p212, %p213
    %p215 = scmp.ne.s32.totalorder %s203, %s204
    %p216 = scmp.eq.s32.totalorder %s26, 1
    %p217 = por %p215, %p216
    %p219 = scmp.ne.s32.totalorder %s204, %s218
    %p220 = scmp.eq.s32.totalorder %s26, 0
    %p221 = por %p219, %p220
    %s223 = sadd.s32 %s222, 1
    %p226 = scmp.eq.s32.totalorder %s20, 1
    %p227 = scmp.ne.s32.totalorder %s222, %s224
    %p228 = scmp.eq.s32.totalorder %s20, 0
    %p229 = por %p227, %p228
    %p230 = scmp.ne.s32.totalorder %s222, %s224
    %p231 = scmp.eq.s32.totalorder %s25, 1
    %p232 = por %p230, %p231
    %p233 = scmp.ne.s32.totalorder %s224, %s225
    %p234 = scmp.eq.s32.totalorder %s25, 0
    %p235 = por %p233, %p234
    %p236 = scmp.ne.s32.totalorder %s224, %s225
    %p237 = scmp.eq.s32.totalorder %s26, 1
    %p238 = por %p236, %p237
    %p240 = scmp.ne.s32.totalorder %s225, %s239
    %p241 = scmp.eq.s32.totalorder %s26, 0
    %p242 = por %p240, %p241
    %s244 = sadd.s32 %s243, 1
    %p247 = scmp.eq.s32.totalorder %s20, 1
    %p248 = scmp.ne.s32.totalorder %s243, %s245
    %p249 = scmp.eq.s32.totalorder %s20, 0
    %p250 = por %p248, %p249
    %p251 = scmp.ne.s32.totalorder %s243, %s245
    %p252 = scmp.eq.s32.totalorder %s25, 1
    %p253 = por %p251, %p252
    %p254 = scmp.ne.s32.totalorder %s245, %s246
    %p255 = scmp.eq.s32.totalorder %s25, 0
    %p256 = por %p254, %p255
    %p257 = scmp.ne.s32.totalorder %s245, %s246
    %p258 = scmp.eq.s32.totalorder %s26, 1
    %p259 = por %p257, %p258
    %p261 = scmp.ne.s32.totalorder %s246, %s260
    %p262 = scmp.eq.s32.totalorder %s26, 0
    %p263 = por %p261, %p262
    %s265 = sadd.s32 %s264, 1
    %p268 = scmp.eq.s32.totalorder %s20, 1
    %p269 = scmp.ne.s32.totalorder %s264, %s266
    %p270 = scmp.eq.s32.totalorder %s20, 0
    %p271 = por %p269, %p270
    %p272 = scmp.ne.s32.totalorder %s264, %s266
    %p273 = scmp.eq.s32.totalorder %s25, 1
    %p274 = por %p272, %p273
    %p275 = scmp.ne.s32.totalorder %s266, %s267
    %p276 = scmp.eq.s32.totalorder %s25, 0
    %p277 = por %p275, %p276
    %p278 = scmp.ne.s32.totalorder %s266, %s267
    %p279 = scmp.eq.s32.totalorder %s26, 1
    %p280 = por %p278, %p279
    %p282 = scmp.ne.s32.totalorder %s267, %s281
    %p283 = scmp.eq.s32.totalorder %s26, 0
    %p284 = por %p282, %p283
    %s286 = sadd.s32 %s285, 1
    %p289 = scmp.eq.s32.totalorder %s20, 1
    %p290 = scmp.ne.s32.totalorder %s285, %s287
    %p291 = scmp.eq.s32.totalorder %s20, 0
    %p292 = por %p290, %p291
    %p293 = scmp.ne.s32.totalorder %s285, %s287
    %p294 = scmp.eq.s32.totalorder %s25, 1
    %p295 = por %p293, %p294
    %p296 = scmp.ne.s32.totalorder %s287, %s288
    %p297 = scmp.eq.s32.totalorder %s25, 0
    %p298 = por %p296, %p297
    %p299 = scmp.ne.s32.totalorder %s287, %s288
    %p300 = scmp.eq.s32.totalorder %s26, 1
    %p301 = por %p299, %p300
    %p303 = scmp.ne.s32.totalorder %s288, %s302
    %p304 = scmp.eq.s32.totalorder %s26, 0
    %p305 = por %p303, %p304
    %s307 = sadd.s32 %s306, 1
    %p310 = scmp.eq.s32.totalorder %s20, 1
    %p311 = scmp.ne.s32.totalorder %s306, %s308
    %p312 = scmp.eq.s32.totalorder %s20, 0
    %p313 = por %p311, %p312
    %p314 = scmp.ne.s32.totalorder %s306, %s308
    %p315 = scmp.eq.s32.totalorder %s25, 1
    %p316 = por %p314, %p315
    %p317 = scmp.ne.s32.totalorder %s308, %s309
    %p318 = scmp.eq.s32.totalorder %s25, 0
    %p319 = por %p317, %p318
    %p320 = scmp.ne.s32.totalorder %s308, %s309
    %p321 = scmp.eq.s32.totalorder %s26, 1
    %p322 = por %p320, %p321
    %p324 = scmp.ne.s32.totalorder %s309, %s323
    %p325 = scmp.eq.s32.totalorder %s26, 0
    %p326 = por %p324, %p325
    %s327 = ssub.s32 %s20, %s27
    %p328 = scmp.eq.s32.totalorder %s327, 0
    %s330 = sadd.s32 %s329, 1
    %s331 = scalar_select %p328, %s329, %s330
    %p334 = pneg %p328
    %p335 = scmp.eq.s32.totalorder %s20, 1
    %p336 = por %p334, %p335
    %p337 = scmp.ne.s32.totalorder %s329, %s332
    %p338 = scmp.eq.s32.totalorder %s20, 0
    %p339 = por %p337, %p338
    %p340 = scmp.ne.s32.totalorder %s329, %s332
    %p341 = scmp.eq.s32.totalorder %s25, 1
    %p342 = por %p340, %p341
    %p343 = scmp.ne.s32.totalorder %s332, %s333
    %p344 = scmp.eq.s32.totalorder %s25, 0
    %p345 = por %p343, %p344
    %p346 = scmp.ne.s32.totalorder %s332, %s333
    %p347 = scmp.eq.s32.totalorder %s26, 1
    %p348 = por %p346, %p347
    %p350 = scmp.ne.s32.totalorder %s333, %s349
    %p351 = scmp.eq.s32.totalorder %s26, 0
    %p352 = por %p350, %p351
    %p353 = scmp.le.s32.totalorder 1, %s20
    %p354 = scmp.lt.s32.totalorder %s20, 3
    %p355 = pnand %p353, %p354
    %p356 = pneg %p355
    // Predicated region
    $region9: #{block_forward.1} parent=5 // pred_check
      _
    $region10: #{block_forward.1} parent=5 // pred_check_branch
      %358 = sbr.rel (%p355) target = $region12
    $region11: #{block_forward.1} parent=5 // pred_region
      %s359 = ssub.s32 %s20, 1
      // Predicated region
      $region13: #{block_forward.1} parent=11 // pred_check
        %p360 = pneg %p67
      $region14: #{block_forward.1} parent=11 // pred_check_branch
        %362 = sbr.rel (%p360) target = $region16
      $region15: #{block_forward.1} parent=11 // pred_region
        _
      $region16: #{block_forward.1} parent=11 // pred_fallthru
        _
      // Predicated region
      $region17: #{block_forward.1} parent=11 // pred_check
        %p363 = pneg %p88
      $region18: #{block_forward.1} parent=11 // pred_check_branch
        %365 = sbr.rel (%p363) target = $region20
      $region19: #{block_forward.1} parent=11 // pred_region
        _
      $region20: #{block_forward.1} parent=11 // pred_fallthru
        _
      // Predicated region
      $region21: #{block_forward.1} parent=11 // pred_check
        %p366 = pneg %p109
      $region22: #{block_forward.1} parent=11 // pred_check_branch
        %368 = sbr.rel (%p366) target = $region24
      $region23: #{block_forward.1} parent=11 // pred_region
        _
      $region24: #{block_forward.1} parent=11 // pred_fallthru
        _
      // Predicated region
      $region25: #{block_forward.1} parent=11 // pred_check
        %p369 = pneg %p130
      $region26: #{block_forward.1} parent=11 // pred_check_branch
        %371 = sbr.rel (%p369) target = $region28
      $region27: #{block_forward.1} parent=11 // pred_region
        _
      $region28: #{block_forward.1} parent=11 // pred_fallthru
        _
      // Predicated region
      $region29: #{block_forward.1} parent=11 // pred_check
        %p372 = pneg %p151
      $region30: #{block_forward.1} parent=11 // pred_check_branch
        %374 = sbr.rel (%p372) target = $region32
      $region31: #{block_forward.1} parent=11 // pred_region
        _
      $region32: #{block_forward.1} parent=11 // pred_fallthru
        _
      // Predicated region
      $region33: #{block_forward.1} parent=11 // pred_check
        %p375 = pneg %p172
      $region34: #{block_forward.1} parent=11 // pred_check_branch
        %377 = sbr.rel (%p375) target = $region36
      $region35: #{block_forward.1} parent=11 // pred_region
        _
      $region36: #{block_forward.1} parent=11 // pred_fallthru
        _
      // Predicated region
      $region37: #{block_forward.1} parent=11 // pred_check
        %p378 = pneg %p193
      $region38: #{block_forward.1} parent=11 // pred_check_branch
        %380 = sbr.rel (%p378) target = $region40
      $region39: #{block_forward.1} parent=11 // pred_region
        _
      $region40: #{block_forward.1} parent=11 // pred_fallthru
        _
      // Predicated region
      $region41: #{block_forward.1} parent=11 // pred_check
        %p381 = pneg %p214
      $region42: #{block_forward.1} parent=11 // pred_check_branch
        %383 = sbr.rel (%p381) target = $region44
      $region43: #{block_forward.1} parent=11 // pred_region
        _
      $region44: #{block_forward.1} parent=11 // pred_fallthru
        _
      // Predicated region
      $region45: #{block_forward.1} parent=11 // pred_check
        %p384 = pneg %p235
      $region46: #{block_forward.1} parent=11 // pred_check_branch
        %386 = sbr.rel (%p384) target = $region48
      $region47: #{block_forward.1} parent=11 // pred_region
        _
      $region48: #{block_forward.1} parent=11 // pred_fallthru
        _
      // Predicated region
      $region49: #{block_forward.1} parent=11 // pred_check
        %p387 = pneg %p256
      $region50: #{block_forward.1} parent=11 // pred_check_branch
        %389 = sbr.rel (%p387) target = $region52
      $region51: #{block_forward.1} parent=11 // pred_region
        _
      $region52: #{block_forward.1} parent=11 // pred_fallthru
        _
      // Predicated region
      $region53: #{block_forward.1} parent=11 // pred_check
        %p390 = pneg %p277
      $region54: #{block_forward.1} parent=11 // pred_check_branch
        %392 = sbr.rel (%p390) target = $region56
      $region55: #{block_forward.1} parent=11 // pred_region
        _
      $region56: #{block_forward.1} parent=11 // pred_fallthru
        _
      // Predicated region
      $region57: #{block_forward.1} parent=11 // pred_check
        %p393 = pneg %p298
      $region58: #{block_forward.1} parent=11 // pred_check_branch
        %395 = sbr.rel (%p393) target = $region60
      $region59: #{block_forward.1} parent=11 // pred_region
        _
      $region60: #{block_forward.1} parent=11 // pred_fallthru
        _
      // Predicated region
      $region61: #{block_forward.1} parent=11 // pred_check
        %p396 = pneg %p319
      $region62: #{block_forward.1} parent=11 // pred_check_branch
        %398 = sbr.rel (%p396) target = $region64
      $region63: #{block_forward.1} parent=11 // pred_region
        _
      $region64: #{block_forward.1} parent=11 // pred_fallthru
        _
    $region12: #{block_forward.1} parent=5 // pred_fallthru
      _
    %p399 = scmp.lt.s32.totalorder %s20, 2
    // Predicated region
    $region65: #{block_forward.1} parent=5 // pred_check
      %p400 = pneg %p399
    $region66: #{block_forward.1} parent=5 // pred_check_branch
      %402 = sbr.rel (%p400) target = $region68
    $region67: #{block_forward.1} parent=5 // pred_region
      // Predicated region
      $region69: #{block_forward.1} parent=67 // pred_check
        %p403 = pneg %p40
      $region70: #{block_forward.1} parent=67 // pred_check_branch
        %405 = sbr.rel (%p403) target = $region72
      $region71: #{block_forward.1} parent=67 // pred_region
        %p406 = scmp.lt.s32.totalorder %s20, 1
        %s407 = scalar_select %p406, %s20, 1
        %s408 = smul.addr %s407, 2
        %s409 = smul.addr %s408, 8
        %s410 = scalar_lea.vmem %s0, %s409
      $region72: #{block_forward.1} parent=67 // pred_fallthru
        _
    $region68: #{block_forward.1} parent=5 // pred_fallthru
      _
    %p411 = scmp.le.s32.totalorder 1, %s20
    %p412 = scmp.lt.s32.totalorder %s20, 3
    %p413 = pnand %p411, %p412
    %p414 = pneg %p413
    // Predicated region
    $region73: #{block_forward.1} parent=5 // pred_check
      _
    $region74: #{block_forward.1} parent=5 // pred_check_branch
      %416 = sbr.rel (%p413) target = $region76
    $region75: #{block_forward.1} parent=5 // pred_region
      %s417 = ssub.s32 %s20, 1
      %p418 = scmp.lt.s32.totalorder %s25, 1
      %s419 = scalar_select %p418, %s25, 1
      %s420 = smul.addr %s419, 2
      %s421 = smul.addr %s420, 8
      %s422 = scalar_lea.vmem %s0, %s421
      %p423 = pneg %p46
      %p424 = pneg %p43
      %p425 = pneg %p67
      %p426 = pneg %p64
      %p427 = pneg %p88
      %p428 = pneg %p85
      %p429 = pneg %p109
      %p430 = pneg %p106
      %p431 = pneg %p130
      %p432 = pneg %p127
      %p433 = pneg %p151
      %p434 = pneg %p148
      %p435 = pneg %p172
      %p436 = pneg %p169
      %p437 = pneg %p193
      %p438 = pneg %p190
      %p439 = pneg %p214
      %p440 = pneg %p211
      %p441 = pneg %p235
      %p442 = pneg %p232
      %p443 = pneg %p256
      %p444 = pneg %p253
      %p445 = pneg %p277
      %p446 = pneg %p274
      %p447 = pneg %p298
      %p448 = pneg %p295
      %p449 = pneg %p319
      %p450 = pneg %p316
      %p451 = pneg %p345
      %p452 = pneg %p342
      %p453 = scmp.lt.s32.totalorder %s25, 1
      %s454 = scalar_select %p453, %s25, 1
      %s455 = smul.addr %s454, 2
      %s456 = smul.addr %s455, 8
      %s457 = scalar_lea.vmem %s14, %s456
      %p458 = scmp.lt.s32.totalorder %s25, 1
      %s459 = scalar_select %p458, %s25, 1
      %s460 = smul.addr %s459, 2
      %s461 = smul.addr %s460, 8
      %s462 = scalar_lea.vmem %s0, %s461
      %p463 = scmp.lt.s32.totalorder %s25, 1
      %s464 = scalar_select %p463, %s25, 1
      %s465 = smul.addr %s464, 2
      %s466 = smul.addr %s465, 8
      %s467 = scalar_lea.vmem %s14, %s466
      %v468 = vld [vmem:[%s462] sm:$0xff]
      %v469 = vld [vmem:[%s462 + $0x8] sm:$0xff]
      %v470 = vld [vmem:[%s1] sm:$0x3]
      %v471 = vld [vmem:[%s2] sm:$0x3]
      %472 = vrot.lane.b32.xlu0 %v468, 17
      %v473 = vpop.permute.xlu0 %472
      %474 = vrot.lane.b32.xlu0 %v469, 17
      %v475 = vpop.permute.xlu0 %474
      %v476 = vlaneseq
      %v477 = vand.u32 %v476, 127
      %vm478 = vcmp.lt.s32.totalorder %v477, 17
      %v479 = vsel %vm478, %v473, %v475
      %v480 = vsel %vm478, %v475, %v473
      %vm481 = vcmp.ge.s32.totalorder %v470, 1
      %vm482 = vcmp.ge.s32.totalorder %v471, 1
      %vm483 = vmand %vm481, %vm482
      %v484 = vsel %vm483, 1, 0
      %v485 = vlaneseq
      %v486 = vshrl.u32 %v485, 7
      %v487 = vsub.s32 0, %v486
      %v488 = vrot.slane %v484, %v487
      %v489 = vlaneseq
      %v490 = vshrl.u32 %v489, 7
      %v491 = vsub.s32 1, %v490
      %v492 = vrot.slane %v484, %v491
      %vm493 = vcmp.eq.s32.totalorder %v488, 1
      %vm494 = vcmp.eq.s32.totalorder %v492, 1
      %v495 = vsel %vm493, %v480, 0.0
      %v496 = vsel %vm494, %v479, 0.0
      %497 = vrot.lane.b32.xlu0 %v468, 16
      %v498 = vpop.permute.xlu0 %497
      %499 = vrot.lane.b32.xlu0 %v469, 16
      %v500 = vpop.permute.xlu0 %499
      %vm501 = vcmp.lt.s32.totalorder %v477, 16
      %v502 = vsel %vm501, %v498, %v500
      %v503 = vsel %vm501, %v500, %v498
      %v504 = vsel %vm482, 1, 0
      %v505 = vlaneseq
      %v506 = vshrl.u32 %v505, 7
      %v507 = vsub.s32 0, %v506
      %v508 = vrot.slane %v504, %v507
      %v509 = vlaneseq
      %v510 = vshrl.u32 %v509, 7
      %v511 = vsub.s32 1, %v510
      %v512 = vrot.slane %v504, %v511
      %vm513 = vcmp.eq.s32.totalorder %v508, 1
      %vm514 = vcmp.eq.s32.totalorder %v512, 1
      %v515 = vsel %vm513, %v503, 0.0
      %v516 = vsel %vm514, %v502, 0.0
      %517 = vrot.lane.b32.xlu0 %v468, 15
      %v518 = vpop.permute.xlu0 %517
      %519 = vrot.lane.b32.xlu0 %v469, 15
      %v520 = vpop.permute.xlu0 %519
      %vm521 = vcmp.lt.s32.totalorder %v477, 15
      %v522 = vsel %vm521, %v518, %v520
      %v523 = vsel %vm521, %v520, %v518
      %vm524 = vcmp.lt.s32.totalorder %v470, 15
      %vm525 = vmand %vm524, %vm482
      %v526 = vsel %vm525, 1, 0
      %v527 = vlaneseq
      %v528 = vshrl.u32 %v527, 7
      %v529 = vsub.s32 0, %v528
      %v530 = vrot.slane %v526, %v529
      %v531 = vlaneseq
      %v532 = vshrl.u32 %v531, 7
      %v533 = vsub.s32 1, %v532
      %v534 = vrot.slane %v526, %v533
      %vm535 = vcmp.eq.s32.totalorder %v530, 1
      %vm536 = vcmp.eq.s32.totalorder %v534, 1
      %v537 = vsel %vm535, %v523, 0.0
      %v538 = vsel %vm536, %v522, 0.0
      %539 = vrot.lane.b32.xlu0 %v468, 1
      %v540 = vpop.permute.xlu0 %539
      %541 = vrot.lane.b32.xlu0 %v469, 1
      %v542 = vpop.permute.xlu0 %541
      %vm543 = vcmp.lt.s32.totalorder %v477, 1
      %v544 = vsel %vm543, %v540, %v542
      %v545 = vsel %vm543, %v542, %v540
      %v546 = vsel %vm481, 1, 0
      %v547 = vlaneseq
      %v548 = vshrl.u32 %v547, 7
      %v549 = vsub.s32 0, %v548
      %v550 = vrot.slane %v546, %v549
      %v551 = vlaneseq
      %v552 = vshrl.u32 %v551, 7
      %v553 = vsub.s32 1, %v552
      %v554 = vrot.slane %v546, %v553
      %vm555 = vcmp.eq.s32.totalorder %v550, 1
      %vm556 = vcmp.eq.s32.totalorder %v554, 1
      %v557 = vsel %vm555, %v545, 0.0
      %v558 = vsel %vm556, %v544, 0.0
      %559 = vrot.lane.b32.xlu0 %v468, 127
      %v560 = vpop.permute.xlu0 %559
      %561 = vrot.lane.b32.xlu0 %v469, 127
      %v562 = vpop.permute.xlu0 %561
      %vm563 = vcmp.lt.s32.totalorder %v477, 127
      %v564 = vsel %vm563, %v560, %v562
      %v565 = vsel %vm563, %v562, %v560
      %v566 = vsel %vm524, 1, 0
      %v567 = vlaneseq
      %v568 = vshrl.u32 %v567, 7
      %v569 = vsub.s32 0, %v568
      %v570 = vrot.slane %v566, %v569
      %v571 = vlaneseq
      %v572 = vshrl.u32 %v571, 7
      %v573 = vsub.s32 1, %v572
      %v574 = vrot.slane %v566, %v573
      %vm575 = vcmp.eq.s32.totalorder %v570, 1
      %vm576 = vcmp.eq.s32.totalorder %v574, 1
      %v577 = vsel %vm575, %v564, 0.0
      %v578 = vsel %vm576, %v565, 0.0
      %579 = vrot.lane.b32.xlu0 %v468, 113
      %v580 = vpop.permute.xlu0 %579
      %581 = vrot.lane.b32.xlu0 %v469, 113
      %v582 = vpop.permute.xlu0 %581
      %vm583 = vcmp.lt.s32.totalorder %v477, 113
      %v584 = vsel %vm583, %v580, %v582
      %v585 = vsel %vm583, %v582, %v580
      %vm586 = vcmp.lt.s32.totalorder %v471, 15
      %vm587 = vmand %vm481, %vm586
      %v588 = vsel %vm587, 1, 0
      %v589 = vlaneseq
      %v590 = vshrl.u32 %v589, 7
      %v591 = vsub.s32 0, %v590
      %v592 = vrot.slane %v588, %v591
      %v593 = vlaneseq
      %v594 = vshrl.u32 %v593, 7
      %v595 = vsub.s32 1, %v594
      %v596 = vrot.slane %v588, %v595
      %vm597 = vcmp.eq.s32.totalorder %v592, 1
      %vm598 = vcmp.eq.s32.totalorder %v596, 1
      %v599 = vsel %vm597, %v584, 0.0
      %v600 = vsel %vm598, %v585, 0.0
      %601 = vrot.lane.b32.xlu0 %v468, 112
      %v602 = vpop.permute.xlu0 %601
      %603 = vrot.lane.b32.xlu0 %v469, 112
      %v604 = vpop.permute.xlu0 %603
      %vm605 = vcmp.lt.s32.totalorder %v477, 112
      %v606 = vsel %vm605, %v602, %v604
      %v607 = vsel %vm605, %v604, %v602
      %v608 = vsel %vm586, 1, 0
      %v609 = vlaneseq
      %v610 = vshrl.u32 %v609, 7
      %v611 = vsub.s32 0, %v610
      %v612 = vrot.slane %v608, %v611
      %v613 = vlaneseq
      %v614 = vshrl.u32 %v613, 7
      %v615 = vsub.s32 1, %v614
      %v616 = vrot.slane %v608, %v615
      %vm617 = vcmp.eq.s32.totalorder %v612, 1
      %vm618 = vcmp.eq.s32.totalorder %v616, 1
      %v619 = vsel %vm617, %v606, 0.0
      %v620 = vsel %vm618, %v607, 0.0
      %621 = vrot.lane.b32.xlu0 %v468, 111
      %v622 = vpop.permute.xlu0 %621
      %623 = vrot.lane.b32.xlu0 %v469, 111
      %v624 = vpop.permute.xlu0 %623
      %vm625 = vcmp.lt.s32.totalorder %v477, 111
      %v626 = vsel %vm625, %v622, %v624
      %v627 = vsel %vm625, %v624, %v622
      %vm628 = vmand %vm524, %vm586
      %v629 = vsel %vm628, 1, 0
      %v630 = vlaneseq
      %v631 = vshrl.u32 %v630, 7
      %v632 = vsub.s32 0, %v631
      %v633 = vrot.slane %v629, %v632
      %v634 = vlaneseq
      %v635 = vshrl.u32 %v634, 7
      %v636 = vsub.s32 1, %v635
      %v637 = vrot.slane %v629, %v636
      %vm638 = vcmp.eq.s32.totalorder %v633, 1
      %vm639 = vcmp.eq.s32.totalorder %v637, 1
      %v640 = vsel %vm638, %v626, 0.0
      %v641 = vsel %vm639, %v627, 0.0
      %v642 = vld [vmem:[%s3] sm:$0xff]
      %v643 = vld [vmem:[%s4] sm:$0xff]
      %645 = vset.pattern.permute.xlu0 0
      %646 = vperm.xlu0 %645, %v643
      %v647 = vpop.permute.xlu0 %646
      %vm649 = vcmask 588800
      %v651 = vsel %vm649, %v642, 0
      %653 = vmatprep.subr.mxu0 0.0
      %654 = vmatpush1.msra.mxu0 0.0
      %655 = vmatprep.subr.mxu0 0.0
      %656 = vmatpush1.msra.mxu0 0.0
      %657 = vmatprep.subr.mxu0 0.0
      %658 = vmatpush1.msra.mxu0 0.0
      %659 = vmatprep.subr.mxu0 0.0
      %660 = vmatpush1.msra.mxu0 0.0
      %661 = vmatprep.subr.mxu0 0.0
      %662 = vmatpush1.msra.mxu0 0.0
      %663 = vmatprep.subr.mxu0 0.0
      %664 = vmatpush1.msra.mxu0 0.0
      %665 = vmatprep.subr.mxu0 0.0
      %666 = vmatpush1.msra.mxu0 0.0
      %667 = vmatprep.subr.mxu0 %v641
      %668 = vmatpush1.msra.mxu0 %v640
      %669 = vmatprep.subr.mxu0 %v620
      %670 = vmatpush1.msra.mxu0 %v619
      %671 = vmatprep.subr.mxu0 %v600
      %672 = vmatpush1.msra.mxu0 %v599
      %673 = vmatprep.subr.mxu0 %v578
      %674 = vmatpush1.msra.mxu0 %v577
      %675 = vmatprep.subr.mxu0 %v469
      %676 = vmatpush1.msra.mxu0 %v468
      %677 = vmatprep.subr.mxu0 %v558
      %678 = vmatpush1.msra.mxu0 %v557
      %679 = vmatprep.subr.mxu0 %v538
      %680 = vmatpush1.msra.mxu0 %v537
      %681 = vmatprep.subr.mxu0 %v516
      %682 = vmatpush1.msra.mxu0 %v515
      %683 = vmatprep.subr.mxu0 %v496
      %684 = vmatpush1.msra.mxu0 %v495
      %685 = vmatprep.subr.mxu0 0.0
      %686 = vmatpush2.msra.mxu0 0.0
      %687 = vmatprep.subr.mxu0 0.0
      %688 = vmatpush2.msra.mxu0 0.0
      %689 = vmatprep.subr.mxu0 0.0
      %690 = vmatpush2.msra.mxu0 0.0
      %691 = vmatprep.subr.mxu0 0.0
      %692 = vmatpush2.msra.mxu0 0.0
      %693 = vmatprep.subr.mxu0 0.0
      %694 = vmatpush2.msra.mxu0 0.0
      %695 = vmatprep.subr.mxu0 0.0
      %696 = vmatpush2.msra.mxu0 0.0
      %697 = vmatprep.subr.mxu0 0.0
      %698 = vmatpush2.msra.mxu0 0.0
      %699 = vmatprep.subr.mxu0 0.0
      %700 = vmatpush2.msra.mxu0 0.0
      %701 = vmatprep.subr.mxu0 0.0
      %702 = vmatpush2.msra.mxu0 0.0
      %703 = vmatprep.subr.mxu0 0.0
      %704 = vmatpush2.msra.mxu0 0.0
      %705 = vmatprep.subr.mxu0 0.0
      %706 = vmatpush2.msra.mxu0 0.0
      %707 = vmatprep.subr.mxu0 0.0
      %708 = vmatpush2.msra.mxu0 0.0
      %709 = vmatprep.subr.mxu0 0.0
      %710 = vmatpush2.msra.mxu0 0.0
      %711 = vmatprep.subr.mxu0 0.0
      %712 = vmatpush2.msra.mxu0 0.0
      %713 = vmatprep.subr.mxu0 0.0
      %714 = vmatpush2.msra.mxu0 0.0
      %715 = vmatprep.subr.mxu0 0.0
      %716 = vmatpush2.msra.mxu0 0.0
      %717 = vmatprep.mubr.f32.mxu0 0.0
      %718 = vmatmul.mubr.f32.gmra.mxu0 %v651
      %v719 = vpop.f32.mrf.mxu0
      %v720 = vadd.f32 %v647, %v719
      %v721 = vpop.f32.mrf.mxu0
      %v722 = vadd.f32 %v647, %v721
      %723 = vdwg.mxu0
      %v724 = vmax.f32 %v720, 0.0
      %v725 = vmax.f32 %v722, 0.0
      %726 = vrot.lane.b32.xlu0 %v724, 34
      %v727 = vpop.permute.xlu0 %726
      %728 = vrot.lane.b32.xlu0 %v725, 34
      %v729 = vpop.permute.xlu0 %728
      %vm730 = vcmp.lt.s32.totalorder %v477, 34
      %v731 = vsel %vm730, %v727, %v729
      %v732 = vsel %vm730, %v729, %v727
      %vm733 = vcmp.ge.s32.totalorder %v470, 2
      %vm734 = vcmp.ge.s32.totalorder %v471, 2
      %vm735 = vmand %vm733, %vm734
      %v736 = vsel %vm735, 1, 0
      %v737 = vlaneseq
      %v738 = vshrl.u32 %v737, 7
      %v739 = vsub.s32 0, %v738
      %v740 = vrot.slane %v736, %v739
      %v741 = vlaneseq
      %v742 = vshrl.u32 %v741, 7
      %v743 = vsub.s32 1, %v742
      %v744 = vrot.slane %v736, %v743
      %vm745 = vcmp.eq.s32.totalorder %v740, 1
      %vm746 = vcmp.eq.s32.totalorder %v744, 1
      %v747 = vsel %vm745, %v732, 0.0
      %v748 = vsel %vm746, %v731, 0.0
      %749 = vrot.lane.b32.xlu0 %v724, 32
      %v750 = vpop.permute.xlu0 %749
      %751 = vrot.lane.b32.xlu0 %v725, 32
      %v752 = vpop.permute.xlu0 %751
      %vm753 = vcmp.lt.s32.totalorder %v477, 32
      %v754 = vsel %vm753, %v750, %v752
      %v755 = vsel %vm753, %v752, %v750
      %v756 = vsel %vm734, 1, 0
      %v757 = vlaneseq
      %v758 = vshrl.u32 %v757, 7
      %v759 = vsub.s32 0, %v758
      %v760 = vrot.slane %v756, %v759
      %v761 = vlaneseq
      %v762 = vshrl.u32 %v761, 7
      %v763 = vsub.s32 1, %v762
      %v764 = vrot.slane %v756, %v763
      %vm765 = vcmp.eq.s32.totalorder %v760, 1
      %vm766 = vcmp.eq.s32.totalorder %v764, 1
      %v767 = vsel %vm765, %v755, 0.0
      %v768 = vsel %vm766, %v754, 0.0
      %769 = vrot.lane.b32.xlu0 %v724, 30
      %v770 = vpop.permute.xlu0 %769
      %771 = vrot.lane.b32.xlu0 %v725, 30
      %v772 = vpop.permute.xlu0 %771
      %vm773 = vcmp.lt.s32.totalorder %v477, 30
      %v774 = vsel %vm773, %v770, %v772
      %v775 = vsel %vm773, %v772, %v770
      %vm776 = vcmp.lt.s32.totalorder %v470, 14
      %vm777 = vmand %vm776, %vm734
      %v778 = vsel %vm777, 1, 0
      %v779 = vlaneseq
      %v780 = vshrl.u32 %v779, 7
      %v781 = vsub.s32 0, %v780
      %v782 = vrot.slane %v778, %v781
      %v783 = vlaneseq
      %v784 = vshrl.u32 %v783, 7
      %v785 = vsub.s32 1, %v784
      %v786 = vrot.slane %v778, %v785
      %vm787 = vcmp.eq.s32.totalorder %v782, 1
      %vm788 = vcmp.eq.s32.totalorder %v786, 1
      %v789 = vsel %vm787, %v775, 0.0
      %v790 = vsel %vm788, %v774, 0.0
      %791 = vrot.lane.b32.xlu0 %v724, 2
      %v792 = vpop.permute.xlu0 %791
      %793 = vrot.lane.b32.xlu0 %v725, 2
      %v794 = vpop.permute.xlu0 %793
      %vm795 = vcmp.lt.s32.totalorder %v477, 2
      %v796 = vsel %vm795, %v792, %v794
      %v797 = vsel %vm795, %v794, %v792
      %v798 = vsel %vm733, 1, 0
      %v799 = vlaneseq
      %v800 = vshrl.u32 %v799, 7
      %v801 = vsub.s32 0, %v800
      %v802 = vrot.slane %v798, %v801
      %v803 = vlaneseq
      %v804 = vshrl.u32 %v803, 7
      %v805 = vsub.s32 1, %v804
      %v806 = vrot.slane %v798, %v805
      %vm807 = vcmp.eq.s32.totalorder %v802, 1
      %vm808 = vcmp.eq.s32.totalorder %v806, 1
      %v809 = vsel %vm807, %v797, 0.0
      %v810 = vsel %vm808, %v796, 0.0
      %811 = vrot.lane.b32.xlu0 %v724, 126
      %v812 = vpop.permute.xlu0 %811
      %813 = vrot.lane.b32.xlu0 %v725, 126
      %v814 = vpop.permute.xlu0 %813
      %vm815 = vcmp.lt.s32.totalorder %v477, 126
      %v816 = vsel %vm815, %v812, %v814
      %v817 = vsel %vm815, %v814, %v812
      %v818 = vsel %vm776, 1, 0
      %v819 = vlaneseq
      %v820 = vshrl.u32 %v819, 7
      %v821 = vsub.s32 0, %v820
      %v822 = vrot.slane %v818, %v821
      %v823 = vlaneseq
      %v824 = vshrl.u32 %v823, 7
      %v825 = vsub.s32 1, %v824
      %v826 = vrot.slane %v818, %v825
      %vm827 = vcmp.eq.s32.totalorder %v822, 1
      %vm828 = vcmp.eq.s32.totalorder %v826, 1
      %v829 = vsel %vm827, %v816, 0.0
      %v830 = vsel %vm828, %v817, 0.0
      %831 = vrot.lane.b32.xlu0 %v724, 98
      %v832 = vpop.permute.xlu0 %831
      %833 = vrot.lane.b32.xlu0 %v725, 98
      %v834 = vpop.permute.xlu0 %833
      %vm835 = vcmp.lt.s32.totalorder %v477, 98
      %v836 = vsel %vm835, %v832, %v834
      %v837 = vsel %vm835, %v834, %v832
      %vm838 = vcmp.lt.s32.totalorder %v471, 14
      %vm839 = vmand %vm733, %vm838
      %v840 = vsel %vm839, 1, 0
      %v841 = vlaneseq
      %v842 = vshrl.u32 %v841, 7
      %v843 = vsub.s32 0, %v842
      %v844 = vrot.slane %v840, %v843
      %v845 = vlaneseq
      %v846 = vshrl.u32 %v845, 7
      %v847 = vsub.s32 1, %v846
      %v848 = vrot.slane %v840, %v847
      %vm849 = vcmp.eq.s32.totalorder %v844, 1
      %vm850 = vcmp.eq.s32.totalorder %v848, 1
      %v851 = vsel %vm849, %v836, 0.0
      %v852 = vsel %vm850, %v837, 0.0
      %853 = vrot.lane.b32.xlu0 %v724, 96
      %v854 = vpop.permute.xlu0 %853
      %855 = vrot.lane.b32.xlu0 %v725, 96
      %v856 = vpop.permute.xlu0 %855
      %vm857 = vcmp.lt.s32.totalorder %v477, 96
      %v858 = vsel %vm857, %v854, %v856
      %v859 = vsel %vm857, %v856, %v854
      %v860 = vsel %vm838, 1, 0
      %v861 = vlaneseq
      %v862 = vshrl.u32 %v861, 7
      %v863 = vsub.s32 0, %v862
      %v864 = vrot.slane %v860, %v863
      %v865 = vlaneseq
      %v866 = vshrl.u32 %v865, 7
      %v867 = vsub.s32 1, %v866
      %v868 = vrot.slane %v860, %v867
      %vm869 = vcmp.eq.s32.totalorder %v864, 1
      %vm870 = vcmp.eq.s32.totalorder %v868, 1
      %v871 = vsel %vm869, %v858, 0.0
      %v872 = vsel %vm870, %v859, 0.0
      %873 = vrot.lane.b32.xlu0 %v724, 94
      %v874 = vpop.permute.xlu0 %873
      %875 = vrot.lane.b32.xlu0 %v725, 94
      %v876 = vpop.permute.xlu0 %875
      %vm877 = vcmp.lt.s32.totalorder %v477, 94
      %v878 = vsel %vm877, %v874, %v876
      %v879 = vsel %vm877, %v876, %v874
      %vm880 = vmand %vm776, %vm838
      %v881 = vsel %vm880, 1, 0
      %v882 = vlaneseq
      %v883 = vshrl.u32 %v882, 7
      %v884 = vsub.s32 0, %v883
      %v885 = vrot.slane %v881, %v884
      %v886 = vlaneseq
      %v887 = vshrl.u32 %v886, 7
      %v888 = vsub.s32 1, %v887
      %v889 = vrot.slane %v881, %v888
      %vm890 = vcmp.eq.s32.totalorder %v885, 1
      %vm891 = vcmp.eq.s32.totalorder %v889, 1
      %v892 = vsel %vm890, %v878, 0.0
      %v893 = vsel %vm891, %v879, 0.0
      %s894 = scalar_lea.vmem %s3, 8
      %v895 = vld [vmem:[%s894] sm:$0xff]
      %s896 = scalar_lea.vmem %s4, 8
      %v897 = vld [vmem:[%s896] sm:$0xff]
      %899 = vset.pattern.permute.xlu0 0
      %900 = vperm.xlu0 %899, %v897
      %v901 = vpop.permute.xlu0 %900
      %v904 = vsel %vm649, %v895, 0
      %906 = vmatprep.subr.mxu0 0.0
      %907 = vmatpush1.msra.mxu0 0.0
      %908 = vmatprep.subr.mxu0 0.0
      %909 = vmatpush1.msra.mxu0 0.0
      %910 = vmatprep.subr.mxu0 0.0
      %911 = vmatpush1.msra.mxu0 0.0
      %912 = vmatprep.subr.mxu0 0.0
      %913 = vmatpush1.msra.mxu0 0.0
      %914 = vmatprep.subr.mxu0 0.0
      %915 = vmatpush1.msra.mxu0 0.0
      %916 = vmatprep.subr.mxu0 0.0
      %917 = vmatpush1.msra.mxu0 0.0
      %918 = vmatprep.subr.mxu0 0.0
      %919 = vmatpush1.msra.mxu0 0.0
      %920 = vmatprep.subr.mxu0 %v893
      %921 = vmatpush1.msra.mxu0 %v892
      %922 = vmatprep.subr.mxu0 %v872
      %923 = vmatpush1.msra.mxu0 %v871
      %924 = vmatprep.subr.mxu0 %v852
      %925 = vmatpush1.msra.mxu0 %v851
      %926 = vmatprep.subr.mxu0 %v830
      %927 = vmatpush1.msra.mxu0 %v829
      %928 = vmatprep.subr.mxu0 %v725
      %929 = vmatpush1.msra.mxu0 %v724
      %930 = vmatprep.subr.mxu0 %v810
      %931 = vmatpush1.msra.mxu0 %v809
      %932 = vmatprep.subr.mxu0 %v790
      %933 = vmatpush1.msra.mxu0 %v789
      %934 = vmatprep.subr.mxu0 %v768
      %935 = vmatpush1.msra.mxu0 %v767
      %936 = vmatprep.subr.mxu0 %v748
      %937 = vmatpush1.msra.mxu0 %v747
      %938 = vmatprep.subr.mxu0 0.0
      %939 = vmatpush2.msra.mxu0 0.0
      %940 = vmatprep.subr.mxu0 0.0
      %941 = vmatpush2.msra.mxu0 0.0
      %942 = vmatprep.subr.mxu0 0.0
      %943 = vmatpush2.msra.mxu0 0.0
      %944 = vmatprep.subr.mxu0 0.0
      %945 = vmatpush2.msra.mxu0 0.0
      %946 = vmatprep.subr.mxu0 0.0
      %947 = vmatpush2.msra.mxu0 0.0
      %948 = vmatprep.subr.mxu0 0.0
      %949 = vmatpush2.msra.mxu0 0.0
      %950 = vmatprep.subr.mxu0 0.0
      %951 = vmatpush2.msra.mxu0 0.0
      %952 = vmatprep.subr.mxu0 0.0
      %953 = vmatpush2.msra.mxu0 0.0
      %954 = vmatprep.subr.mxu0 0.0
      %955 = vmatpush2.msra.mxu0 0.0
      %956 = vmatprep.subr.mxu0 0.0
      %957 = vmatpush2.msra.mxu0 0.0
      %958 = vmatprep.subr.mxu0 0.0
      %959 = vmatpush2.msra.mxu0 0.0
      %960 = vmatprep.subr.mxu0 0.0
      %961 = vmatpush2.msra.mxu0 0.0
      %962 = vmatprep.subr.mxu0 0.0
      %963 = vmatpush2.msra.mxu0 0.0
      %964 = vmatprep.subr.mxu0 0.0
      %965 = vmatpush2.msra.mxu0 0.0
      %966 = vmatprep.subr.mxu0 0.0
      %967 = vmatpush2.msra.mxu0 0.0
      %968 = vmatprep.subr.mxu0 0.0
      %969 = vmatpush2.msra.mxu0 0.0
      %970 = vmatprep.mubr.f32.mxu0 0.0
      %971 = vmatmul.mubr.f32.gmra.mxu0 %v904
      %v972 = vpop.f32.mrf.mxu0
      %v973 = vadd.f32 %v901, %v972
      %v974 = vpop.f32.mrf.mxu0
      %v975 = vadd.f32 %v901, %v974
      %976 = vdwg.mxu0
      %v977 = vmax.f32 %v973, 0.0
      %v978 = vmax.f32 %v975, 0.0
      %979 = vrot.lane.b32.xlu0 %v468, 51
      %v980 = vpop.permute.xlu0 %979
      %981 = vrot.lane.b32.xlu0 %v469, 51
      %v982 = vpop.permute.xlu0 %981
      %vm983 = vcmp.lt.s32.totalorder %v477, 51
      %v984 = vsel %vm983, %v980, %v982
      %v985 = vsel %vm983, %v982, %v980
      %vm986 = vcmp.ge.s32.totalorder %v470, 3
      %vm987 = vcmp.ge.s32.totalorder %v471, 3
      %vm988 = vmand %vm986, %vm987
      %v989 = vsel %vm988, 1, 0
      %v990 = vlaneseq
      %v991 = vshrl.u32 %v990, 7
      %v992 = vsub.s32 0, %v991
      %v993 = vrot.slane %v989, %v992
      %v994 = vlaneseq
      %v995 = vshrl.u32 %v994, 7
      %v996 = vsub.s32 1, %v995
      %v997 = vrot.slane %v989, %v996
      %vm998 = vcmp.eq.s32.totalorder %v993, 1
      %vm999 = vcmp.eq.s32.totalorder %v997, 1
      %v1000 = vsel %vm998, %v985, 0.0
      %v1001 = vsel %vm999, %v984, 0.0
      %1002 = vrot.lane.b32.xlu0 %v468, 48
      %v1003 = vpop.permute.xlu0 %1002
      %1004 = vrot.lane.b32.xlu0 %v469, 48
      %v1005 = vpop.permute.xlu0 %1004
      %vm1006 = vcmp.lt.s32.totalorder %v477, 48
      %v1007 = vsel %vm1006, %v1003, %v1005
      %v1008 = vsel %vm1006, %v1005, %v1003
      %v1009 = vsel %vm987, 1, 0
      %v1010 = vlaneseq
      %v1011 = vshrl.u32 %v1010, 7
      %v1012 = vsub.s32 0, %v1011
      %v1013 = vrot.slane %v1009, %v1012
      %v1014 = vlaneseq
      %v1015 = vshrl.u32 %v1014, 7
      %v1016 = vsub.s32 1, %v1015
      %v1017 = vrot.slane %v1009, %v1016
      %vm1018 = vcmp.eq.s32.totalorder %v1013, 1
      %vm1019 = vcmp.eq.s32.totalorder %v1017, 1
      %v1020 = vsel %vm1018, %v1008, 0.0
      %v1021 = vsel %vm1019, %v1007, 0.0
      %1022 = vrot.lane.b32.xlu0 %v468, 45
      %v1023 = vpop.permute.xlu0 %1022
      %1024 = vrot.lane.b32.xlu0 %v469, 45
      %v1025 = vpop.permute.xlu0 %1024
      %vm1026 = vcmp.lt.s32.totalorder %v477, 45
      %v1027 = vsel %vm1026, %v1023, %v1025
      %v1028 = vsel %vm1026, %v1025, %v1023
      %vm1029 = vcmp.lt.s32.totalorder %v470, 13
      %vm1030 = vmand %vm1029, %vm987
      %v1031 = vsel %vm1030, 1, 0
      %v1032 = vlaneseq
      %v1033 = vshrl.u32 %v1032, 7
      %v1034 = vsub.s32 0, %v1033
      %v1035 = vrot.slane %v1031, %v1034
      %v1036 = vlaneseq
      %v1037 = vshrl.u32 %v1036, 7
      %v1038 = vsub.s32 1, %v1037
      %v1039 = vrot.slane %v1031, %v1038
      %vm1040 = vcmp.eq.s32.totalorder %v1035, 1
      %vm1041 = vcmp.eq.s32.totalorder %v1039, 1
      %v1042 = vsel %vm1040, %v1028, 0.0
      %v1043 = vsel %vm1041, %v1027, 0.0
      %1044 = vrot.lane.b32.xlu0 %v468, 3
      %v1045 = vpop.permute.xlu0 %1044
      %1046 = vrot.lane.b32.xlu0 %v469, 3
      %v1047 = vpop.permute.xlu0 %1046
      %vm1048 = vcmp.lt.s32.totalorder %v477, 3
      %v1049 = vsel %vm1048, %v1045, %v1047
      %v1050 = vsel %vm1048, %v1047, %v1045
      %v1051 = vsel %vm986, 1, 0
      %v1052 = vlaneseq
      %v1053 = vshrl.u32 %v1052, 7
      %v1054 = vsub.s32 0, %v1053
      %v1055 = vrot.slane %v1051, %v1054
      %v1056 = vlaneseq
      %v1057 = vshrl.u32 %v1056, 7
      %v1058 = vsub.s32 1, %v1057
      %v1059 = vrot.slane %v1051, %v1058
      %vm1060 = vcmp.eq.s32.totalorder %v1055, 1
      %vm1061 = vcmp.eq.s32.totalorder %v1059, 1
      %v1062 = vsel %vm1060, %v1050, 0.0
      %v1063 = vsel %vm1061, %v1049, 0.0
      %1064 = vrot.lane.b32.xlu0 %v468, 125
      %v1065 = vpop.permute.xlu0 %1064
      %1066 = vrot.lane.b32.xlu0 %v469, 125
      %v1067 = vpop.permute.xlu0 %1066
      %vm1068 = vcmp.lt.s32.totalorder %v477, 125
      %v1069 = vsel %vm1068, %v1065, %v1067
      %v1070 = vsel %vm1068, %v1067, %v1065
      %v1071 = vsel %vm1029, 1, 0
      %v1072 = vlaneseq
      %v1073 = vshrl.u32 %v1072, 7
      %v1074 = vsub.s32 0, %v1073
      %v1075 = vrot.slane %v1071, %v1074
      %v1076 = vlaneseq
      %v1077 = vshrl.u32 %v1076, 7
      %v1078 = vsub.s32 1, %v1077
      %v1079 = vrot.slane %v1071, %v1078
      %vm1080 = vcmp.eq.s32.totalorder %v1075, 1
      %vm1081 = vcmp.eq.s32.totalorder %v1079, 1
      %v1082 = vsel %vm1080, %v1069, 0.0
      %v1083 = vsel %vm1081, %v1070, 0.0
      %1084 = vrot.lane.b32.xlu0 %v468, 83
      %v1085 = vpop.permute.xlu0 %1084
      %1086 = vrot.lane.b32.xlu0 %v469, 83
      %v1087 = vpop.permute.xlu0 %1086
      %vm1088 = vcmp.lt.s32.totalorder %v477, 83
      %v1089 = vsel %vm1088, %v1085, %v1087
      %v1090 = vsel %vm1088, %v1087, %v1085
      %vm1091 = vcmp.lt.s32.totalorder %v471, 13
      %vm1092 = vmand %vm986, %vm1091
      %v1093 = vsel %vm1092, 1, 0
      %v1094 = vlaneseq
      %v1095 = vshrl.u32 %v1094, 7
      %v1096 = vsub.s32 0, %v1095
      %v1097 = vrot.slane %v1093, %v1096
      %v1098 = vlaneseq
      %v1099 = vshrl.u32 %v1098, 7
      %v1100 = vsub.s32 1, %v1099
      %v1101 = vrot.slane %v1093, %v1100
      %vm1102 = vcmp.eq.s32.totalorder %v1097, 1
      %vm1103 = vcmp.eq.s32.totalorder %v1101, 1
      %v1104 = vsel %vm1102, %v1089, 0.0
      %v1105 = vsel %vm1103, %v1090, 0.0
      %1106 = vrot.lane.b32.xlu0 %v468, 80
      %v1107 = vpop.permute.xlu0 %1106
      %1108 = vrot.lane.b32.xlu0 %v469, 80
      %v1109 = vpop.permute.xlu0 %1108
      %vm1110 = vcmp.lt.s32.totalorder %v477, 80
      %v1111 = vsel %vm1110, %v1107, %v1109
      %v1112 = vsel %vm1110, %v1109, %v1107
      %v1113 = vsel %vm1091, 1, 0
      %v1114 = vlaneseq
      %v1115 = vshrl.u32 %v1114, 7
      %v1116 = vsub.s32 0, %v1115
      %v1117 = vrot.slane %v1113, %v1116
      %v1118 = vlaneseq
      %v1119 = vshrl.u32 %v1118, 7
      %v1120 = vsub.s32 1, %v1119
      %v1121 = vrot.slane %v1113, %v1120
      %vm1122 = vcmp.eq.s32.totalorder %v1117, 1
      %vm1123 = vcmp.eq.s32.totalorder %v1121, 1
      %v1124 = vsel %vm1122, %v1111, 0.0
      %v1125 = vsel %vm1123, %v1112, 0.0
      %1126 = vrot.lane.b32.xlu0 %v468, 77
      %v1127 = vpop.permute.xlu0 %1126
      %1128 = vrot.lane.b32.xlu0 %v469, 77
      %v1129 = vpop.permute.xlu0 %1128
      %vm1130 = vcmp.lt.s32.totalorder %v477, 77
      %v1131 = vsel %vm1130, %v1127, %v1129
      %v1132 = vsel %vm1130, %v1129, %v1127
      %vm1133 = vmand %vm1029, %vm1091
      %v1134 = vsel %vm1133, 1, 0
      %v1135 = vlaneseq
      %v1136 = vshrl.u32 %v1135, 7
      %v1137 = vsub.s32 0, %v1136
      %v1138 = vrot.slane %v1134, %v1137
      %v1139 = vlaneseq
      %v1140 = vshrl.u32 %v1139, 7
      %v1141 = vsub.s32 1, %v1140
      %v1142 = vrot.slane %v1134, %v1141
      %vm1143 = vcmp.eq.s32.totalorder %v1138, 1
      %vm1144 = vcmp.eq.s32.totalorder %v1142, 1
      %v1145 = vsel %vm1143, %v1131, 0.0
      %v1146 = vsel %vm1144, %v1132, 0.0
      %s1147 = scalar_lea.vmem %s3, 16
      %v1148 = vld [vmem:[%s1147] sm:$0xff]
      %s1149 = scalar_lea.vmem %s4, 16
      %v1150 = vld [vmem:[%s1149] sm:$0xff]
      %1152 = vset.pattern.permute.xlu0 0
      %1153 = vperm.xlu0 %1152, %v1150
      %v1154 = vpop.permute.xlu0 %1153
      %v1157 = vsel %vm649, %v1148, 0
      %1159 = vmatprep.subr.mxu0 0.0
      %1160 = vmatpush1.msra.mxu0 0.0
      %1161 = vmatprep.subr.mxu0 0.0
      %1162 = vmatpush1.msra.mxu0 0.0
      %1163 = vmatprep.subr.mxu0 0.0
      %1164 = vmatpush1.msra.mxu0 0.0
      %1165 = vmatprep.subr.mxu0 0.0
      %1166 = vmatpush1.msra.mxu0 0.0
      %1167 = vmatprep.subr.mxu0 0.0
      %1168 = vmatpush1.msra.mxu0 0.0
      %1169 = vmatprep.subr.mxu0 0.0
      %1170 = vmatpush1.msra.mxu0 0.0
      %1171 = vmatprep.subr.mxu0 0.0
      %1172 = vmatpush1.msra.mxu0 0.0
      %1173 = vmatprep.subr.mxu0 %v1146
      %1174 = vmatpush1.msra.mxu0 %v1145
      %1175 = vmatprep.subr.mxu0 %v1125
      %1176 = vmatpush1.msra.mxu0 %v1124
      %1177 = vmatprep.subr.mxu0 %v1105
      %1178 = vmatpush1.msra.mxu0 %v1104
      %1179 = vmatprep.subr.mxu0 %v1083
      %1180 = vmatpush1.msra.mxu0 %v1082
      %1181 = vmatprep.subr.mxu0 %v469
      %1182 = vmatpush1.msra.mxu0 %v468
      %1183 = vmatprep.subr.mxu0 %v1063
      %1184 = vmatpush1.msra.mxu0 %v1062
      %1185 = vmatprep.subr.mxu0 %v1043
      %1186 = vmatpush1.msra.mxu0 %v1042
      %1187 = vmatprep.subr.mxu0 %v1021
      %1188 = vmatpush1.msra.mxu0 %v1020
      %1189 = vmatprep.subr.mxu0 %v1001
      %1190 = vmatpush1.msra.mxu0 %v1000
      %1191 = vmatprep.subr.mxu0 0.0
      %1192 = vmatpush2.msra.mxu0 0.0
      %1193 = vmatprep.subr.mxu0 0.0
      %1194 = vmatpush2.msra.mxu0 0.0
      %1195 = vmatprep.subr.mxu0 0.0
      %1196 = vmatpush2.msra.mxu0 0.0
      %1197 = vmatprep.subr.mxu0 0.0
      %1198 = vmatpush2.msra.mxu0 0.0
      %1199 = vmatprep.subr.mxu0 0.0
      %1200 = vmatpush2.msra.mxu0 0.0
      %1201 = vmatprep.subr.mxu0 0.0
      %1202 = vmatpush2.msra.mxu0 0.0
      %1203 = vmatprep.subr.mxu0 0.0
      %1204 = vmatpush2.msra.mxu0 0.0
      %1205 = vmatprep.subr.mxu0 0.0
      %1206 = vmatpush2.msra.mxu0 0.0
      %1207 = vmatprep.subr.mxu0 0.0
      %1208 = vmatpush2.msra.mxu0 0.0
      %1209 = vmatprep.subr.mxu0 0.0
      %1210 = vmatpush2.msra.mxu0 0.0
      %1211 = vmatprep.subr.mxu0 0.0
      %1212 = vmatpush2.msra.mxu0 0.0
      %1213 = vmatprep.subr.mxu0 0.0
      %1214 = vmatpush2.msra.mxu0 0.0
      %1215 = vmatprep.subr.mxu0 0.0
      %1216 = vmatpush2.msra.mxu0 0.0
      %1217 = vmatprep.subr.mxu0 0.0
      %1218 = vmatpush2.msra.mxu0 0.0
      %1219 = vmatprep.subr.mxu0 0.0
      %1220 = vmatpush2.msra.mxu0 0.0
      %1221 = vmatprep.subr.mxu0 0.0
      %1222 = vmatpush2.msra.mxu0 0.0
      %1223 = vmatprep.mubr.f32.mxu0 0.0
      %1224 = vmatmul.mubr.f32.gmra.mxu0 %v1157
      %v1225 = vpop.f32.mrf.mxu0
      %v1226 = vadd.f32 %v1154, %v1225
      %v1227 = vpop.f32.mrf.mxu0
      %v1228 = vadd.f32 %v1154, %v1227
      %1229 = vdwg.mxu0
      %v1230 = vmax.f32 %v1226, 0.0
      %v1231 = vmax.f32 %v1228, 0.0
      %1232 = vrot.lane.b32.xlu0 %v1230, 68
      %v1233 = vpop.permute.xlu0 %1232
      %1234 = vrot.lane.b32.xlu0 %v1231, 68
      %v1235 = vpop.permute.xlu0 %1234
      %vm1236 = vcmp.lt.s32.totalorder %v477, 68
      %v1237 = vsel %vm1236, %v1233, %v1235
      %v1238 = vsel %vm1236, %v1235, %v1233
      %vm1239 = vcmp.ge.s32.totalorder %v470, 4
      %vm1240 = vcmp.ge.s32.totalorder %v471, 4
      %vm1241 = vmand %vm1239, %vm1240
      %v1242 = vsel %vm1241, 1, 0
      %v1243 = vlaneseq
      %v1244 = vshrl.u32 %v1243, 7
      %v1245 = vsub.s32 0, %v1244
      %v1246 = vrot.slane %v1242, %v1245
      %v1247 = vlaneseq
      %v1248 = vshrl.u32 %v1247, 7
      %v1249 = vsub.s32 1, %v1248
      %v1250 = vrot.slane %v1242, %v1249
      %vm1251 = vcmp.eq.s32.totalorder %v1246, 1
      %vm1252 = vcmp.eq.s32.totalorder %v1250, 1
      %v1253 = vsel %vm1251, %v1238, 0.0
      %v1254 = vsel %vm1252, %v1237, 0.0
      %1255 = vrot.lane.b32.xlu0 %v1230, 64
      %v1256 = vpop.permute.xlu0 %1255
      %1257 = vrot.lane.b32.xlu0 %v1231, 64
      %v1258 = vpop.permute.xlu0 %1257
      %vm1259 = vcmp.lt.s32.totalorder %v477, 64
      %v1260 = vsel %vm1259, %v1256, %v1258
      %v1261 = vsel %vm1259, %v1258, %v1256
      %v1262 = vsel %vm1240, 1, 0
      %v1263 = vlaneseq
      %v1264 = vshrl.u32 %v1263, 7
      %v1265 = vsub.s32 0, %v1264
      %v1266 = vrot.slane %v1262, %v1265
      %v1267 = vlaneseq
      %v1268 = vshrl.u32 %v1267, 7
      %v1269 = vsub.s32 1, %v1268
      %v1270 = vrot.slane %v1262, %v1269
      %vm1271 = vcmp.eq.s32.totalorder %v1266, 1
      %vm1272 = vcmp.eq.s32.totalorder %v1270, 1
      %v1273 = vsel %vm1271, %v1261, 0.0
      %v1274 = vsel %vm1272, %v1260, 0.0
      %1275 = vrot.lane.b32.xlu0 %v1230, 60
      %v1276 = vpop.permute.xlu0 %1275
      %1277 = vrot.lane.b32.xlu0 %v1231, 60
      %v1278 = vpop.permute.xlu0 %1277
      %vm1279 = vcmp.lt.s32.totalorder %v477, 60
      %v1280 = vsel %vm1279, %v1276, %v1278
      %v1281 = vsel %vm1279, %v1278, %v1276
      %vm1282 = vcmp.lt.s32.totalorder %v470, 12
      %vm1283 = vmand %vm1282, %vm1240
      %v1284 = vsel %vm1283, 1, 0
      %v1285 = vlaneseq
      %v1286 = vshrl.u32 %v1285, 7
      %v1287 = vsub.s32 0, %v1286
      %v1288 = vrot.slane %v1284, %v1287
      %v1289 = vlaneseq
      %v1290 = vshrl.u32 %v1289, 7
      %v1291 = vsub.s32 1, %v1290
      %v1292 = vrot.slane %v1284, %v1291
      %vm1293 = vcmp.eq.s32.totalorder %v1288, 1
      %vm1294 = vcmp.eq.s32.totalorder %v1292, 1
      %v1295 = vsel %vm1293, %v1281, 0.0
      %v1296 = vsel %vm1294, %v1280, 0.0
      %1297 = vrot.lane.b32.xlu0 %v1230, 4
      %v1298 = vpop.permute.xlu0 %1297
      %1299 = vrot.lane.b32.xlu0 %v1231, 4
      %v1300 = vpop.permute.xlu0 %1299
      %vm1301 = vcmp.lt.s32.totalorder %v477, 4
      %v1302 = vsel %vm1301, %v1298, %v1300
      %v1303 = vsel %vm1301, %v1300, %v1298
      %v1304 = vsel %vm1239, 1, 0
      %v1305 = vlaneseq
      %v1306 = vshrl.u32 %v1305, 7
      %v1307 = vsub.s32 0, %v1306
      %v1308 = vrot.slane %v1304, %v1307
      %v1309 = vlaneseq
      %v1310 = vshrl.u32 %v1309, 7
      %v1311 = vsub.s32 1, %v1310
      %v1312 = vrot.slane %v1304, %v1311
      %vm1313 = vcmp.eq.s32.totalorder %v1308, 1
      %vm1314 = vcmp.eq.s32.totalorder %v1312, 1
      %v1315 = vsel %vm1313, %v1303, 0.0
      %v1316 = vsel %vm1314, %v1302, 0.0
      %1317 = vrot.lane.b32.xlu0 %v1230, 124
      %v1318 = vpop.permute.xlu0 %1317
      %1319 = vrot.lane.b32.xlu0 %v1231, 124
      %v1320 = vpop.permute.xlu0 %1319
      %vm1321 = vcmp.lt.s32.totalorder %v477, 124
      %v1322 = vsel %vm1321, %v1318, %v1320
      %v1323 = vsel %vm1321, %v1320, %v1318
      %v1324 = vsel %vm1282, 1, 0
      %v1325 = vlaneseq
      %v1326 = vshrl.u32 %v1325, 7
      %v1327 = vsub.s32 0, %v1326
      %v1328 = vrot.slane %v1324, %v1327
      %v1329 = vlaneseq
      %v1330 = vshrl.u32 %v1329, 7
      %v1331 = vsub.s32 1, %v1330
      %v1332 = vrot.slane %v1324, %v1331
      %vm1333 = vcmp.eq.s32.totalorder %v1328, 1
      %vm1334 = vcmp.eq.s32.totalorder %v1332, 1
      %v1335 = vsel %vm1333, %v1322, 0.0
      %v1336 = vsel %vm1334, %v1323, 0.0
      %vm1337 = vcmp.lt.s32.totalorder %v471, 12
      %vm1338 = vmand %vm1239, %vm1337
      %v1339 = vsel %vm1338, 1, 0
      %v1340 = vlaneseq
      %v1341 = vshrl.u32 %v1340, 7
      %v1342 = vsub.s32 0, %v1341
      %v1343 = vrot.slane %v1339, %v1342
      %v1344 = vlaneseq
      %v1345 = vshrl.u32 %v1344, 7
      %v1346 = vsub.s32 1, %v1345
      %v1347 = vrot.slane %v1339, %v1346
      %vm1348 = vcmp.eq.s32.totalorder %v1343, 1
      %vm1349 = vcmp.eq.s32.totalorder %v1347, 1
      %v1350 = vsel %vm1348, %v1237, 0.0
      %v1351 = vsel %vm1349, %v1238, 0.0
      %v1352 = vsel %vm1337, 1, 0
      %v1353 = vlaneseq
      %v1354 = vshrl.u32 %v1353, 7
      %v1355 = vsub.s32 0, %v1354
      %v1356 = vrot.slane %v1352, %v1355
      %v1357 = vlaneseq
      %v1358 = vshrl.u32 %v1357, 7
      %v1359 = vsub.s32 1, %v1358
      %v1360 = vrot.slane %v1352, %v1359
      %vm1361 = vcmp.eq.s32.totalorder %v1356, 1
      %vm1362 = vcmp.eq.s32.totalorder %v1360, 1
      %v1363 = vsel %vm1361, %v1260, 0.0
      %v1364 = vsel %vm1362, %v1261, 0.0
      %vm1365 = vmand %vm1282, %vm1337
      %v1366 = vsel %vm1365, 1, 0
      %v1367 = vlaneseq
      %v1368 = vshrl.u32 %v1367, 7
      %v1369 = vsub.s32 0, %v1368
      %v1370 = vrot.slane %v1366, %v1369
      %v1371 = vlaneseq
      %v1372 = vshrl.u32 %v1371, 7
      %v1373 = vsub.s32 1, %v1372
      %v1374 = vrot.slane %v1366, %v1373
      %vm1375 = vcmp.eq.s32.totalorder %v1370, 1
      %vm1376 = vcmp.eq.s32.totalorder %v1374, 1
      %v1377 = vsel %vm1375, %v1280, 0.0
      %v1378 = vsel %vm1376, %v1281, 0.0
      %s1379 = scalar_lea.vmem %s3, 24
      %v1380 = vld [vmem:[%s1379] sm:$0xff]
      %s1381 = scalar_lea.vmem %s4, 24
      %v1382 = vld [vmem:[%s1381] sm:$0xff]
      %1384 = vset.pattern.permute.xlu0 0
      %1385 = vperm.xlu0 %1384, %v1382
      %v1386 = vpop.permute.xlu0 %1385
      %v1389 = vsel %vm649, %v1380, 0
      %1391 = vmatprep.subr.mxu0 0.0
      %1392 = vmatpush1.msra.mxu0 0.0
      %1393 = vmatprep.subr.mxu0 0.0
      %1394 = vmatpush1.msra.mxu0 0.0
      %1395 = vmatprep.subr.mxu0 0.0
      %1396 = vmatpush1.msra.mxu0 0.0
      %1397 = vmatprep.subr.mxu0 0.0
      %1398 = vmatpush1.msra.mxu0 0.0
      %1399 = vmatprep.subr.mxu0 0.0
      %1400 = vmatpush1.msra.mxu0 0.0
      %1401 = vmatprep.subr.mxu0 0.0
      %1402 = vmatpush1.msra.mxu0 0.0
      %1403 = vmatprep.subr.mxu0 0.0
      %1404 = vmatpush1.msra.mxu0 0.0
      %1405 = vmatprep.subr.mxu0 %v1378
      %1406 = vmatpush1.msra.mxu0 %v1377
      %1407 = vmatprep.subr.mxu0 %v1364
      %1408 = vmatpush1.msra.mxu0 %v1363
      %1409 = vmatprep.subr.mxu0 %v1351
      %1410 = vmatpush1.msra.mxu0 %v1350
      %1411 = vmatprep.subr.mxu0 %v1336
      %1412 = vmatpush1.msra.mxu0 %v1335
      %1413 = vmatprep.subr.mxu0 %v1231
      %1414 = vmatpush1.msra.mxu0 %v1230
      %1415 = vmatprep.subr.mxu0 %v1316
      %1416 = vmatpush1.msra.mxu0 %v1315
      %1417 = vmatprep.subr.mxu0 %v1296
      %1418 = vmatpush1.msra.mxu0 %v1295
      %1419 = vmatprep.subr.mxu0 %v1274
      %1420 = vmatpush1.msra.mxu0 %v1273
      %1421 = vmatprep.subr.mxu0 %v1254
      %1422 = vmatpush1.msra.mxu0 %v1253
      %1423 = vmatprep.subr.mxu0 0.0
      %1424 = vmatpush2.msra.mxu0 0.0
      %1425 = vmatprep.subr.mxu0 0.0
      %1426 = vmatpush2.msra.mxu0 0.0
      %1427 = vmatprep.subr.mxu0 0.0
      %1428 = vmatpush2.msra.mxu0 0.0
      %1429 = vmatprep.subr.mxu0 0.0
      %1430 = vmatpush2.msra.mxu0 0.0
      %1431 = vmatprep.subr.mxu0 0.0
      %1432 = vmatpush2.msra.mxu0 0.0
      %1433 = vmatprep.subr.mxu0 0.0
      %1434 = vmatpush2.msra.mxu0 0.0
      %1435 = vmatprep.subr.mxu0 0.0
      %1436 = vmatpush2.msra.mxu0 0.0
      %1437 = vmatprep.subr.mxu0 0.0
      %1438 = vmatpush2.msra.mxu0 0.0
      %1439 = vmatprep.subr.mxu0 0.0
      %1440 = vmatpush2.msra.mxu0 0.0
      %1441 = vmatprep.subr.mxu0 0.0
      %1442 = vmatpush2.msra.mxu0 0.0
      %1443 = vmatprep.subr.mxu0 0.0
      %1444 = vmatpush2.msra.mxu0 0.0
      %1445 = vmatprep.subr.mxu0 0.0
      %1446 = vmatpush2.msra.mxu0 0.0
      %1447 = vmatprep.subr.mxu0 0.0
      %1448 = vmatpush2.msra.mxu0 0.0
      %1449 = vmatprep.subr.mxu0 0.0
      %1450 = vmatpush2.msra.mxu0 0.0
      %1451 = vmatprep.subr.mxu0 0.0
      %1452 = vmatpush2.msra.mxu0 0.0
      %1453 = vmatprep.subr.mxu0 0.0
      %1454 = vmatpush2.msra.mxu0 0.0
      %1455 = vmatprep.mubr.f32.mxu0 0.0
      %1456 = vmatmul.mubr.f32.gmra.mxu0 %v1389
      %v1457 = vpop.f32.mrf.mxu0
      %v1458 = vadd.f32 %v1386, %v1457
      %v1459 = vpop.f32.mrf.mxu0
      %v1460 = vadd.f32 %v1386, %v1459
      %1461 = vdwg.mxu0
      %v1462 = vmax.f32 %v1458, 0.0
      %v1463 = vmax.f32 %v1460, 0.0
      %v1464 = vld [vmem:[%s5] sm:$0xff]
      %v1465 = vld [vmem:[%s6] sm:$0xff]
      %vm1466 = vcmask 64512
      %v1468 = vsel %vm1466, %v1465, 0
      %1470 = vmatprep.subr.mxu0 0.0
      %1471 = vmatpush1.msra.mxu0 0.0
      %1472 = vmatprep.subr.mxu0 0.0
      %1473 = vmatpush1.msra.mxu0 0.0
      %1474 = vmatprep.subr.mxu0 0.0
      %1475 = vmatpush1.msra.mxu0 0.0
      %1476 = vmatprep.subr.mxu0 0.0
      %1477 = vmatpush1.msra.mxu0 0.0
      %1478 = vmatprep.subr.mxu0 0.0
      %1479 = vmatpush1.msra.mxu0 0.0
      %1480 = vmatprep.subr.mxu0 0.0
      %1481 = vmatpush1.msra.mxu0 0.0
      %1482 = vmatprep.subr.mxu0 0.0
      %1483 = vmatpush1.msra.mxu0 0.0
      %1484 = vmatprep.subr.mxu0 0.0
      %1485 = vmatpush1.msra.mxu0 0.0
      %1486 = vmatprep.subr.mxu0 0.0
      %1487 = vmatpush1.msra.mxu0 0.0
      %1488 = vmatprep.subr.mxu0 0.0
      %1489 = vmatpush1.msra.mxu0 0.0
      %1490 = vmatprep.subr.mxu0 0.0
      %1491 = vmatpush1.msra.mxu0 0.0
      %1492 = vmatprep.subr.mxu0 0.0
      %1493 = vmatpush1.msra.mxu0 0.0
      %1494 = vmatprep.subr.mxu0 0.0
      %1495 = vmatpush1.msra.mxu0 0.0
      %1496 = vmatprep.subr.mxu0 0.0
      %1497 = vmatpush1.msra.mxu0 0.0
      %1498 = vmatprep.subr.mxu0 0.0
      %1499 = vmatpush1.msra.mxu0 0.0
      %1500 = vmatprep.subr.mxu0 %v1463
      %1501 = vmatpush1.msra.mxu0 %v1462
      %1502 = vmatprep.subr.mxu0 0.0
      %1503 = vmatpush2.msra.mxu0 0.0
      %1504 = vmatprep.subr.mxu0 0.0
      %1505 = vmatpush2.msra.mxu0 0.0
      %1506 = vmatprep.subr.mxu0 0.0
      %1507 = vmatpush2.msra.mxu0 0.0
      %1508 = vmatprep.subr.mxu0 0.0
      %1509 = vmatpush2.msra.mxu0 0.0
      %1510 = vmatprep.subr.mxu0 0.0
      %1511 = vmatpush2.msra.mxu0 0.0
      %1512 = vmatprep.subr.mxu0 0.0
      %1513 = vmatpush2.msra.mxu0 0.0
      %1514 = vmatprep.subr.mxu0 0.0
      %1515 = vmatpush2.msra.mxu0 0.0
      %1516 = vmatprep.subr.mxu0 0.0
      %1517 = vmatpush2.msra.mxu0 0.0
      %1518 = vmatprep.subr.mxu0 0.0
      %1519 = vmatpush2.msra.mxu0 0.0
      %1520 = vmatprep.subr.mxu0 0.0
      %1521 = vmatpush2.msra.mxu0 0.0
      %1522 = vmatprep.subr.mxu0 0.0
      %1523 = vmatpush2.msra.mxu0 0.0
      %1524 = vmatprep.subr.mxu0 0.0
      %1525 = vmatpush2.msra.mxu0 0.0
      %1526 = vmatprep.subr.mxu0 0.0
      %1527 = vmatpush2.msra.mxu0 0.0
      %1528 = vmatprep.subr.mxu0 0.0
      %1529 = vmatpush2.msra.mxu0 0.0
      %1530 = vmatprep.subr.mxu0 0.0
      %1531 = vmatpush2.msra.mxu0 0.0
      %1532 = vmatprep.subr.mxu0 0.0
      %1533 = vmatpush2.msra.mxu0 0.0
      %1534 = vmatprep.mubr.f32.mxu0 0.0
      %1535 = vmatmul.mubr.f32.gmra.mxu0 %v1468
      %v1536 = vpop.f32.mrf.mxu0
      %v1537 = vadd.f32 0.0, %v1536
      %v1538 = vpop.f32.mrf.mxu0
      %v1539 = vadd.f32 0.0, %v1538
      %1540 = vdwg.mxu0
      %v1542 = vsel %vm1466, %v1464, 0
      %1544 = vmatprep.subr.mxu0 0.0
      %1545 = vmatpush1.msra.mxu0 0.0
      %1546 = vmatprep.subr.mxu0 0.0
      %1547 = vmatpush1.msra.mxu0 0.0
      %1548 = vmatprep.subr.mxu0 0.0
      %1549 = vmatpush1.msra.mxu0 0.0
      %1550 = vmatprep.subr.mxu0 0.0
      %1551 = vmatpush1.msra.mxu0 0.0
      %1552 = vmatprep.subr.mxu0 0.0
      %1553 = vmatpush1.msra.mxu0 0.0
      %1554 = vmatprep.subr.mxu0 0.0
      %1555 = vmatpush1.msra.mxu0 0.0
      %1556 = vmatprep.subr.mxu0 0.0
      %1557 = vmatpush1.msra.mxu0 0.0
      %1558 = vmatprep.subr.mxu0 0.0
      %1559 = vmatpush1.msra.mxu0 0.0
      %1560 = vmatprep.subr.mxu0 0.0
      %1561 = vmatpush1.msra.mxu0 0.0
      %1562 = vmatprep.subr.mxu0 0.0
      %1563 = vmatpush1.msra.mxu0 0.0
      %1564 = vmatprep.subr.mxu0 0.0
      %1565 = vmatpush1.msra.mxu0 0.0
      %1566 = vmatprep.subr.mxu0 0.0
      %1567 = vmatpush1.msra.mxu0 0.0
      %1568 = vmatprep.subr.mxu0 0.0
      %1569 = vmatpush1.msra.mxu0 0.0
      %1570 = vmatprep.subr.mxu0 0.0
      %1571 = vmatpush1.msra.mxu0 0.0
      %1572 = vmatprep.subr.mxu0 0.0
      %1573 = vmatpush1.msra.mxu0 0.0
      %1574 = vmatprep.subr.mxu0 %v978
      %1575 = vmatpush1.msra.mxu0 %v977
      %1576 = vmatprep.subr.mxu0 0.0
      %1577 = vmatpush2.msra.mxu0 0.0
      %1578 = vmatprep.subr.mxu0 0.0
      %1579 = vmatpush2.msra.mxu0 0.0
      %1580 = vmatprep.subr.mxu0 0.0
      %1581 = vmatpush2.msra.mxu0 0.0
      %1582 = vmatprep.subr.mxu0 0.0
      %1583 = vmatpush2.msra.mxu0 0.0
      %1584 = vmatprep.subr.mxu0 0.0
      %1585 = vmatpush2.msra.mxu0 0.0
      %1586 = vmatprep.subr.mxu0 0.0
      %1587 = vmatpush2.msra.mxu0 0.0
      %1588 = vmatprep.subr.mxu0 0.0
      %1589 = vmatpush2.msra.mxu0 0.0
      %1590 = vmatprep.subr.mxu0 0.0
      %1591 = vmatpush2.msra.mxu0 0.0
      %1592 = vmatprep.subr.mxu0 0.0
      %1593 = vmatpush2.msra.mxu0 0.0
      %1594 = vmatprep.subr.mxu0 0.0
      %1595 = vmatpush2.msra.mxu0 0.0
      %1596 = vmatprep.subr.mxu0 0.0
      %1597 = vmatpush2.msra.mxu0 0.0
      %1598 = vmatprep.subr.mxu0 0.0
      %1599 = vmatpush2.msra.mxu0 0.0
      %1600 = vmatprep.subr.mxu0 0.0
      %1601 = vmatpush2.msra.mxu0 0.0
      %1602 = vmatprep.subr.mxu0 0.0
      %1603 = vmatpush2.msra.mxu0 0.0
      %1604 = vmatprep.subr.mxu0 0.0
      %1605 = vmatpush2.msra.mxu0 0.0
      %1606 = vmatprep.subr.mxu0 0.0
      %1607 = vmatpush2.msra.mxu0 0.0
      %1608 = vmatprep.mubr.f32.mxu0 0.0
      %1609 = vmatmul.mubr.f32.gmra.mxu0 %v1542
      %v1610 = vpop.f32.mrf.mxu0
      %v1611 = vadd.f32 %v1537, %v1610
      %v1612 = vpop.f32.mrf.mxu0
      %v1613 = vadd.f32 %v1539, %v1612
      %1614 = vdwg.mxu0
      %v1615 = vld [vmem:[%s7] sm:$0xff]
      %1617 = vset.pattern.permute.xlu0 0
      %1618 = vperm.xlu0 %1617, %v1615
      %v1619 = vpop.permute.xlu0 %1618
      %v1621 = vadd.f32 %v1611, %v1619
      %v1622 = vadd.f32 %v1613, %v1619
      %v1623 = vmax.f32 %v1621, 0.0
      %v1624 = vmax.f32 %v1622, 0.0
      %v1625 = vadd.f32 %v1623, %v468
      %v1626 = vadd.f32 %v1624, %v469
      %1627 = vrot.lane.b32.xlu0 %v1625, 17
      %v1628 = vpop.permute.xlu0 %1627
      %1629 = vrot.lane.b32.xlu0 %v1626, 17
      %v1630 = vpop.permute.xlu0 %1629
      %v1631 = vsel %vm478, %v1628, %v1630
      %v1632 = vsel %vm478, %v1630, %v1628
      %v1633 = vsel %vm493, %v1632, 0.0
      %v1634 = vsel %vm494, %v1631, 0.0
      %1635 = vrot.lane.b32.xlu0 %v1625, 16
      %v1636 = vpop.permute.xlu0 %1635
      %1637 = vrot.lane.b32.xlu0 %v1626, 16
      %v1638 = vpop.permute.xlu0 %1637
      %v1639 = vsel %vm501, %v1636, %v1638
      %v1640 = vsel %vm501, %v1638, %v1636
      %v1641 = vsel %vm513, %v1640, 0.0
      %v1642 = vsel %vm514, %v1639, 0.0
      %1643 = vrot.lane.b32.xlu0 %v1625, 15
      %v1644 = vpop.permute.xlu0 %1643
      %1645 = vrot.lane.b32.xlu0 %v1626, 15
      %v1646 = vpop.permute.xlu0 %1645
      %v1647 = vsel %vm521, %v1644, %v1646
      %v1648 = vsel %vm521, %v1646, %v1644
      %v1649 = vsel %vm535, %v1648, 0.0
      %v1650 = vsel %vm536, %v1647, 0.0
      %1651 = vrot.lane.b32.xlu0 %v1625, 1
      %v1652 = vpop.permute.xlu0 %1651
      %1653 = vrot.lane.b32.xlu0 %v1626, 1
      %v1654 = vpop.permute.xlu0 %1653
      %v1655 = vsel %vm543, %v1652, %v1654
      %v1656 = vsel %vm543, %v1654, %v1652
      %v1657 = vsel %vm555, %v1656, 0.0
      %v1658 = vsel %vm556, %v1655, 0.0
      %1659 = vrot.lane.b32.xlu0 %v1625, 127
      %v1660 = vpop.permute.xlu0 %1659
      %1661 = vrot.lane.b32.xlu0 %v1626, 127
      %v1662 = vpop.permute.xlu0 %1661
      %v1663 = vsel %vm563, %v1660, %v1662
      %v1664 = vsel %vm563, %v1662, %v1660
      %v1665 = vsel %vm575, %v1663, 0.0
      %v1666 = vsel %vm576, %v1664, 0.0
      %1667 = vrot.lane.b32.xlu0 %v1625, 113
      %v1668 = vpop.permute.xlu0 %1667
      %1669 = vrot.lane.b32.xlu0 %v1626, 113
      %v1670 = vpop.permute.xlu0 %1669
      %v1671 = vsel %vm583, %v1668, %v1670
      %v1672 = vsel %vm583, %v1670, %v1668
      %v1673 = vsel %vm597, %v1671, 0.0
      %v1674 = vsel %vm598, %v1672, 0.0
      %1675 = vrot.lane.b32.xlu0 %v1625, 112
      %v1676 = vpop.permute.xlu0 %1675
      %1677 = vrot.lane.b32.xlu0 %v1626, 112
      %v1678 = vpop.permute.xlu0 %1677
      %v1679 = vsel %vm605, %v1676, %v1678
      %v1680 = vsel %vm605, %v1678, %v1676
      %v1681 = vsel %vm617, %v1679, 0.0
      %v1682 = vsel %vm618, %v1680, 0.0
      %1683 = vrot.lane.b32.xlu0 %v1625, 111
      %v1684 = vpop.permute.xlu0 %1683
      %1685 = vrot.lane.b32.xlu0 %v1626, 111
      %v1686 = vpop.permute.xlu0 %1685
      %v1687 = vsel %vm625, %v1684, %v1686
      %v1688 = vsel %vm625, %v1686, %v1684
      %v1689 = vsel %vm638, %v1687, 0.0
      %v1690 = vsel %vm639, %v1688, 0.0
      %s1691 = scalar_lea.vmem %s3, 32
      %v1692 = vld [vmem:[%s1691] sm:$0xff]
      %s1693 = scalar_lea.vmem %s4, 32
      %v1694 = vld [vmem:[%s1693] sm:$0xff]
      %1696 = vset.pattern.permute.xlu0 0
      %1697 = vperm.xlu0 %1696, %v1694
      %v1698 = vpop.permute.xlu0 %1697
      %v1701 = vsel %vm649, %v1692, 0
      %1703 = vmatprep.subr.mxu0 0.0
      %1704 = vmatpush1.msra.mxu0 0.0
      %1705 = vmatprep.subr.mxu0 0.0
      %1706 = vmatpush1.msra.mxu0 0.0
      %1707 = vmatprep.subr.mxu0 0.0
      %1708 = vmatpush1.msra.mxu0 0.0
      %1709 = vmatprep.subr.mxu0 0.0
      %1710 = vmatpush1.msra.mxu0 0.0
      %1711 = vmatprep.subr.mxu0 0.0
      %1712 = vmatpush1.msra.mxu0 0.0
      %1713 = vmatprep.subr.mxu0 0.0
      %1714 = vmatpush1.msra.mxu0 0.0
      %1715 = vmatprep.subr.mxu0 0.0
      %1716 = vmatpush1.msra.mxu0 0.0
      %1717 = vmatprep.subr.mxu0 %v1690
      %1718 = vmatpush1.msra.mxu0 %v1689
      %1719 = vmatprep.subr.mxu0 %v1682
      %1720 = vmatpush1.msra.mxu0 %v1681
      %1721 = vmatprep.subr.mxu0 %v1674
      %1722 = vmatpush1.msra.mxu0 %v1673
      %1723 = vmatprep.subr.mxu0 %v1666
      %1724 = vmatpush1.msra.mxu0 %v1665
      %1725 = vmatprep.subr.mxu0 %v1626
      %1726 = vmatpush1.msra.mxu0 %v1625
      %1727 = vmatprep.subr.mxu0 %v1658
      %1728 = vmatpush1.msra.mxu0 %v1657
      %1729 = vmatprep.subr.mxu0 %v1650
      %1730 = vmatpush1.msra.mxu0 %v1649
      %1731 = vmatprep.subr.mxu0 %v1642
      %1732 = vmatpush1.msra.mxu0 %v1641
      %1733 = vmatprep.subr.mxu0 %v1634
      %1734 = vmatpush1.msra.mxu0 %v1633
      %1735 = vmatprep.subr.mxu0 0.0
      %1736 = vmatpush2.msra.mxu0 0.0
      %1737 = vmatprep.subr.mxu0 0.0
      %1738 = vmatpush2.msra.mxu0 0.0
      %1739 = vmatprep.subr.mxu0 0.0
      %1740 = vmatpush2.msra.mxu0 0.0
      %1741 = vmatprep.subr.mxu0 0.0
      %1742 = vmatpush2.msra.mxu0 0.0
      %1743 = vmatprep.subr.mxu0 0.0
      %1744 = vmatpush2.msra.mxu0 0.0
      %1745 = vmatprep.subr.mxu0 0.0
      %1746 = vmatpush2.msra.mxu0 0.0
      %1747 = vmatprep.subr.mxu0 0.0
      %1748 = vmatpush2.msra.mxu0 0.0
      %1749 = vmatprep.subr.mxu0 0.0
      %1750 = vmatpush2.msra.mxu0 0.0
      %1751 = vmatprep.subr.mxu0 0.0
      %1752 = vmatpush2.msra.mxu0 0.0
      %1753 = vmatprep.subr.mxu0 0.0
      %1754 = vmatpush2.msra.mxu0 0.0
      %1755 = vmatprep.subr.mxu0 0.0
      %1756 = vmatpush2.msra.mxu0 0.0
      %1757 = vmatprep.subr.mxu0 0.0
      %1758 = vmatpush2.msra.mxu0 0.0
      %1759 = vmatprep.subr.mxu0 0.0
      %1760 = vmatpush2.msra.mxu0 0.0
      %1761 = vmatprep.subr.mxu0 0.0
      %1762 = vmatpush2.msra.mxu0 0.0
      %1763 = vmatprep.subr.mxu0 0.0
      %1764 = vmatpush2.msra.mxu0 0.0
      %1765 = vmatprep.subr.mxu0 0.0
      %1766 = vmatpush2.msra.mxu0 0.0
      %1767 = vmatprep.mubr.f32.mxu0 0.0
      %1768 = vmatmul.mubr.f32.gmra.mxu0 %v1701
      %v1769 = vpop.f32.mrf.mxu0
      %v1770 = vadd.f32 %v1698, %v1769
      %v1771 = vpop.f32.mrf.mxu0
      %v1772 = vadd.f32 %v1698, %v1771
      %1773 = vdwg.mxu0
      %v1774 = vmax.f32 %v1770, 0.0
      %v1775 = vmax.f32 %v1772, 0.0
      %1776 = vrot.lane.b32.xlu0 %v1774, 17
      %v1777 = vpop.permute.xlu0 %1776
      %1778 = vrot.lane.b32.xlu0 %v1775, 17
      %v1779 = vpop.permute.xlu0 %1778
      %v1780 = vsel %vm478, %v1777, %v1779
      %v1781 = vsel %vm478, %v1779, %v1777
      %v1782 = vsel %vm493, %v1781, 0.0
      %v1783 = vsel %vm494, %v1780, 0.0
      %1784 = vrot.lane.b32.xlu0 %v1774, 16
      %v1785 = vpop.permute.xlu0 %1784
      %1786 = vrot.lane.b32.xlu0 %v1775, 16
      %v1787 = vpop.permute.xlu0 %1786
      %v1788 = vsel %vm501, %v1785, %v1787
      %v1789 = vsel %vm501, %v1787, %v1785
      %v1790 = vsel %vm513, %v1789, 0.0
      %v1791 = vsel %vm514, %v1788, 0.0
      %1792 = vrot.lane.b32.xlu0 %v1774, 15
      %v1793 = vpop.permute.xlu0 %1792
      %1794 = vrot.lane.b32.xlu0 %v1775, 15
      %v1795 = vpop.permute.xlu0 %1794
      %v1796 = vsel %vm521, %v1793, %v1795
      %v1797 = vsel %vm521, %v1795, %v1793
      %v1798 = vsel %vm535, %v1797, 0.0
      %v1799 = vsel %vm536, %v1796, 0.0
      %1800 = vrot.lane.b32.xlu0 %v1774, 1
      %v1801 = vpop.permute.xlu0 %1800
      %1802 = vrot.lane.b32.xlu0 %v1775, 1
      %v1803 = vpop.permute.xlu0 %1802
      %v1804 = vsel %vm543, %v1801, %v1803
      %v1805 = vsel %vm543, %v1803, %v1801
      %v1806 = vsel %vm555, %v1805, 0.0
      %v1807 = vsel %vm556, %v1804, 0.0
      %1808 = vrot.lane.b32.xlu0 %v1774, 127
      %v1809 = vpop.permute.xlu0 %1808
      %1810 = vrot.lane.b32.xlu0 %v1775, 127
      %v1811 = vpop.permute.xlu0 %1810
      %v1812 = vsel %vm563, %v1809, %v1811
      %v1813 = vsel %vm563, %v1811, %v1809
      %v1814 = vsel %vm575, %v1812, 0.0
      %v1815 = vsel %vm576, %v1813, 0.0
      %1816 = vrot.lane.b32.xlu0 %v1774, 113
      %v1817 = vpop.permute.xlu0 %1816
      %1818 = vrot.lane.b32.xlu0 %v1775, 113
      %v1819 = vpop.permute.xlu0 %1818
      %v1820 = vsel %vm583, %v1817, %v1819
      %v1821 = vsel %vm583, %v1819, %v1817
      %v1822 = vsel %vm597, %v1820, 0.0
      %v1823 = vsel %vm598, %v1821, 0.0
      %1824 = vrot.lane.b32.xlu0 %v1774, 112
      %v1825 = vpop.permute.xlu0 %1824
      %1826 = vrot.lane.b32.xlu0 %v1775, 112
      %v1827 = vpop.permute.xlu0 %1826
      %v1828 = vsel %vm605, %v1825, %v1827
      %v1829 = vsel %vm605, %v1827, %v1825
      %v1830 = vsel %vm617, %v1828, 0.0
      %v1831 = vsel %vm618, %v1829, 0.0
      %1832 = vrot.lane.b32.xlu0 %v1774, 111
      %v1833 = vpop.permute.xlu0 %1832
      %1834 = vrot.lane.b32.xlu0 %v1775, 111
      %v1835 = vpop.permute.xlu0 %1834
      %v1836 = vsel %vm625, %v1833, %v1835
      %v1837 = vsel %vm625, %v1835, %v1833
      %v1838 = vsel %vm638, %v1836, 0.0
      %v1839 = vsel %vm639, %v1837, 0.0
      %s1840 = scalar_lea.vmem %s3, 40
      %v1841 = vld [vmem:[%s1840] sm:$0xff]
      %s1842 = scalar_lea.vmem %s4, 40
      %v1843 = vld [vmem:[%s1842] sm:$0xff]
      %1845 = vset.pattern.permute.xlu0 0
      %1846 = vperm.xlu0 %1845, %v1843
      %v1847 = vpop.permute.xlu0 %1846
      %v1850 = vsel %vm649, %v1841, 0
      %1852 = vmatprep.subr.mxu0 0.0
      %1853 = vmatpush1.msra.mxu0 0.0
      %1854 = vmatprep.subr.mxu0 0.0
      %1855 = vmatpush1.msra.mxu0 0.0
      %1856 = vmatprep.subr.mxu0 0.0
      %1857 = vmatpush1.msra.mxu0 0.0
      %1858 = vmatprep.subr.mxu0 0.0
      %1859 = vmatpush1.msra.mxu0 0.0
      %1860 = vmatprep.subr.mxu0 0.0
      %1861 = vmatpush1.msra.mxu0 0.0
      %1862 = vmatprep.subr.mxu0 0.0
      %1863 = vmatpush1.msra.mxu0 0.0
      %1864 = vmatprep.subr.mxu0 0.0
      %1865 = vmatpush1.msra.mxu0 0.0
      %1866 = vmatprep.subr.mxu0 %v1839
      %1867 = vmatpush1.msra.mxu0 %v1838
      %1868 = vmatprep.subr.mxu0 %v1831
      %1869 = vmatpush1.msra.mxu0 %v1830
      %1870 = vmatprep.subr.mxu0 %v1823
      %1871 = vmatpush1.msra.mxu0 %v1822
      %1872 = vmatprep.subr.mxu0 %v1815
      %1873 = vmatpush1.msra.mxu0 %v1814
      %1874 = vmatprep.subr.mxu0 %v1775
      %1875 = vmatpush1.msra.mxu0 %v1774
      %1876 = vmatprep.subr.mxu0 %v1807
      %1877 = vmatpush1.msra.mxu0 %v1806
      %1878 = vmatprep.subr.mxu0 %v1799
      %1879 = vmatpush1.msra.mxu0 %v1798
      %1880 = vmatprep.subr.mxu0 %v1791
      %1881 = vmatpush1.msra.mxu0 %v1790
      %1882 = vmatprep.subr.mxu0 %v1783
      %1883 = vmatpush1.msra.mxu0 %v1782
      %1884 = vmatprep.subr.mxu0 0.0
      %1885 = vmatpush2.msra.mxu0 0.0
      %1886 = vmatprep.subr.mxu0 0.0
      %1887 = vmatpush2.msra.mxu0 0.0
      %1888 = vmatprep.subr.mxu0 0.0
      %1889 = vmatpush2.msra.mxu0 0.0
      %1890 = vmatprep.subr.mxu0 0.0
      %1891 = vmatpush2.msra.mxu0 0.0
      %1892 = vmatprep.subr.mxu0 0.0
      %1893 = vmatpush2.msra.mxu0 0.0
      %1894 = vmatprep.subr.mxu0 0.0
      %1895 = vmatpush2.msra.mxu0 0.0
      %1896 = vmatprep.subr.mxu0 0.0
      %1897 = vmatpush2.msra.mxu0 0.0
      %1898 = vmatprep.subr.mxu0 0.0
      %1899 = vmatpush2.msra.mxu0 0.0
      %1900 = vmatprep.subr.mxu0 0.0
      %1901 = vmatpush2.msra.mxu0 0.0
      %1902 = vmatprep.subr.mxu0 0.0
      %1903 = vmatpush2.msra.mxu0 0.0
      %1904 = vmatprep.subr.mxu0 0.0
      %1905 = vmatpush2.msra.mxu0 0.0
      %1906 = vmatprep.subr.mxu0 0.0
      %1907 = vmatpush2.msra.mxu0 0.0
      %1908 = vmatprep.subr.mxu0 0.0
      %1909 = vmatpush2.msra.mxu0 0.0
      %1910 = vmatprep.subr.mxu0 0.0
      %1911 = vmatpush2.msra.mxu0 0.0
      %1912 = vmatprep.subr.mxu0 0.0
      %1913 = vmatpush2.msra.mxu0 0.0
      %1914 = vmatprep.subr.mxu0 0.0
      %1915 = vmatpush2.msra.mxu0 0.0
      %1916 = vmatprep.mubr.f32.mxu0 0.0
      %1917 = vmatmul.mubr.f32.gmra.mxu0 %v1850
      %v1918 = vpop.f32.mrf.mxu0
      %v1919 = vadd.f32 %v1847, %v1918
      %v1920 = vpop.f32.mrf.mxu0
      %v1921 = vadd.f32 %v1847, %v1920
      %1922 = vdwg.mxu0
      %v1923 = vadd.f32 %v1919, %v1625
      %v1924 = vadd.f32 %v1921, %v1626
      %v1925 = vmax.f32 %v1923, 0.0
      %v1926 = vmax.f32 %v1924, 0.0
      %1927 = vrot.lane.b32.xlu0 %v1925, 17
      %v1928 = vpop.permute.xlu0 %1927
      %1929 = vrot.lane.b32.xlu0 %v1926, 17
      %v1930 = vpop.permute.xlu0 %1929
      %v1931 = vsel %vm478, %v1928, %v1930
      %v1932 = vsel %vm478, %v1930, %v1928
      %v1933 = vsel %vm493, %v1932, 0.0
      %v1934 = vsel %vm494, %v1931, 0.0
      %1935 = vrot.lane.b32.xlu0 %v1925, 16
      %v1936 = vpop.permute.xlu0 %1935
      %1937 = vrot.lane.b32.xlu0 %v1926, 16
      %v1938 = vpop.permute.xlu0 %1937
      %v1939 = vsel %vm501, %v1936, %v1938
      %v1940 = vsel %vm501, %v1938, %v1936
      %v1941 = vsel %vm513, %v1940, 0.0
      %v1942 = vsel %vm514, %v1939, 0.0
      %1943 = vrot.lane.b32.xlu0 %v1925, 15
      %v1944 = vpop.permute.xlu0 %1943
      %1945 = vrot.lane.b32.xlu0 %v1926, 15
      %v1946 = vpop.permute.xlu0 %1945
      %v1947 = vsel %vm521, %v1944, %v1946
      %v1948 = vsel %vm521, %v1946, %v1944
      %v1949 = vsel %vm535, %v1948, 0.0
      %v1950 = vsel %vm536, %v1947, 0.0
      %1951 = vrot.lane.b32.xlu0 %v1925, 1
      %v1952 = vpop.permute.xlu0 %1951
      %1953 = vrot.lane.b32.xlu0 %v1926, 1
      %v1954 = vpop.permute.xlu0 %1953
      %v1955 = vsel %vm543, %v1952, %v1954
      %v1956 = vsel %vm543, %v1954, %v1952
      %v1957 = vsel %vm555, %v1956, 0.0
      %v1958 = vsel %vm556, %v1955, 0.0
      %1959 = vrot.lane.b32.xlu0 %v1925, 127
      %v1960 = vpop.permute.xlu0 %1959
      %1961 = vrot.lane.b32.xlu0 %v1926, 127
      %v1962 = vpop.permute.xlu0 %1961
      %v1963 = vsel %vm563, %v1960, %v1962
      %v1964 = vsel %vm563, %v1962, %v1960
      %v1965 = vsel %vm575, %v1963, 0.0
      %v1966 = vsel %vm576, %v1964, 0.0
      %1967 = vrot.lane.b32.xlu0 %v1925, 113
      %v1968 = vpop.permute.xlu0 %1967
      %1969 = vrot.lane.b32.xlu0 %v1926, 113
      %v1970 = vpop.permute.xlu0 %1969
      %v1971 = vsel %vm583, %v1968, %v1970
      %v1972 = vsel %vm583, %v1970, %v1968
      %v1973 = vsel %vm597, %v1971, 0.0
      %v1974 = vsel %vm598, %v1972, 0.0
      %1975 = vrot.lane.b32.xlu0 %v1925, 112
      %v1976 = vpop.permute.xlu0 %1975
      %1977 = vrot.lane.b32.xlu0 %v1926, 112
      %v1978 = vpop.permute.xlu0 %1977
      %v1979 = vsel %vm605, %v1976, %v1978
      %v1980 = vsel %vm605, %v1978, %v1976
      %v1981 = vsel %vm617, %v1979, 0.0
      %v1982 = vsel %vm618, %v1980, 0.0
      %1983 = vrot.lane.b32.xlu0 %v1925, 111
      %v1984 = vpop.permute.xlu0 %1983
      %1985 = vrot.lane.b32.xlu0 %v1926, 111
      %v1986 = vpop.permute.xlu0 %1985
      %v1987 = vsel %vm625, %v1984, %v1986
      %v1988 = vsel %vm625, %v1986, %v1984
      %v1989 = vsel %vm638, %v1987, 0.0
      %v1990 = vsel %vm639, %v1988, 0.0
      %s1991 = scalar_lea.vmem %s3, 48
      %v1992 = vld [vmem:[%s1991] sm:$0xff]
      %s1993 = scalar_lea.vmem %s4, 48
      %v1994 = vld [vmem:[%s1993] sm:$0xff]
      %1996 = vset.pattern.permute.xlu0 0
      %1997 = vperm.xlu0 %1996, %v1994
      %v1998 = vpop.permute.xlu0 %1997
      %v2001 = vsel %vm649, %v1992, 0
      %2003 = vmatprep.subr.mxu0 0.0
      %2004 = vmatpush1.msra.mxu0 0.0
      %2005 = vmatprep.subr.mxu0 0.0
      %2006 = vmatpush1.msra.mxu0 0.0
      %2007 = vmatprep.subr.mxu0 0.0
      %2008 = vmatpush1.msra.mxu0 0.0
      %2009 = vmatprep.subr.mxu0 0.0
      %2010 = vmatpush1.msra.mxu0 0.0
      %2011 = vmatprep.subr.mxu0 0.0
      %2012 = vmatpush1.msra.mxu0 0.0
      %2013 = vmatprep.subr.mxu0 0.0
      %2014 = vmatpush1.msra.mxu0 0.0
      %2015 = vmatprep.subr.mxu0 0.0
      %2016 = vmatpush1.msra.mxu0 0.0
      %2017 = vmatprep.subr.mxu0 %v1990
      %2018 = vmatpush1.msra.mxu0 %v1989
      %2019 = vmatprep.subr.mxu0 %v1982
      %2020 = vmatpush1.msra.mxu0 %v1981
      %2021 = vmatprep.subr.mxu0 %v1974
      %2022 = vmatpush1.msra.mxu0 %v1973
      %2023 = vmatprep.subr.mxu0 %v1966
      %2024 = vmatpush1.msra.mxu0 %v1965
      %2025 = vmatprep.subr.mxu0 %v1926
      %2026 = vmatpush1.msra.mxu0 %v1925
      %2027 = vmatprep.subr.mxu0 %v1958
      %2028 = vmatpush1.msra.mxu0 %v1957
      %2029 = vmatprep.subr.mxu0 %v1950
      %2030 = vmatpush1.msra.mxu0 %v1949
      %2031 = vmatprep.subr.mxu0 %v1942
      %2032 = vmatpush1.msra.mxu0 %v1941
      %2033 = vmatprep.subr.mxu0 %v1934
      %2034 = vmatpush1.msra.mxu0 %v1933
      %2035 = vmatprep.subr.mxu0 0.0
      %2036 = vmatpush2.msra.mxu0 0.0
      %2037 = vmatprep.subr.mxu0 0.0
      %2038 = vmatpush2.msra.mxu0 0.0
      %2039 = vmatprep.subr.mxu0 0.0
      %2040 = vmatpush2.msra.mxu0 0.0
      %2041 = vmatprep.subr.mxu0 0.0
      %2042 = vmatpush2.msra.mxu0 0.0
      %2043 = vmatprep.subr.mxu0 0.0
      %2044 = vmatpush2.msra.mxu0 0.0
      %2045 = vmatprep.subr.mxu0 0.0
      %2046 = vmatpush2.msra.mxu0 0.0
      %2047 = vmatprep.subr.mxu0 0.0
      %2048 = vmatpush2.msra.mxu0 0.0
      %2049 = vmatprep.subr.mxu0 0.0
      %2050 = vmatpush2.msra.mxu0 0.0
      %2051 = vmatprep.subr.mxu0 0.0
      %2052 = vmatpush2.msra.mxu0 0.0
      %2053 = vmatprep.subr.mxu0 0.0
      %2054 = vmatpush2.msra.mxu0 0.0
      %2055 = vmatprep.subr.mxu0 0.0
      %2056 = vmatpush2.msra.mxu0 0.0
      %2057 = vmatprep.subr.mxu0 0.0
      %2058 = vmatpush2.msra.mxu0 0.0
      %2059 = vmatprep.subr.mxu0 0.0
      %2060 = vmatpush2.msra.mxu0 0.0
      %2061 = vmatprep.subr.mxu0 0.0
      %2062 = vmatpush2.msra.mxu0 0.0
      %2063 = vmatprep.subr.mxu0 0.0
      %2064 = vmatpush2.msra.mxu0 0.0
      %2065 = vmatprep.subr.mxu0 0.0
      %2066 = vmatpush2.msra.mxu0 0.0
      %2067 = vmatprep.mubr.f32.mxu0 0.0
      %2068 = vmatmul.mubr.f32.gmra.mxu0 %v2001
      %v2069 = vpop.f32.mrf.mxu0
      %v2070 = vadd.f32 %v1998, %v2069
      %v2071 = vpop.f32.mrf.mxu0
      %v2072 = vadd.f32 %v1998, %v2071
      %2073 = vdwg.mxu0
      %v2074 = vmax.f32 %v2070, 0.0
      %v2075 = vmax.f32 %v2072, 0.0
      %2076 = vrot.lane.b32.xlu0 %v2074, 17
      %v2077 = vpop.permute.xlu0 %2076
      %2078 = vrot.lane.b32.xlu0 %v2075, 17
      %v2079 = vpop.permute.xlu0 %2078
      %v2080 = vsel %vm478, %v2077, %v2079
      %v2081 = vsel %vm478, %v2079, %v2077
      %v2082 = vsel %vm493, %v2081, 0.0
      %v2083 = vsel %vm494, %v2080, 0.0
      %2084 = vrot.lane.b32.xlu0 %v2074, 16
      %v2085 = vpop.permute.xlu0 %2084
      %2086 = vrot.lane.b32.xlu0 %v2075, 16
      %v2087 = vpop.permute.xlu0 %2086
      %v2088 = vsel %vm501, %v2085, %v2087
      %v2089 = vsel %vm501, %v2087, %v2085
      %v2090 = vsel %vm513, %v2089, 0.0
      %v2091 = vsel %vm514, %v2088, 0.0
      %2092 = vrot.lane.b32.xlu0 %v2074, 15
      %v2093 = vpop.permute.xlu0 %2092
      %2094 = vrot.lane.b32.xlu0 %v2075, 15
      %v2095 = vpop.permute.xlu0 %2094
      %v2096 = vsel %vm521, %v2093, %v2095
      %v2097 = vsel %vm521, %v2095, %v2093
      %v2098 = vsel %vm535, %v2097, 0.0
      %v2099 = vsel %vm536, %v2096, 0.0
      %2100 = vrot.lane.b32.xlu0 %v2074, 1
      %v2101 = vpop.permute.xlu0 %2100
      %2102 = vrot.lane.b32.xlu0 %v2075, 1
      %v2103 = vpop.permute.xlu0 %2102
      %v2104 = vsel %vm543, %v2101, %v2103
      %v2105 = vsel %vm543, %v2103, %v2101
      %v2106 = vsel %vm555, %v2105, 0.0
      %v2107 = vsel %vm556, %v2104, 0.0
      %2108 = vrot.lane.b32.xlu0 %v2074, 127
      %v2109 = vpop.permute.xlu0 %2108
      %2110 = vrot.lane.b32.xlu0 %v2075, 127
      %v2111 = vpop.permute.xlu0 %2110
      %v2112 = vsel %vm563, %v2109, %v2111
      %v2113 = vsel %vm563, %v2111, %v2109
      %v2114 = vsel %vm575, %v2112, 0.0
      %v2115 = vsel %vm576, %v2113, 0.0
      %2116 = vrot.lane.b32.xlu0 %v2074, 113
      %v2117 = vpop.permute.xlu0 %2116
      %2118 = vrot.lane.b32.xlu0 %v2075, 113
      %v2119 = vpop.permute.xlu0 %2118
      %v2120 = vsel %vm583, %v2117, %v2119
      %v2121 = vsel %vm583, %v2119, %v2117
      %v2122 = vsel %vm597, %v2120, 0.0
      %v2123 = vsel %vm598, %v2121, 0.0
      %2124 = vrot.lane.b32.xlu0 %v2074, 112
      %v2125 = vpop.permute.xlu0 %2124
      %2126 = vrot.lane.b32.xlu0 %v2075, 112
      %v2127 = vpop.permute.xlu0 %2126
      %v2128 = vsel %vm605, %v2125, %v2127
      %v2129 = vsel %vm605, %v2127, %v2125
      %v2130 = vsel %vm617, %v2128, 0.0
      %v2131 = vsel %vm618, %v2129, 0.0
      %2132 = vrot.lane.b32.xlu0 %v2074, 111
      %v2133 = vpop.permute.xlu0 %2132
      %2134 = vrot.lane.b32.xlu0 %v2075, 111
      %v2135 = vpop.permute.xlu0 %2134
      %v2136 = vsel %vm625, %v2133, %v2135
      %v2137 = vsel %vm625, %v2135, %v2133
      %v2138 = vsel %vm638, %v2136, 0.0
      %v2139 = vsel %vm639, %v2137, 0.0
      %s2140 = scalar_lea.vmem %s3, 56
      %v2141 = vld [vmem:[%s2140] sm:$0xff]
      %s2142 = scalar_lea.vmem %s4, 56
      %v2143 = vld [vmem:[%s2142] sm:$0xff]
      %2145 = vset.pattern.permute.xlu0 0
      %2146 = vperm.xlu0 %2145, %v2143
      %v2147 = vpop.permute.xlu0 %2146
      %v2150 = vsel %vm649, %v2141, 0
      %2152 = vmatprep.subr.mxu0 0.0
      %2153 = vmatpush1.msra.mxu0 0.0
      %2154 = vmatprep.subr.mxu0 0.0
      %2155 = vmatpush1.msra.mxu0 0.0
      %2156 = vmatprep.subr.mxu0 0.0
      %2157 = vmatpush1.msra.mxu0 0.0
      %2158 = vmatprep.subr.mxu0 0.0
      %2159 = vmatpush1.msra.mxu0 0.0
      %2160 = vmatprep.subr.mxu0 0.0
      %2161 = vmatpush1.msra.mxu0 0.0
      %2162 = vmatprep.subr.mxu0 0.0
      %2163 = vmatpush1.msra.mxu0 0.0
      %2164 = vmatprep.subr.mxu0 0.0
      %2165 = vmatpush1.msra.mxu0 0.0
      %2166 = vmatprep.subr.mxu0 %v2139
      %2167 = vmatpush1.msra.mxu0 %v2138
      %2168 = vmatprep.subr.mxu0 %v2131
      %2169 = vmatpush1.msra.mxu0 %v2130
      %2170 = vmatprep.subr.mxu0 %v2123
      %2171 = vmatpush1.msra.mxu0 %v2122
      %2172 = vmatprep.subr.mxu0 %v2115
      %2173 = vmatpush1.msra.mxu0 %v2114
      %2174 = vmatprep.subr.mxu0 %v2075
      %2175 = vmatpush1.msra.mxu0 %v2074
      %2176 = vmatprep.subr.mxu0 %v2107
      %2177 = vmatpush1.msra.mxu0 %v2106
      %2178 = vmatprep.subr.mxu0 %v2099
      %2179 = vmatpush1.msra.mxu0 %v2098
      %2180 = vmatprep.subr.mxu0 %v2091
      %2181 = vmatpush1.msra.mxu0 %v2090
      %2182 = vmatprep.subr.mxu0 %v2083
      %2183 = vmatpush1.msra.mxu0 %v2082
      %2184 = vmatprep.subr.mxu0 0.0
      %2185 = vmatpush2.msra.mxu0 0.0
      %2186 = vmatprep.subr.mxu0 0.0
      %2187 = vmatpush2.msra.mxu0 0.0
      %2188 = vmatprep.subr.mxu0 0.0
      %2189 = vmatpush2.msra.mxu0 0.0
      %2190 = vmatprep.subr.mxu0 0.0
      %2191 = vmatpush2.msra.mxu0 0.0
      %2192 = vmatprep.subr.mxu0 0.0
      %2193 = vmatpush2.msra.mxu0 0.0
      %2194 = vmatprep.subr.mxu0 0.0
      %2195 = vmatpush2.msra.mxu0 0.0
      %2196 = vmatprep.subr.mxu0 0.0
      %2197 = vmatpush2.msra.mxu0 0.0
      %2198 = vmatprep.subr.mxu0 0.0
      %2199 = vmatpush2.msra.mxu0 0.0
      %2200 = vmatprep.subr.mxu0 0.0
      %2201 = vmatpush2.msra.mxu0 0.0
      %2202 = vmatprep.subr.mxu0 0.0
      %2203 = vmatpush2.msra.mxu0 0.0
      %2204 = vmatprep.subr.mxu0 0.0
      %2205 = vmatpush2.msra.mxu0 0.0
      %2206 = vmatprep.subr.mxu0 0.0
      %2207 = vmatpush2.msra.mxu0 0.0
      %2208 = vmatprep.subr.mxu0 0.0
      %2209 = vmatpush2.msra.mxu0 0.0
      %2210 = vmatprep.subr.mxu0 0.0
      %2211 = vmatpush2.msra.mxu0 0.0
      %2212 = vmatprep.subr.mxu0 0.0
      %2213 = vmatpush2.msra.mxu0 0.0
      %2214 = vmatprep.subr.mxu0 0.0
      %2215 = vmatpush2.msra.mxu0 0.0
      %2216 = vmatprep.mubr.f32.mxu0 0.0
      %2217 = vmatmul.mubr.f32.gmra.mxu0 %v2150
      %v2218 = vpop.f32.mrf.mxu0
      %v2219 = vadd.f32 %v2147, %v2218
      %v2220 = vpop.f32.mrf.mxu0
      %v2221 = vadd.f32 %v2147, %v2220
      %2222 = vdwg.mxu0
      %v2223 = vmax.f32 %v2219, 0.0
      %v2224 = vmax.f32 %v2221, 0.0
      %v2225 = vld [vmem:[%s8] sm:$0xff]
      %v2226 = vld [vmem:[%s9] sm:$0xff]
      %2228 = vset.pattern.permute.xlu0 0
      %2229 = vperm.xlu0 %2228, %v2226
      %v2230 = vpop.permute.xlu0 %2229
      %v2233 = vsel %vm1466, %v2225, 0
      %2235 = vmatprep.subr.mxu0 0.0
      %2236 = vmatpush1.msra.mxu0 0.0
      %2237 = vmatprep.subr.mxu0 0.0
      %2238 = vmatpush1.msra.mxu0 0.0
      %2239 = vmatprep.subr.mxu0 0.0
      %2240 = vmatpush1.msra.mxu0 0.0
      %2241 = vmatprep.subr.mxu0 0.0
      %2242 = vmatpush1.msra.mxu0 0.0
      %2243 = vmatprep.subr.mxu0 0.0
      %2244 = vmatpush1.msra.mxu0 0.0
      %2245 = vmatprep.subr.mxu0 0.0
      %2246 = vmatpush1.msra.mxu0 0.0
      %2247 = vmatprep.subr.mxu0 0.0
      %2248 = vmatpush1.msra.mxu0 0.0
      %2249 = vmatprep.subr.mxu0 0.0
      %2250 = vmatpush1.msra.mxu0 0.0
      %2251 = vmatprep.subr.mxu0 0.0
      %2252 = vmatpush1.msra.mxu0 0.0
      %2253 = vmatprep.subr.mxu0 0.0
      %2254 = vmatpush1.msra.mxu0 0.0
      %2255 = vmatprep.subr.mxu0 0.0
      %2256 = vmatpush1.msra.mxu0 0.0
      %2257 = vmatprep.subr.mxu0 0.0
      %2258 = vmatpush1.msra.mxu0 0.0
      %2259 = vmatprep.subr.mxu0 0.0
      %2260 = vmatpush1.msra.mxu0 0.0
      %2261 = vmatprep.subr.mxu0 0.0
      %2262 = vmatpush1.msra.mxu0 0.0
      %2263 = vmatprep.subr.mxu0 0.0
      %2264 = vmatpush1.msra.mxu0 0.0
      %2265 = vmatprep.subr.mxu0 %v2224
      %2266 = vmatpush1.msra.mxu0 %v2223
      %2267 = vmatprep.subr.mxu0 0.0
      %2268 = vmatpush2.msra.mxu0 0.0
      %2269 = vmatprep.subr.mxu0 0.0
      %2270 = vmatpush2.msra.mxu0 0.0
      %2271 = vmatprep.subr.mxu0 0.0
      %2272 = vmatpush2.msra.mxu0 0.0
      %2273 = vmatprep.subr.mxu0 0.0
      %2274 = vmatpush2.msra.mxu0 0.0
      %2275 = vmatprep.subr.mxu0 0.0
      %2276 = vmatpush2.msra.mxu0 0.0
      %2277 = vmatprep.subr.mxu0 0.0
      %2278 = vmatpush2.msra.mxu0 0.0
      %2279 = vmatprep.subr.mxu0 0.0
      %2280 = vmatpush2.msra.mxu0 0.0
      %2281 = vmatprep.subr.mxu0 0.0
      %2282 = vmatpush2.msra.mxu0 0.0
      %2283 = vmatprep.subr.mxu0 0.0
      %2284 = vmatpush2.msra.mxu0 0.0
      %2285 = vmatprep.subr.mxu0 0.0
      %2286 = vmatpush2.msra.mxu0 0.0
      %2287 = vmatprep.subr.mxu0 0.0
      %2288 = vmatpush2.msra.mxu0 0.0
      %2289 = vmatprep.subr.mxu0 0.0
      %2290 = vmatpush2.msra.mxu0 0.0
      %2291 = vmatprep.subr.mxu0 0.0
      %2292 = vmatpush2.msra.mxu0 0.0
      %2293 = vmatprep.subr.mxu0 0.0
      %2294 = vmatpush2.msra.mxu0 0.0
      %2295 = vmatprep.subr.mxu0 0.0
      %2296 = vmatpush2.msra.mxu0 0.0
      %2297 = vmatprep.subr.mxu0 0.0
      %2298 = vmatpush2.msra.mxu0 0.0
      %2299 = vmatprep.mubr.f32.mxu0 0.0
      %2300 = vmatmul.mubr.f32.gmra.mxu0 %v2233
      %v2301 = vpop.f32.mrf.mxu0
      %v2302 = vadd.f32 %v2230, %v2301
      %v2303 = vpop.f32.mrf.mxu0
      %v2304 = vadd.f32 %v2230, %v2303
      %2305 = vdwg.mxu0
      %v2306 = vadd.f32 %v2302, %v1925
      %v2307 = vadd.f32 %v2304, %v1926
      %v2308 = vmax.f32 %v2306, 0.0
      %v2309 = vmax.f32 %v2307, 0.0
      %v2310 = vadd.f32 %v2308, %v2309
      %2311 = vadd.xlane.f32.xlu0 %v2310
      %v2312 = vpop.xlane.xlu0 %2311
      %v2313 = vrcp.pop 256.0
      %v2314 = vmul.f32 %v2312, %v2313
      %v2315 = vld [vmem:[%s10] sm:$0x3]
      %v2316 = vld [vmem:[%s11] sm:$0x3]
      %v2318 = vsel %vm1466, %v2315, 0
      %2320 = vmatprep.subr.mxu0 0.0
      %2321 = vmatpush1.msra.mxu0 0.0
      %2322 = vmatprep.subr.mxu0 0.0
      %2323 = vmatpush1.msra.mxu0 0.0
      %2324 = vmatprep.subr.mxu0 0.0
      %2325 = vmatpush1.msra.mxu0 0.0
      %2326 = vmatprep.subr.mxu0 0.0
      %2327 = vmatpush1.msra.mxu0 0.0
      %2328 = vmatprep.subr.mxu0 0.0
      %2329 = vmatpush1.msra.mxu0 0.0
      %2330 = vmatprep.subr.mxu0 0.0
      %2331 = vmatpush1.msra.mxu0 0.0
      %2332 = vmatprep.subr.mxu0 0.0
      %2333 = vmatpush1.msra.mxu0 0.0
      %2334 = vmatprep.subr.mxu0 0.0
      %2335 = vmatpush1.msra.mxu0 0.0
      %2336 = vmatprep.subr.mxu0 0.0
      %2337 = vmatpush1.msra.mxu0 0.0
      %2338 = vmatprep.subr.mxu0 0.0
      %2339 = vmatpush1.msra.mxu0 0.0
      %2340 = vmatprep.subr.mxu0 0.0
      %2341 = vmatpush1.msra.mxu0 0.0
      %2342 = vmatprep.subr.mxu0 0.0
      %2343 = vmatpush1.msra.mxu0 0.0
      %2344 = vmatprep.subr.mxu0 0.0
      %2345 = vmatpush1.msra.mxu0 0.0
      %2346 = vmatprep.subr.mxu0 0.0
      %2347 = vmatpush1.msra.mxu0 0.0
      %2348 = vmatprep.subr.mxu0 0.0
      %2349 = vmatpush1.msra.mxu0 0.0
      %2350 = vmatprep.subr.mxu0 0.0
      %2351 = vmatpush1.msra.mxu0 %v2314
      %2352 = vmatprep.subr.mxu0 0.0
      %2353 = vmatpush2.msra.mxu0 0.0
      %2354 = vmatprep.subr.mxu0 0.0
      %2355 = vmatpush2.msra.mxu0 0.0
      %2356 = vmatprep.subr.mxu0 0.0
      %2357 = vmatpush2.msra.mxu0 0.0
      %2358 = vmatprep.subr.mxu0 0.0
      %2359 = vmatpush2.msra.mxu0 0.0
      %2360 = vmatprep.subr.mxu0 0.0
      %2361 = vmatpush2.msra.mxu0 0.0
      %2362 = vmatprep.subr.mxu0 0.0
      %2363 = vmatpush2.msra.mxu0 0.0
      %2364 = vmatprep.subr.mxu0 0.0
      %2365 = vmatpush2.msra.mxu0 0.0
      %2366 = vmatprep.subr.mxu0 0.0
      %2367 = vmatpush2.msra.mxu0 0.0
      %2368 = vmatprep.subr.mxu0 0.0
      %2369 = vmatpush2.msra.mxu0 0.0
      %2370 = vmatprep.subr.mxu0 0.0
      %2371 = vmatpush2.msra.mxu0 0.0
      %2372 = vmatprep.subr.mxu0 0.0
      %2373 = vmatpush2.msra.mxu0 0.0
      %2374 = vmatprep.subr.mxu0 0.0
      %2375 = vmatpush2.msra.mxu0 0.0
      %2376 = vmatprep.subr.mxu0 0.0
      %2377 = vmatpush2.msra.mxu0 0.0
      %2378 = vmatprep.subr.mxu0 0.0
      %2379 = vmatpush2.msra.mxu0 0.0
      %2380 = vmatprep.subr.mxu0 0.0
      %2381 = vmatpush2.msra.mxu0 0.0
      %2382 = vmatprep.subr.mxu0 0.0
      %2383 = vmatpush2.msra.mxu0 0.0
      %2384 = vmatprep.mubr.f32.mxu0 0.0
      %2385 = vmatmul.mubr.f32.gmra.mxu0 %v2318
      %v2386 = vpop.f32.mrf.mxu0
      %v2387 = vadd.f32 %v2316, %v2386
      %v2388 = vpop.f32.mrf.mxu0
      %2389 = vdwg.mxu0
      %v2390 = vmax.f32 %v2387, 0.0
      %v2391 = vld [vmem:[%s12] sm:$0xff]
      %v2392 = vld [vmem:[%s13] sm:$0xff]
      %vm2393 = vcmask 15360
      %v2395 = vsel %vm2393, %v2391, 0
      %vm2397 = vcmask 1041408
      %v2399 = vsel %vm2397, %v2390, 0
      %2401 = vmatprep.subr.mxu0 0.0
      %2402 = vmatpush1.msra.mxu0 0.0
      %2403 = vmatprep.subr.mxu0 0.0
      %2404 = vmatpush1.msra.mxu0 0.0
      %2405 = vmatprep.subr.mxu0 0.0
      %2406 = vmatpush1.msra.mxu0 0.0
      %2407 = vmatprep.subr.mxu0 0.0
      %2408 = vmatpush1.msra.mxu0 0.0
      %2409 = vmatprep.subr.mxu0 0.0
      %2410 = vmatpush1.msra.mxu0 0.0
      %2411 = vmatprep.subr.mxu0 0.0
      %2412 = vmatpush1.msra.mxu0 0.0
      %2413 = vmatprep.subr.mxu0 0.0
      %2414 = vmatpush1.msra.mxu0 0.0
      %2415 = vmatprep.subr.mxu0 0.0
      %2416 = vmatpush1.msra.mxu0 0.0
      %2417 = vmatprep.subr.mxu0 0.0
      %2418 = vmatpush1.msra.mxu0 0.0
      %2419 = vmatprep.subr.mxu0 0.0
      %2420 = vmatpush1.msra.mxu0 0.0
      %2421 = vmatprep.subr.mxu0 0.0
      %2422 = vmatpush1.msra.mxu0 0.0
      %2423 = vmatprep.subr.mxu0 0.0
      %2424 = vmatpush1.msra.mxu0 0.0
      %2425 = vmatprep.subr.mxu0 0.0
      %2426 = vmatpush1.msra.mxu0 0.0
      %2427 = vmatprep.subr.mxu0 0.0
      %2428 = vmatpush1.msra.mxu0 0.0
      %2429 = vmatprep.subr.mxu0 0.0
      %2430 = vmatpush1.msra.mxu0 0.0
      %2431 = vmatprep.subr.mxu0 0.0
      %2432 = vmatpush1.msra.mxu0 %v2399
      %2433 = vmatprep.subr.mxu0 0.0
      %2434 = vmatpush2.msra.mxu0 0.0
      %2435 = vmatprep.subr.mxu0 0.0
      %2436 = vmatpush2.msra.mxu0 0.0
      %2437 = vmatprep.subr.mxu0 0.0
      %2438 = vmatpush2.msra.mxu0 0.0
      %2439 = vmatprep.subr.mxu0 0.0
      %2440 = vmatpush2.msra.mxu0 0.0
      %2441 = vmatprep.subr.mxu0 0.0
      %2442 = vmatpush2.msra.mxu0 0.0
      %2443 = vmatprep.subr.mxu0 0.0
      %2444 = vmatpush2.msra.mxu0 0.0
      %2445 = vmatprep.subr.mxu0 0.0
      %2446 = vmatpush2.msra.mxu0 0.0
      %2447 = vmatprep.subr.mxu0 0.0
      %2448 = vmatpush2.msra.mxu0 0.0
      %2449 = vmatprep.subr.mxu0 0.0
      %2450 = vmatpush2.msra.mxu0 0.0
      %2451 = vmatprep.subr.mxu0 0.0
      %2452 = vmatpush2.msra.mxu0 0.0
      %2453 = vmatprep.subr.mxu0 0.0
      %2454 = vmatpush2.msra.mxu0 0.0
      %2455 = vmatprep.subr.mxu0 0.0
      %2456 = vmatpush2.msra.mxu0 0.0
      %2457 = vmatprep.subr.mxu0 0.0
      %2458 = vmatpush2.msra.mxu0 0.0
      %2459 = vmatprep.subr.mxu0 0.0
      %2460 = vmatpush2.msra.mxu0 0.0
      %2461 = vmatprep.subr.mxu0 0.0
      %2462 = vmatpush2.msra.mxu0 0.0
      %2463 = vmatprep.subr.mxu0 0.0
      %2464 = vmatpush2.msra.mxu0 0.0
      %2465 = vmatprep.mubr.f32.mxu0 0.0
      %2466 = vmatmul.mubr.f32.gmra.mxu0 %v2395
      %v2467 = vpop.f32.mrf.mxu0
      %v2468 = vadd.f32 %v2392, %v2467
      %v2469 = vpop.f32.mrf.mxu0
      %2470 = vdwg.mxu0
      %v2471 = vxor.u32 %v2468, 2147483648
      %v2472 = vmul.f32 %v2471, 1.442695
      %v2473 = vpow.pop %v2472
      %v2474 = vadd.f32 %v2473, 1.0
      %v2475 = vrcp.pop %v2474
      %v2476 = vmul.f32 1.0, %v2475
      %2478 = vset.pattern.permute.xlu0 0
      %2479 = vperm.xlu0 %2478, %v2476
      %v2480 = vpop.permute.xlu0 %2479
      %v2482 = vmul.f32 %v2308, %v2480
      %v2483 = vmul.f32 %v2309, %v2480
      %2484 = vst [vmem:[%s467] sm:$0xff] %v2482
      %2485 = vst [vmem:[%s467 + $0x8] sm:$0xff] %v2483
      %p2486 = scmp.lt.s32.totalorder %s25, 1
      %s2487 = scalar_select %p2486, %s25, 1
      %s2488 = smul.addr %s2487, 2
      %s2489 = smul.addr %s2488, 8
      %s2490 = scalar_lea.vmem %s14, %s2489
      // Predicated region
      $region77: #{block_forward.1} parent=75 // pred_check
        %p2491 = pneg %p342
      $region78: #{block_forward.1} parent=75 // pred_check_branch
        %2493 = sbr.rel (%p2491) target = $region80
      $region79: #{block_forward.1} parent=75 // pred_region
        _
      $region80: #{block_forward.1} parent=75 // pred_fallthru
        _
    $region76: #{block_forward.1} parent=5 // pred_fallthru
      _
    %p2494 = scmp.le.s32.totalorder 2, %s20
    // Predicated region
    $region81: #{block_forward.1} parent=5 // pred_check
      %p2495 = pneg %p2494
    $region82: #{block_forward.1} parent=5 // pred_check_branch
      %2497 = sbr.rel (%p2495) target = $region84
    $region83: #{block_forward.1} parent=5 // pred_region
      %s2498 = ssub.s32 %s20, 2
      // Predicated region
      $region85: #{block_forward.1} parent=83 // pred_check
        %p2499 = pneg %p348
      $region86: #{block_forward.1} parent=83 // pred_check_branch
        %2501 = sbr.rel (%p2499) target = $region88
      $region87: #{block_forward.1} parent=83 // pred_region
        %p2502 = scmp.lt.s32.totalorder %s26, 1
        %s2503 = scalar_select %p2502, %s26, 1
        %s2504 = smul.addr %s2503, 2
        %s2505 = smul.addr %s2504, 8
        %s2506 = scalar_lea.vmem %s14, %s2505
      $region88: #{block_forward.1} parent=83 // pred_fallthru
        _
    $region84: #{block_forward.1} parent=5 // pred_fallthru
      _
  $region6: #{block_forward.1} parent=0 // loop_footer
    %s24 = sadd.s32 1, %s20
  $region7: #{block_forward.1} parent=0 // loop_footer_branch
    %19 = sbr.rel target = $region3
  $region8: #{block_forward.1} parent=0 // loop_exit
    _

</llo_original>
